<compile_context>
chip_gen: v6e
topology: v6e:2x2x1
jax: 0.10.0
libtpu: 0.0.40
codegen_flags: <defaults>
</compile_context>

<pallas_src>
import functools

import jax
import jax.numpy as jnp
from jax.experimental import pallas as pl
from jax.experimental.pallas import tpu as pltpu

_BN_EPS = 1e-5
_LANES = 128
_D2_PAD = _LANES  # discriminator logits (2 classes) padded to one full lane block


def _pad_to_lanes(d):
    return ((int(d) + _LANES - 1) // _LANES) * _LANES


# ----------------------------------------------------------------------------
# Fused Pallas kernel: the whole ModelP forward for GROUP graphs per grid step.
# ----------------------------------------------------------------------------
def _modelp_fused_kernel(
    x_ref, hv_ref, he_ref,
    enc1_wt, enc1_b, enc2fc_wt, enc2fc_b,
    gate1_wt, gate1_b, gate2_wt, gate2_b, fc2_wt, fc2_b,
    pool_blk, pool_expand,
    ddh_wt, ddh_b, dd2_wt, dd2_b,
    slab_ref,
):
    f32, bf16 = jnp.float32, jnp.bfloat16
    x = x_ref[0]             # [GN, F_pad]   bf16
    hv = hv_ref[0]           # [GN, G*EH]    bf16  (block-diag per-graph H/dv)
    he = he_ref[0]           # [G*EH, GN]    bf16  (block-diag per-graph H^T/de)
    epad = fc2_wt.shape[1]   # 128-padded embedding width (static)

    def mm(a, w_ref, b_ref):
        # bf16 operands on the MXU, f32 accumulate, f32 bias add on the VPU.
        return jnp.dot(a.astype(bf16), w_ref[...], preferred_element_type=f32) + b_ref[...]

    def prop(h):
        # factored HGNN+ "v2v mean":  Hv @ (He @ h), block-diagonal over the graph group.
        e = jnp.dot(he, h.astype(bf16), preferred_element_type=f32)
        return jnp.dot(hv, e.astype(bf16), preferred_element_type=f32)

    # ---- encoder layer 1 (HGNNPConv): Linear(+folded eval-BN) -> v2v mean -> ReLU ----
    x_e1 = jnp.maximum(prop(mm(x, enc1_wt, enc1_b)), 0.0)              # [GN, HID_pad]

    # ---- encoder layer 2 (last conv, no ReLU) + self.fc share one lane-concatenated matmul ----
    p = mm(x_e1, enc2fc_wt, enc2fc_b)                                   # [GN, 2*epad]
    x_e = prop(p[:, :epad])                                             # conv output (no act)
    x_e1p = p[:, epad:]                                                 # fc output (no propagation)

    # ---- GRU-style gate; every projection head is padded to a 128-lane boundary ----
    p1 = mm(x_e1p, gate1_wt, gate1_b)                                   # [GN, 3*epad] = [u1|r1|h1]
    p2 = mm(x_e, gate2_wt, gate2_b)                                     # [GN, 2*epad] = [u2|r2]
    z = jax.nn.sigmoid(p1[:, :epad] + p2[:, :epad])
    r = jax.nn.sigmoid(p1[:, epad:2 * epad] + p2[:, epad:])
    out = jnp.tanh(p1[:, 2 * epad:] + mm(r * x_e, fc2_wt, fc2_b))
    outs = z * out + (1.0 - z) * x_e                                    # [GN, epad]

    # ---- attention pooling (softmax precomputed host-side; block-diag over the group) ----
    proto = jnp.dot(pool_blk[...], outs.astype(bf16), preferred_element_type=f32)   # [G, epad]
    # replicate each graph's pooled row to its GN node rows with a 0/1 f32 matmul (exact)
    proto_rows = jnp.dot(pool_expand[...], proto, preferred_element_type=f32)       # [GN, epad]

    # ---- GRL(identity) -> discriminator & decoder: layer-1 of both branches shares one matmul,
    #      one v2v propagation and one ReLU; layer-2 is a single block-diagonal [dis2|dec2] matmul
    #      followed by one shared v2v (last layers, no activation). ----
    hdd = jnp.maximum(prop(mm(outs, ddh_wt, ddh_b)), 0.0)               # [GN, DHID_pad+HID_pad]
    fin = prop(mm(hdd, dd2_wt, dd2_b))                                  # [GN, D2_pad+F_pad]

    # ---- single lane-dense writeback: [outs | xdis_pad | x_de_pad | proto] ----
    slab_ref[0] = jnp.concatenate([outs, fin, proto_rows], axis=-1).astype(slab_ref.dtype)


# ----------------------------------------------------------------------------
# One-time host-side preprocessing (hoisted out of the forward)
# ----------------------------------------------------------------------------
def _init_linear(key, din, dout):
    """Matches torch.nn.Linear default init (uniform +/- 1/sqrt(din))."""
    kw, kb = jax.random.split(key)
    bound = 1.0 / (din ** 0.5)
    w = jax.random.uniform(kw, (dout, din), minval=-bound, maxval=bound, dtype=jnp.float32)
    b = jax.random.uniform(kb, (dout,), minval=-bound, maxval=bound, dtype=jnp.float32)
    return w, b


def init_modelp_params(key, input_size, num_features, num_embedding, width):
    hid = width * num_features
    dis_hid = width * num_embedding
    keys = jax.random.split(key, 14)
    p = {}
    p["enc1"] = _init_linear(keys[0], num_features, hid)
    p["enc2"] = _init_linear(keys[1], hid, num_embedding)
    p["dec1"] = _init_linear(keys[2], num_embedding, hid)
    p["dec2"] = _init_linear(keys[3], hid, num_features)
    p["dis1"] = _init_linear(keys[4], num_embedding, dis_hid)
    p["dis2"] = _init_linear(keys[5], dis_hid, 2)
    p["fc"] = _init_linear(keys[6], hid, num_embedding)
    p["fc1_update"] = _init_linear(keys[7], num_embedding, num_embedding)
    p["fc2_update"] = _init_linear(keys[8], num_embedding, num_embedding)
    p["fc1_reset"] = _init_linear(keys[9], num_embedding, num_embedding)
    p["fc2_reset"] = _init_linear(keys[10], num_embedding, num_embedding)
    p["fc1"] = _init_linear(keys[11], num_embedding, num_embedding)
    p["fc2"] = _init_linear(keys[12], num_embedding, num_embedding)
    p["attn"] = jax.random.normal(keys[13], (input_size,), dtype=jnp.float32)
    return p


def _fold_eval_bn(w, b):
    """Eval-mode BatchNorm with fresh stats (mean=0, var=1, gamma=1, beta=0) folded in."""
    scale = 1.0 / jnp.sqrt(1.0 + _BN_EPS)
    return w * scale, b * scale


def prepare_params(params, group):
    """One-time host prep: fold eval-BN, transpose to [Din,Dout], zero-pad every feature dim to a
    128-lane multiple, concatenate the gate / enc2+fc / dis1+dec1 heads, build the block-diagonal
    [dis2|dec2] second layer and the grouped attention-pooling operators, and cast matmul weights
    to bf16 (biases stay f32)."""
    bf16, f32 = jnp.bfloat16, jnp.float32

    def wt(name, fold_bn=False):
        w, b = params[name]
        if fold_bn:
            w, b = _fold_eval_bn(w, b)
        return jnp.asarray(w, f32).T, jnp.asarray(b, f32)        # [Din, Dout], [Dout]

    def padw(w, rows, cols):
        return jnp.zeros((rows, cols), f32).at[: w.shape[0], : w.shape[1]].set(w)

    def padb(b, cols):
        return jnp.zeros((1, cols), f32).at[0, : b.shape[0]].set(b)

    f = params["enc1"][0].shape[1]       # num_features
    hid = params["enc1"][0].shape[0]     # width*num_features
    e = params["enc2"][0].shape[0]       # num_embedding
    dhid = params["dis1"][0].shape[0]    # width*num_embedding
    n = params["attn"].shape[0]          # input_size (nodes per graph)
    fp, hp, ep, dp = map(_pad_to_lanes, (f, hid, e, dhid))

    prep = {}
    w, b = wt("enc1", True)
    prep["enc1_wt"], prep["enc1_b"] = padw(w, fp, hp).astype(bf16), padb(b, hp)

    w2, b2 = wt("enc2", True)
    wf, bfc = wt("fc")
    prep["enc2fc_wt"] = jnp.concatenate([padw(w2, hp, ep), padw(wf, hp, ep)], 1).astype(bf16)
    prep["enc2fc_b"] = jnp.concatenate([padb(b2, ep), padb(bfc, ep)], 1)

    g1 = [wt("fc1_update"), wt("fc1_reset"), wt("fc1")]
    prep["gate1_wt"] = jnp.concatenate([padw(w_, ep, ep) for w_, _ in g1], 1).astype(bf16)
    prep["gate1_b"] = jnp.concatenate([padb(b_, ep) for _, b_ in g1], 1)
    g2 = [wt("fc2_update"), wt("fc2_reset")]
    prep["gate2_wt"] = jnp.concatenate([padw(w_, ep, ep) for w_, _ in g2], 1).astype(bf16)
    prep["gate2_b"] = jnp.concatenate([padb(b_, ep) for _, b_ in g2], 1)
    w, b = wt("fc2")
    prep["fc2_wt"], prep["fc2_b"] = padw(w, ep, ep).astype(bf16), padb(b, ep)

    wd1, bd1 = wt("dis1", True)
    we1, be1 = wt("dec1", True)
    prep["ddh_wt"] = jnp.concatenate([padw(wd1, ep, dp), padw(we1, ep, hp)], 1).astype(bf16)
    prep["ddh_b"] = jnp.concatenate([padb(bd1, dp), padb(be1, hp)], 1)

    wd2, bd2 = wt("dis2", True)
    we2, be2 = wt("dec2", True)
    dd2 = jnp.zeros((dp + hp, _D2_PAD + fp), f32)
    dd2 = dd2.at[: wd2.shape[0], : wd2.shape[1]].set(wd2)                               # dis2 block
    dd2 = dd2.at[dp: dp + we2.shape[0], _D2_PAD: _D2_PAD + we2.shape[1]].set(we2)       # dec2 block
    prep["dd2_wt"] = dd2.astype(bf16)
    prep["dd2_b"] = jnp.concatenate([padb(bd2, _D2_PAD), padb(be2, fp)], 1)

    # attention pooling: softmax over nodes of the static score vector, grouped block-diagonally.
    pool = jax.nn.softmax(jnp.asarray(params["attn"], f32))                             # [N]
    eye_g = jnp.eye(group, dtype=f32)
    prep["pool_blk"] = jnp.einsum("gh,n->ghn", eye_g, pool).reshape(group, group * n).astype(bf16)
    prep["pool_expand"] = jnp.kron(eye_g, jnp.ones((n, 1), f32))                        # [G*N, G]
    return prep


def _factored_v2v(h_inc):
    """Factored HGNN+ v2v-mean operator: Hv = H/dv [..., N, EH], He = H^T/de [..., EH, N]."""
    h_inc = h_inc.astype(jnp.float32)
    dv = jnp.clip(jnp.sum(h_inc, axis=-1, keepdims=True), 1.0, None)
    de = jnp.clip(jnp.sum(h_inc, axis=-2, keepdims=True), 1.0, None)
    return h_inc / dv, jnp.swapaxes(h_inc / de, -1, -2)


# ----------------------------------------------------------------------------
# Fused forward over a batch of graphs (one pallas_call)
# ----------------------------------------------------------------------------
@functools.partial(jax.jit, static_argnames=("group", "num_embedding"))
def modelp_forward_fused(prep, x, h_inc, *, group, num_embedding):
    """x: [B, N, F] node features, h_inc: [B, N, EH] dense 0/1 incidence matrices.
    Returns (outs [B,N,E], x_de [B,N,F], proto [B,E], xdis [B,N,2])."""
    f32, bf16 = jnp.float32, jnp.bfloat16
    b, n, f = x.shape
    eh = h_inc.shape[-1]
    if b % group:
        raise ValueError("batch size must be a multiple of `group`")
    e = num_embedding
    ep, fp = _pad_to_lanes(e), _pad_to_lanes(f)
    ngrp, gn, geh = b // group, group * n, group * eh
    slab_w = ep + _D2_PAD + fp + ep

    # ---- per-input prep (depends on X / hg, so it cannot be hoisted) ----
    x_grp = jnp.pad(x.astype(f32), ((0, 0), (0, 0), (0, fp - f))).astype(bf16)
    x_grp = x_grp.reshape(ngrp, gn, fp)
    hv, he = _factored_v2v(h_inc)                                        # [B,N,EH], [B,EH,N]
    eye_g = jnp.eye(group, dtype=f32)
    hv_blk = jnp.einsum("pgne,gh->pgnhe", hv.reshape(ngrp, group, n, eh), eye_g)
    hv_blk = hv_blk.reshape(ngrp, gn, geh).astype(bf16)
    he_blk = jnp.einsum("pgen,gh->pgehn", he.reshape(ngrp, group, eh, n), eye_g)
    he_blk = he_blk.reshape(ngrp, geh, gn).astype(bf16)

    batched = (x_grp, hv_blk, he_blk)
    weights = (prep["enc1_wt"], prep["enc1_b"], prep["enc2fc_wt"], prep["enc2fc_b"],
               prep["gate1_wt"], prep["gate1_b"], prep["gate2_wt"], prep["gate2_b"],
               prep["fc2_wt"], prep["fc2_b"], prep["pool_blk"], prep["pool_expand"],
               prep["ddh_wt"], prep["ddh_b"], prep["dd2_wt"], prep["dd2_b"])

    in_specs = ([pl.BlockSpec((1,) + a.shape[1:], lambda g: (g, 0, 0)) for a in batched]
                + [pl.BlockSpec(w.shape, lambda g: (0, 0)) for w in weights])
    out_spec = pl.BlockSpec((1, gn, slab_w), lambda g: (g, 0, 0))

    # advisory cost hint for XLA's scheduler
    hp_ = prep["enc1_wt"].shape[1]
    ddh_w = prep["ddh_wt"].shape[1]
    dd2_w = prep["dd2_wt"].shape[1]
    mm_flops = 2 * gn * (fp * hp_ + hp_ * 2 * ep + ep * 3 * ep + ep * 2 * ep + ep * ep
                         + ep * ddh_w + ddh_w * dd2_w + 2 * group * ep)
    prop_flops = 4 * gn * geh * (hp_ + ep + ddh_w + dd2_w)
    bytes_accessed = (sum(int(a.size) * a.dtype.itemsize for a in batched + weights)
                      + ngrp * gn * slab_w * 4)
    cost = pl.CostEstimate(flops=int(ngrp * (mm_flops + prop_flops)),
                           transcendentals=int(ngrp * gn * 3 * ep),
                           bytes_accessed=int(bytes_accessed))

    # NOTE: at much larger N, set vmem_limit_bytes in CompilerParams and tile the node axis;
    # weights use a constant index_map so they are not re-DMA'd across grid steps.
    slab = pl.pallas_call(
        _modelp_fused_kernel,
        out_shape=jax.ShapeDtypeStruct((ngrp, gn, slab_w), f32),
        grid=(ngrp,),
        in_specs=in_specs,
        out_specs=out_spec,
        compiler_params=pltpu.CompilerParams(dimension_semantics=("parallel",)),
        cost_estimate=cost,
    )(*batched, *weights)

    slab = slab.reshape(b, n, slab_w)
    outs = slab[:, :, :e]
    xdis = slab[:, :, ep:ep + 2]
    x_de = slab[:, :, ep + _D2_PAD:ep + _D2_PAD + f]
    proto = slab[:, 0, ep + _D2_PAD + fp:ep + _D2_PAD + fp + e]
    return outs, x_de, proto, xdis


# ----------------------------------------------------------------------------
# Pure-JAX per-graph reference (mm_dtype mirrors the kernel's matmul operand dtype)
# ----------------------------------------------------------------------------
def modelp_forward_ref(params, x, h_inc, mm_dtype=jnp.float32):
    f32 = jnp.float32
    hv, he = _factored_v2v(h_inc)

    def dot(a, b):
        return jnp.dot(a.astype(mm_dtype), b.astype(mm_dtype),
                       preferred_element_type=f32, precision=jax.lax.Precision.HIGHEST)

    def dense(h, wb):
        w, b = wb
        return dot(h, jnp.asarray(w, f32).T) + jnp.asarray(b, f32)

    def conv(h, wb, is_last):
        w, b = _fold_eval_bn(jnp.asarray(wb[0], f32), jnp.asarray(wb[1], f32))
        h = dot(h, w.T) + b
        h = dot(hv, dot(he, h))
        return h if is_last else jnp.maximum(h, 0.0)

    x = x.astype(f32)
    x_e1 = conv(x, params["enc1"], False)
    x_e = conv(x_e1, params["enc2"], True)
    x_e1p = dense(x_e1, params["fc"])
    z = jax.nn.sigmoid(dense(x_e1p, params["fc1_update"]) + dense(x_e, params["fc2_update"]))
    r = jax.nn.sigmoid(dense(x_e1p, params["fc1_reset"]) + dense(x_e, params["fc2_reset"]))
    out = jnp.tanh(dense(x_e1p, params["fc1"]) + dense(r * x_e, params["fc2"]))
    outs = z * out + (1.0 - z) * x_e
    pool = jax.nn.softmax(jnp.asarray(params["attn"], f32)).reshape(1, -1)
    proto = dot(pool, outs)[0]
    d1 = conv(outs, params["dis1"], False)
    xdis = conv(d1, params["dis2"], True)
    de1 = conv(outs, params["dec1"], False)
    x_de = conv(de1, params["dec2"], True)
    return outs, x_de, proto, xdis


# ----------------------------------------------------------------------------
if __name__ == "__main__":
    INPUT_SIZE = 16       # N nodes per graph
    NUM_FEATURES = 8
    NUM_EMBEDDING = 16
    WIDTH = 4
    NUM_HYPEREDGES = 8
    BATCH = 16            # graphs per fused call
    GROUP = max(1, _LANES // INPUT_SIZE)   # graphs stacked per grid step -> M = GROUP*N = 128
    assert BATCH % GROUP == 0

    root = jax.random.PRNGKey(0)
    k_param, k_x, k_h = jax.random.split(root, 3)

    params = init_modelp_params(k_param, INPUT_SIZE, NUM_FEATURES, NUM_EMBEDDING, WIDTH)
    x = jax.random.normal(k_x, (BATCH, INPUT_SIZE, NUM_FEATURES), dtype=jnp.float32)

    # deterministic 0/1 incidence matrices [B, N, EH]; every node joins >= 1 hyperedge
    h_rand = jax.random.uniform(k_h, (BATCH, INPUT_SIZE, NUM_HYPEREDGES)) < 0.35
    eye_like = jax.nn.one_hot(jnp.arange(INPUT_SIZE) % NUM_HYPEREDGES, NUM_HYPEREDGES) > 0
    h_inc = jnp.logical_or(h_rand, eye_like[None]).astype(jnp.float32)

    # one-time static preprocessing (hoisted out of the forward)
    prep = prepare_params(params, GROUP)

    outs, x_de, proto, xdis = modelp_forward_fused(
        prep, x, h_inc, group=GROUP, num_embedding=NUM_EMBEDDING)
    jax.block_until_ready((outs, x_de, proto, xdis))

    assert outs.shape == (BATCH, INPUT_SIZE, NUM_EMBEDDING)
    assert x_de.shape == (BATCH, INPUT_SIZE, NUM_FEATURES)
    assert proto.shape == (BATCH, NUM_EMBEDDING)
    assert xdis.shape == (BATCH, INPUT_SIZE, 2)
    assert bool(jnp.all(jnp.isfinite(outs)))

    # validation: bf16-matched reference (tight) + pure-f32 reference (sanity, bf16 MXU tolerance)
    ref_bf16 = jax.jit(jax.vmap(lambda xb, hb: modelp_forward_ref(params, xb, hb, jnp.bfloat16)))
    ref_f32 = jax.jit(jax.vmap(lambda xb, hb: modelp_forward_ref(params, xb, hb, jnp.float32)))
    for tol, refs in ((5e-3, ref_bf16(x, h_inc)), (5e-2, ref_f32(x, h_inc))):
        for got, want in zip((outs, x_de, proto, xdis), refs):
            err = float(jnp.max(jnp.abs(got - want)))
            assert err < tol, f"max abs err {err} (tol {tol})"

    print("KERNEL_OK")
</pallas_src>

<mosaic_0001>
module attributes {stable_mosaic.version = 11 : i64} {
  func.func @_modelp_fused_kernel(%arg0: i32, %arg1: memref<1x128x128xbf16, #tpu.memory_space<vmem>>, %arg2: memref<1x128x64xbf16, #tpu.memory_space<vmem>>, %arg3: memref<1x64x128xbf16, #tpu.memory_space<vmem>>, %arg4: memref<128x128xbf16, #tpu.memory_space<vmem>>, %arg5: memref<1x128xf32, #tpu.memory_space<vmem>>, %arg6: memref<128x256xbf16, #tpu.memory_space<vmem>>, %arg7: memref<1x256xf32, #tpu.memory_space<vmem>>, %arg8: memref<128x384xbf16, #tpu.memory_space<vmem>>, %arg9: memref<1x384xf32, #tpu.memory_space<vmem>>, %arg10: memref<128x256xbf16, #tpu.memory_space<vmem>>, %arg11: memref<1x256xf32, #tpu.memory_space<vmem>>, %arg12: memref<128x128xbf16, #tpu.memory_space<vmem>>, %arg13: memref<1x128xf32, #tpu.memory_space<vmem>>, %arg14: memref<8x128xbf16, #tpu.memory_space<vmem>>, %arg15: memref<128x8xf32, #tpu.memory_space<vmem>>, %arg16: memref<128x256xbf16, #tpu.memory_space<vmem>>, %arg17: memref<1x256xf32, #tpu.memory_space<vmem>>, %arg18: memref<256x256xbf16, #tpu.memory_space<vmem>>, %arg19: memref<1x256xf32, #tpu.memory_space<vmem>>, %arg20: memref<1x128x512xf32, #tpu.memory_space<vmem>>) attributes {dimension_semantics = [#tpu.dimension_semantics<parallel>], iteration_bounds = array<i64: 2>, scalar_prefetch = 0 : i64, scratch_operands = 0 : i64, tpu.core_type = #tpu.core_type<tc>, window_params = [{transform_indices = @transform_0, window_bounds = array<i64: 1, 128, 128>}, {transform_indices = @transform_1, window_bounds = array<i64: 1, 128, 64>}, {transform_indices = @transform_2, window_bounds = array<i64: 1, 64, 128>}, {pipeline_mode = #tpu.pipeline_mode<synchronous>, transform_indices = @transform_3, window_bounds = array<i64: 128, 128>}, {pipeline_mode = #tpu.pipeline_mode<synchronous>, transform_indices = @transform_4, window_bounds = array<i64: 1, 128>}, {pipeline_mode = #tpu.pipeline_mode<synchronous>, transform_indices = @transform_5, window_bounds = array<i64: 128, 256>}, {pipeline_mode = #tpu.pipeline_mode<synchronous>, transform_indices = @transform_6, window_bounds = array<i64: 1, 256>}, {pipeline_mode = #tpu.pipeline_mode<synchronous>, transform_indices = @transform_7, window_bounds = array<i64: 128, 384>}, {pipeline_mode = #tpu.pipeline_mode<synchronous>, transform_indices = @transform_8, window_bounds = array<i64: 1, 384>}, {pipeline_mode = #tpu.pipeline_mode<synchronous>, transform_indices = @transform_9, window_bounds = array<i64: 128, 256>}, {pipeline_mode = #tpu.pipeline_mode<synchronous>, transform_indices = @transform_10, window_bounds = array<i64: 1, 256>}, {pipeline_mode = #tpu.pipeline_mode<synchronous>, transform_indices = @transform_11, window_bounds = array<i64: 128, 128>}, {pipeline_mode = #tpu.pipeline_mode<synchronous>, transform_indices = @transform_12, window_bounds = array<i64: 1, 128>}, {pipeline_mode = #tpu.pipeline_mode<synchronous>, transform_indices = @transform_13, window_bounds = array<i64: 8, 128>}, {pipeline_mode = #tpu.pipeline_mode<synchronous>, transform_indices = @transform_14, window_bounds = array<i64: 128, 8>}, {pipeline_mode = #tpu.pipeline_mode<synchronous>, transform_indices = @transform_15, window_bounds = array<i64: 128, 256>}, {pipeline_mode = #tpu.pipeline_mode<synchronous>, transform_indices = @transform_16, window_bounds = array<i64: 1, 256>}, {pipeline_mode = #tpu.pipeline_mode<synchronous>, transform_indices = @transform_17, window_bounds = array<i64: 256, 256>}, {pipeline_mode = #tpu.pipeline_mode<synchronous>, transform_indices = @transform_18, window_bounds = array<i64: 1, 256>}, {transform_indices = @transform_19, window_bounds = array<i64: 1, 128, 512>}]} {
    %c0 = arith.constant 0 : index
    %c0_0 = arith.constant 0 : index
    %c0_1 = arith.constant 0 : index
    %0 = vector.load %arg1[%c0, %c0_0, %c0_1] : memref<1x128x128xbf16, #tpu.memory_space<vmem>>, vector<1x128x128xbf16>
    %1 = vector.shape_cast %0 : vector<1x128x128xbf16> to vector<128x128xbf16>
    %c0_2 = arith.constant 0 : index
    %c0_3 = arith.constant 0 : index
    %c0_4 = arith.constant 0 : index
    %2 = vector.load %arg2[%c0_2, %c0_3, %c0_4] : memref<1x128x64xbf16, #tpu.memory_space<vmem>>, vector<1x128x64xbf16>
    %3 = vector.shape_cast %2 : vector<1x128x64xbf16> to vector<128x64xbf16>
    %c0_5 = arith.constant 0 : index
    %c0_6 = arith.constant 0 : index
    %c0_7 = arith.constant 0 : index
    %4 = vector.load %arg3[%c0_5, %c0_6, %c0_7] : memref<1x64x128xbf16, #tpu.memory_space<vmem>>, vector<1x64x128xbf16>
    %5 = vector.shape_cast %4 : vector<1x64x128xbf16> to vector<64x128xbf16>
    %c0_8 = arith.constant 0 : index
    %c0_9 = arith.constant 0 : index
    %6 = vector.load %arg4[%c0_8, %c0_9] : memref<128x128xbf16, #tpu.memory_space<vmem>>, vector<128x128xbf16>
    %cst = arith.constant dense<0.000000e+00> : vector<128x128xf32>
    %7 = tpu.matmul %1, %6, %cst {dimension_numbers = #tpu.dot_dimension_numbers<[1], [0], [0], [1], [0, 0, 1, 1], [], []>} : vector<128x128xbf16>, vector<128x128xbf16>, vector<128x128xf32> -> vector<128x128xf32>
    %c0_10 = arith.constant 0 : index
    %c0_11 = arith.constant 0 : index
    %8 = vector.load %arg5[%c0_10, %c0_11] : memref<1x128xf32, #tpu.memory_space<vmem>>, vector<1x128xf32>
    %9 = vector.broadcast %8 : vector<1x128xf32> to vector<128x128xf32>
    %10 = arith.addf %7, %9 : vector<128x128xf32>
    %11 = arith.truncf %10 : vector<128x128xf32> to vector<128x128xbf16>
    %cst_12 = arith.constant dense<0.000000e+00> : vector<64x128xf32>
    %12 = tpu.matmul %5, %11, %cst_12 {dimension_numbers = #tpu.dot_dimension_numbers<[1], [0], [0], [1], [0, 0, 1, 1], [], []>} : vector<64x128xbf16>, vector<128x128xbf16>, vector<64x128xf32> -> vector<64x128xf32>
    %13 = arith.truncf %12 : vector<64x128xf32> to vector<64x128xbf16>
    %cst_13 = arith.constant dense<0.000000e+00> : vector<128x128xf32>
    %14 = tpu.matmul %3, %13, %cst_13 {dimension_numbers = #tpu.dot_dimension_numbers<[1], [0], [0], [1], [0, 0, 1, 1], [], []>} : vector<128x64xbf16>, vector<64x128xbf16>, vector<128x128xf32> -> vector<128x128xf32>
    %cst_14 = arith.constant 0.000000e+00 : f32
    %15 = vector.broadcast %cst_14 : f32 to vector<128x128xf32>
    %16 = arith.maximumf %14, %15 : vector<128x128xf32>
    %17 = arith.truncf %16 : vector<128x128xf32> to vector<128x128xbf16>
    %c0_15 = arith.constant 0 : index
    %c0_16 = arith.constant 0 : index
    %18 = vector.load %arg6[%c0_15, %c0_16] : memref<128x256xbf16, #tpu.memory_space<vmem>>, vector<128x256xbf16>
    %cst_17 = arith.constant dense<0.000000e+00> : vector<128x256xf32>
    %19 = tpu.matmul %17, %18, %cst_17 {dimension_numbers = #tpu.dot_dimension_numbers<[1], [0], [0], [1], [0, 0, 1, 1], [], []>} : vector<128x128xbf16>, vector<128x256xbf16>, vector<128x256xf32> -> vector<128x256xf32>
    %c0_18 = arith.constant 0 : index
    %c0_19 = arith.constant 0 : index
    %20 = vector.load %arg7[%c0_18, %c0_19] : memref<1x256xf32, #tpu.memory_space<vmem>>, vector<1x256xf32>
    %21 = vector.broadcast %20 : vector<1x256xf32> to vector<128x256xf32>
    %22 = arith.addf %19, %21 : vector<128x256xf32>
    %23 = vector.extract_strided_slice %22 {offsets = [0, 0], sizes = [128, 128], strides = [1, 1]} : vector<128x256xf32> to vector<128x128xf32>
    %24 = arith.truncf %23 : vector<128x128xf32> to vector<128x128xbf16>
    %cst_20 = arith.constant dense<0.000000e+00> : vector<64x128xf32>
    %25 = tpu.matmul %5, %24, %cst_20 {dimension_numbers = #tpu.dot_dimension_numbers<[1], [0], [0], [1], [0, 0, 1, 1], [], []>} : vector<64x128xbf16>, vector<128x128xbf16>, vector<64x128xf32> -> vector<64x128xf32>
    %26 = arith.truncf %25 : vector<64x128xf32> to vector<64x128xbf16>
    %cst_21 = arith.constant dense<0.000000e+00> : vector<128x128xf32>
    %27 = tpu.matmul %3, %26, %cst_21 {dimension_numbers = #tpu.dot_dimension_numbers<[1], [0], [0], [1], [0, 0, 1, 1], [], []>} : vector<128x64xbf16>, vector<64x128xbf16>, vector<128x128xf32> -> vector<128x128xf32>
    %28 = vector.extract_strided_slice %22 {offsets = [0, 128], sizes = [128, 128], strides = [1, 1]} : vector<128x256xf32> to vector<128x128xf32>
    %29 = arith.truncf %28 : vector<128x128xf32> to vector<128x128xbf16>
    %c0_22 = arith.constant 0 : index
    %c0_23 = arith.constant 0 : index
    %30 = vector.load %arg8[%c0_22, %c0_23] : memref<128x384xbf16, #tpu.memory_space<vmem>>, vector<128x384xbf16>
    %cst_24 = arith.constant dense<0.000000e+00> : vector<128x384xf32>
    %31 = tpu.matmul %29, %30, %cst_24 {dimension_numbers = #tpu.dot_dimension_numbers<[1], [0], [0], [1], [0, 0, 1, 1], [], []>} : vector<128x128xbf16>, vector<128x384xbf16>, vector<128x384xf32> -> vector<128x384xf32>
    %c0_25 = arith.constant 0 : index
    %c0_26 = arith.constant 0 : index
    %32 = vector.load %arg9[%c0_25, %c0_26] : memref<1x384xf32, #tpu.memory_space<vmem>>, vector<1x384xf32>
    %33 = vector.broadcast %32 : vector<1x384xf32> to vector<128x384xf32>
    %34 = arith.addf %31, %33 : vector<128x384xf32>
    %35 = arith.truncf %27 : vector<128x128xf32> to vector<128x128xbf16>
    %c0_27 = arith.constant 0 : index
    %c0_28 = arith.constant 0 : index
    %36 = vector.load %arg10[%c0_27, %c0_28] : memref<128x256xbf16, #tpu.memory_space<vmem>>, vector<128x256xbf16>
    %cst_29 = arith.constant dense<0.000000e+00> : vector<128x256xf32>
    %37 = tpu.matmul %35, %36, %cst_29 {dimension_numbers = #tpu.dot_dimension_numbers<[1], [0], [0], [1], [0, 0, 1, 1], [], []>} : vector<128x128xbf16>, vector<128x256xbf16>, vector<128x256xf32> -> vector<128x256xf32>
    %c0_30 = arith.constant 0 : index
    %c0_31 = arith.constant 0 : index
    %38 = vector.load %arg11[%c0_30, %c0_31] : memref<1x256xf32, #tpu.memory_space<vmem>>, vector<1x256xf32>
    %39 = vector.broadcast %38 : vector<1x256xf32> to vector<128x256xf32>
    %40 = arith.addf %37, %39 : vector<128x256xf32>
    %41 = vector.extract_strided_slice %34 {offsets = [0, 0], sizes = [128, 128], strides = [1, 1]} : vector<128x384xf32> to vector<128x128xf32>
    %42 = vector.extract_strided_slice %40 {offsets = [0, 0], sizes = [128, 128], strides = [1, 1]} : vector<128x256xf32> to vector<128x128xf32>
    %43 = arith.addf %41, %42 : vector<128x128xf32>
    %44 = arith.negf %43 : vector<128x128xf32>
    %45 = math.exp %44 : vector<128x128xf32>
    %cst_32 = arith.constant 1.000000e+00 : f32
    %46 = vector.broadcast %cst_32 : f32 to vector<128x128xf32>
    %47 = arith.addf %46, %45 : vector<128x128xf32>
    %48 = arith.divf %46, %47 : vector<128x128xf32>
    %49 = vector.extract_strided_slice %34 {offsets = [0, 128], sizes = [128, 128], strides = [1, 1]} : vector<128x384xf32> to vector<128x128xf32>
    %50 = vector.extract_strided_slice %40 {offsets = [0, 128], sizes = [128, 128], strides = [1, 1]} : vector<128x256xf32> to vector<128x128xf32>
    %51 = arith.addf %49, %50 : vector<128x128xf32>
    %52 = arith.negf %51 : vector<128x128xf32>
    %53 = math.exp %52 : vector<128x128xf32>
    %cst_33 = arith.constant 1.000000e+00 : f32
    %54 = vector.broadcast %cst_33 : f32 to vector<128x128xf32>
    %55 = arith.addf %54, %53 : vector<128x128xf32>
    %56 = arith.divf %54, %55 : vector<128x128xf32>
    %57 = vector.extract_strided_slice %34 {offsets = [0, 256], sizes = [128, 128], strides = [1, 1]} : vector<128x384xf32> to vector<128x128xf32>
    %58 = arith.mulf %56, %27 : vector<128x128xf32>
    %59 = arith.truncf %58 : vector<128x128xf32> to vector<128x128xbf16>
    %c0_34 = arith.constant 0 : index
    %c0_35 = arith.constant 0 : index
    %60 = vector.load %arg12[%c0_34, %c0_35] : memref<128x128xbf16, #tpu.memory_space<vmem>>, vector<128x128xbf16>
    %cst_36 = arith.constant dense<0.000000e+00> : vector<128x128xf32>
    %61 = tpu.matmul %59, %60, %cst_36 {dimension_numbers = #tpu.dot_dimension_numbers<[1], [0], [0], [1], [0, 0, 1, 1], [], []>} : vector<128x128xbf16>, vector<128x128xbf16>, vector<128x128xf32> -> vector<128x128xf32>
    %c0_37 = arith.constant 0 : index
    %c0_38 = arith.constant 0 : index
    %62 = vector.load %arg13[%c0_37, %c0_38] : memref<1x128xf32, #tpu.memory_space<vmem>>, vector<1x128xf32>
    %63 = vector.broadcast %62 : vector<1x128xf32> to vector<128x128xf32>
    %64 = arith.addf %61, %63 : vector<128x128xf32>
    %65 = arith.addf %57, %64 : vector<128x128xf32>
    %66 = math.tanh %65 : vector<128x128xf32>
    %67 = arith.mulf %48, %66 : vector<128x128xf32>
    %cst_39 = arith.constant 1.000000e+00 : f32
    %68 = vector.broadcast %cst_39 : f32 to vector<128x128xf32>
    %69 = arith.subf %68, %48 : vector<128x128xf32>
    %70 = arith.mulf %69, %27 : vector<128x128xf32>
    %71 = arith.addf %67, %70 : vector<128x128xf32>
    %c0_40 = arith.constant 0 : index
    %c0_41 = arith.constant 0 : index
    %72 = vector.load %arg14[%c0_40, %c0_41] : memref<8x128xbf16, #tpu.memory_space<vmem>>, vector<8x128xbf16>
    %73 = arith.truncf %71 : vector<128x128xf32> to vector<128x128xbf16>
    %cst_42 = arith.constant dense<0.000000e+00> : vector<8x128xf32>
    %74 = tpu.matmul %72, %73, %cst_42 {dimension_numbers = #tpu.dot_dimension_numbers<[1], [0], [0], [1], [0, 0, 1, 1], [], []>} : vector<8x128xbf16>, vector<128x128xbf16>, vector<8x128xf32> -> vector<8x128xf32>
    %c0_43 = arith.constant 0 : index
    %c0_44 = arith.constant 0 : index
    %75 = vector.load %arg15[%c0_43, %c0_44] : memref<128x8xf32, #tpu.memory_space<vmem>>, vector<128x8xf32>
    %cst_45 = arith.constant dense<0.000000e+00> : vector<128x128xf32>
    %76 = tpu.matmul %75, %74, %cst_45 {dimension_numbers = #tpu.dot_dimension_numbers<[1], [0], [0], [1], [0, 0, 1, 1], [], []>} : vector<128x8xf32>, vector<8x128xf32>, vector<128x128xf32> -> vector<128x128xf32>
    %77 = arith.truncf %71 : vector<128x128xf32> to vector<128x128xbf16>
    %c0_46 = arith.constant 0 : index
    %c0_47 = arith.constant 0 : index
    %78 = vector.load %arg16[%c0_46, %c0_47] : memref<128x256xbf16, #tpu.memory_space<vmem>>, vector<128x256xbf16>
    %cst_48 = arith.constant dense<0.000000e+00> : vector<128x256xf32>
    %79 = tpu.matmul %77, %78, %cst_48 {dimension_numbers = #tpu.dot_dimension_numbers<[1], [0], [0], [1], [0, 0, 1, 1], [], []>} : vector<128x128xbf16>, vector<128x256xbf16>, vector<128x256xf32> -> vector<128x256xf32>
    %c0_49 = arith.constant 0 : index
    %c0_50 = arith.constant 0 : index
    %80 = vector.load %arg17[%c0_49, %c0_50] : memref<1x256xf32, #tpu.memory_space<vmem>>, vector<1x256xf32>
    %81 = vector.broadcast %80 : vector<1x256xf32> to vector<128x256xf32>
    %82 = arith.addf %79, %81 : vector<128x256xf32>
    %83 = arith.truncf %82 : vector<128x256xf32> to vector<128x256xbf16>
    %cst_51 = arith.constant dense<0.000000e+00> : vector<64x256xf32>
    %84 = tpu.matmul %5, %83, %cst_51 {dimension_numbers = #tpu.dot_dimension_numbers<[1], [0], [0], [1], [0, 0, 1, 1], [], []>} : vector<64x128xbf16>, vector<128x256xbf16>, vector<64x256xf32> -> vector<64x256xf32>
    %85 = arith.truncf %84 : vector<64x256xf32> to vector<64x256xbf16>
    %cst_52 = arith.constant dense<0.000000e+00> : vector<128x256xf32>
    %86 = tpu.matmul %3, %85, %cst_52 {dimension_numbers = #tpu.dot_dimension_numbers<[1], [0], [0], [1], [0, 0, 1, 1], [], []>} : vector<128x64xbf16>, vector<64x256xbf16>, vector<128x256xf32> -> vector<128x256xf32>
    %cst_53 = arith.constant 0.000000e+00 : f32
    %87 = vector.broadcast %cst_53 : f32 to vector<128x256xf32>
    %88 = arith.maximumf %86, %87 : vector<128x256xf32>
    %89 = arith.truncf %88 : vector<128x256xf32> to vector<128x256xbf16>
    %c0_54 = arith.constant 0 : index
    %c0_55 = arith.constant 0 : index
    %90 = vector.load %arg18[%c0_54, %c0_55] : memref<256x256xbf16, #tpu.memory_space<vmem>>, vector<256x256xbf16>
    %cst_56 = arith.constant dense<0.000000e+00> : vector<128x256xf32>
    %91 = tpu.matmul %89, %90, %cst_56 {dimension_numbers = #tpu.dot_dimension_numbers<[1], [0], [0], [1], [0, 0, 1, 1], [], []>} : vector<128x256xbf16>, vector<256x256xbf16>, vector<128x256xf32> -> vector<128x256xf32>
    %c0_57 = arith.constant 0 : index
    %c0_58 = arith.constant 0 : index
    %92 = vector.load %arg19[%c0_57, %c0_58] : memref<1x256xf32, #tpu.memory_space<vmem>>, vector<1x256xf32>
    %93 = vector.broadcast %92 : vector<1x256xf32> to vector<128x256xf32>
    %94 = arith.addf %91, %93 : vector<128x256xf32>
    %95 = arith.truncf %94 : vector<128x256xf32> to vector<128x256xbf16>
    %cst_59 = arith.constant dense<0.000000e+00> : vector<64x256xf32>
    %96 = tpu.matmul %5, %95, %cst_59 {dimension_numbers = #tpu.dot_dimension_numbers<[1], [0], [0], [1], [0, 0, 1, 1], [], []>} : vector<64x128xbf16>, vector<128x256xbf16>, vector<64x256xf32> -> vector<64x256xf32>
    %97 = arith.truncf %96 : vector<64x256xf32> to vector<64x256xbf16>
    %cst_60 = arith.constant dense<0.000000e+00> : vector<128x256xf32>
    %98 = tpu.matmul %3, %97, %cst_60 {dimension_numbers = #tpu.dot_dimension_numbers<[1], [0], [0], [1], [0, 0, 1, 1], [], []>} : vector<128x64xbf16>, vector<64x256xbf16>, vector<128x256xf32> -> vector<128x256xf32>
    %99 = tpu.concatenate %71, %98, %76 in 1 : vector<128x128xf32>, vector<128x256xf32>, vector<128x128xf32> -> vector<128x512xf32>
    %c0_61 = arith.constant 0 : index
    %c0_62 = arith.constant 0 : index
    %c0_63 = arith.constant 0 : index
    %100 = vector.load %arg20[%c0_61, %c0_62, %c0_63] : memref<1x128x512xf32, #tpu.memory_space<vmem>>, vector<1x128x512xf32>
    %101 = vector.shape_cast %100 : vector<1x128x512xf32> to vector<128x512xf32>
    %102 = vector.shape_cast %99 : vector<128x512xf32> to vector<1x128x512xf32>
    tpu.vector_store %arg20[%c0_61, %c0_62, %c0_63], %102 {strides = array<i32>} : memref<1x128x512xf32, #tpu.memory_space<vmem>>, vector<1x128x512xf32>,
    return
  }
  func.func @transform_0(%arg0: i32) -> (i32, i32, i32) {
    %c0_i32 = arith.constant 0 : i32
    %c0_i32_0 = arith.constant 0 : i32
    %c0_i32_1 = arith.constant 0 : i32
    return %arg0, %c0_i32, %c0_i32_0 : i32, i32, i32
  }
  func.func @transform_1(%arg0: i32) -> (i32, i32, i32) {
    %c0_i32 = arith.constant 0 : i32
    %c0_i32_0 = arith.constant 0 : i32
    %c0_i32_1 = arith.constant 0 : i32
    return %arg0, %c0_i32, %c0_i32_0 : i32, i32, i32
  }
  func.func @transform_2(%arg0: i32) -> (i32, i32, i32) {
    %c0_i32 = arith.constant 0 : i32
    %c0_i32_0 = arith.constant 0 : i32
    %c0_i32_1 = arith.constant 0 : i32
    return %arg0, %c0_i32, %c0_i32_0 : i32, i32, i32
  }
  func.func @transform_3(%arg0: i32) -> (i32, i32) {
    %c0_i32 = arith.constant 0 : i32
    %c0_i32_0 = arith.constant 0 : i32
    %c0_i32_1 = arith.constant 0 : i32
    return %c0_i32, %c0_i32_0 : i32, i32
  }
  func.func @transform_4(%arg0: i32) -> (i32, i32) {
    %c0_i32 = arith.constant 0 : i32
    %c0_i32_0 = arith.constant 0 : i32
    %c0_i32_1 = arith.constant 0 : i32
    return %c0_i32, %c0_i32_0 : i32, i32
  }
  func.func @transform_5(%arg0: i32) -> (i32, i32) {
    %c0_i32 = arith.constant 0 : i32
    %c0_i32_0 = arith.constant 0 : i32
    %c0_i32_1 = arith.constant 0 : i32
    return %c0_i32, %c0_i32_0 : i32, i32
  }
  func.func @transform_6(%arg0: i32) -> (i32, i32) {
    %c0_i32 = arith.constant 0 : i32
    %c0_i32_0 = arith.constant 0 : i32
    %c0_i32_1 = arith.constant 0 : i32
    return %c0_i32, %c0_i32_0 : i32, i32
  }
  func.func @transform_7(%arg0: i32) -> (i32, i32) {
    %c0_i32 = arith.constant 0 : i32
    %c0_i32_0 = arith.constant 0 : i32
    %c0_i32_1 = arith.constant 0 : i32
    return %c0_i32, %c0_i32_0 : i32, i32
  }
  func.func @transform_8(%arg0: i32) -> (i32, i32) {
    %c0_i32 = arith.constant 0 : i32
    %c0_i32_0 = arith.constant 0 : i32
    %c0_i32_1 = arith.constant 0 : i32
    return %c0_i32, %c0_i32_0 : i32, i32
  }
  func.func @transform_9(%arg0: i32) -> (i32, i32) {
    %c0_i32 = arith.constant 0 : i32
    %c0_i32_0 = arith.constant 0 : i32
    %c0_i32_1 = arith.constant 0 : i32
    return %c0_i32, %c0_i32_0 : i32, i32
  }
  func.func @transform_10(%arg0: i32) -> (i32, i32) {
    %c0_i32 = arith.constant 0 : i32
    %c0_i32_0 = arith.constant 0 : i32
    %c0_i32_1 = arith.constant 0 : i32
    return %c0_i32, %c0_i32_0 : i32, i32
  }
  func.func @transform_11(%arg0: i32) -> (i32, i32) {
    %c0_i32 = arith.constant 0 : i32
    %c0_i32_0 = arith.constant 0 : i32
    %c0_i32_1 = arith.constant 0 : i32
    return %c0_i32, %c0_i32_0 : i32, i32
  }
  func.func @transform_12(%arg0: i32) -> (i32, i32) {
    %c0_i32 = arith.constant 0 : i32
    %c0_i32_0 = arith.constant 0 : i32
    %c0_i32_1 = arith.constant 0 : i32
    return %c0_i32, %c0_i32_0 : i32, i32
  }
  func.func @transform_13(%arg0: i32) -> (i32, i32) {
    %c0_i32 = arith.constant 0 : i32
    %c0_i32_0 = arith.constant 0 : i32
    %c0_i32_1 = arith.constant 0 : i32
    return %c0_i32, %c0_i32_0 : i32, i32
  }
  func.func @transform_14(%arg0: i32) -> (i32, i32) {
    %c0_i32 = arith.constant 0 : i32
    %c0_i32_0 = arith.constant 0 : i32
    %c0_i32_1 = arith.constant 0 : i32
    return %c0_i32, %c0_i32_0 : i32, i32
  }
  func.func @transform_15(%arg0: i32) -> (i32, i32) {
    %c0_i32 = arith.constant 0 : i32
    %c0_i32_0 = arith.constant 0 : i32
    %c0_i32_1 = arith.constant 0 : i32
    return %c0_i32, %c0_i32_0 : i32, i32
  }
  func.func @transform_16(%arg0: i32) -> (i32, i32) {
    %c0_i32 = arith.constant 0 : i32
    %c0_i32_0 = arith.constant 0 : i32
    %c0_i32_1 = arith.constant 0 : i32
    return %c0_i32, %c0_i32_0 : i32, i32
  }
  func.func @transform_17(%arg0: i32) -> (i32, i32) {
    %c0_i32 = arith.constant 0 : i32
    %c0_i32_0 = arith.constant 0 : i32
    %c0_i32_1 = arith.constant 0 : i32
    return %c0_i32, %c0_i32_0 : i32, i32
  }
  func.func @transform_18(%arg0: i32) -> (i32, i32) {
    %c0_i32 = arith.constant 0 : i32
    %c0_i32_0 = arith.constant 0 : i32
    %c0_i32_1 = arith.constant 0 : i32
    return %c0_i32, %c0_i32_0 : i32, i32
  }
  func.func @transform_19(%arg0: i32) -> (i32, i32, i32) {
    %c0_i32 = arith.constant 0 : i32
    %c0_i32_0 = arith.constant 0 : i32
    %c0_i32_1 = arith.constant 0 : i32
    return %arg0, %c0_i32, %c0_i32_0 : i32, i32, i32
  }
}

</mosaic_0001>

<llo_original>
// kernel: modelp_forward_fused.1
$region0: #{modelp_forward_fused.1}
  #allocation0 [shape = 'u32[]', space=smem, size = 0x4, offset = 0x4, fixed_abs, tag = 'smem constant byte address 0x4 - core index']
  #allocation1 [shape = 'u32[144,128]{1,0:T(1,128)}', space=vmem, size = 0x12000, scoped, tag = 'internal scratch']
  %s0 = inlined_call_operand.vmem [shape: bf16[2,128,128], index: 0, kind: input, shape index: {}]
  %s1 = inlined_call_operand.vmem [shape: bf16[2,128,64], index: 1, kind: input, shape index: {}]
  %s2 = inlined_call_operand.vmem [shape: bf16[2,64,128], index: 2, kind: input, shape index: {}]
  %s3 = inlined_call_operand.vmem [shape: bf16[128,128], index: 3, kind: input, shape index: {}]
  %s4 = inlined_call_operand.vmem [shape: f32[1,128], index: 4, kind: input, shape index: {}]
  %s5 = inlined_call_operand.vmem [shape: bf16[128,256], index: 5, kind: input, shape index: {}]
  %s6 = inlined_call_operand.vmem [shape: f32[1,256], index: 6, kind: input, shape index: {}]
  %s7 = inlined_call_operand.vmem [shape: bf16[128,384], index: 7, kind: input, shape index: {}]
  %s8 = inlined_call_operand.vmem [shape: f32[1,384], index: 8, kind: input, shape index: {}]
  %s9 = inlined_call_operand.vmem [shape: bf16[128,256], index: 9, kind: input, shape index: {}]
  %s10 = inlined_call_operand.vmem [shape: f32[1,256], index: 10, kind: input, shape index: {}]
  %s11 = inlined_call_operand.vmem [shape: bf16[128,128], index: 11, kind: input, shape index: {}]
  %s12 = inlined_call_operand.vmem [shape: f32[1,128], index: 12, kind: input, shape index: {}]
  %s13 = inlined_call_operand.vmem [shape: bf16[8,128], index: 13, kind: input, shape index: {}]
  %s14 = inlined_call_operand.vmem [shape: f32[128,8], index: 14, kind: input, shape index: {}]
  %s15 = inlined_call_operand.vmem [shape: bf16[128,256], index: 15, kind: input, shape index: {}]
  %s16 = inlined_call_operand.vmem [shape: f32[1,256], index: 16, kind: input, shape index: {}]
  %s17 = inlined_call_operand.vmem [shape: bf16[256,256], index: 17, kind: input, shape index: {}]
  %s18 = inlined_call_operand.vmem [shape: f32[1,256], index: 18, kind: input, shape index: {}]
  %s19 = inlined_call_operand.vmem [shape: f32[2,128,512], index: 19, kind: output, shape index: {}]
  %s20 = sld [smem:[#allocation0]]
  $region109: #{modelp_forward_fused.1} parent=0
    _
  %s22 = ssub.s32 1, %s20
  %s23 = scalar_select 0, %s22, %s20
  loop: start=0, step=1, limit=4
  $region2: #{modelp_forward_fused.1} parent=0 // loop_pre_header
    _
  $region3: #{modelp_forward_fused.1} parent=0 // loop_header
    %s25 = sphi 0, %s29
    %p26 = scmp.ge.s32.totalorder %s25, 4
    %s35 = sphi 0, %s37
    %s38 = sphi 0, %s35
    %s39 = sphi 0, %s38
    %s55 = sphi 0, %s39
    %s61 = sphi 0, %s63
    %s64 = sphi 0, %s61
    %s65 = sphi 0, %s64
    %s81 = sphi 0, %s65
    %s87 = sphi 0, %s89
    %s90 = sphi 0, %s87
    %s91 = sphi 0, %s90
    %s107 = sphi 0, %s91
    %s111 = sphi 0, %s111
    %s113 = sphi 0, %s111
    %s114 = sphi 0, %s113
    %s128 = sphi 0, %s114
    %s132 = sphi 0, %s132
    %s134 = sphi 0, %s132
    %s135 = sphi 0, %s134
    %s149 = sphi 0, %s135
    %s153 = sphi 0, %s153
    %s155 = sphi 0, %s153
    %s156 = sphi 0, %s155
    %s170 = sphi 0, %s156
    %s174 = sphi 0, %s174
    %s176 = sphi 0, %s174
    %s177 = sphi 0, %s176
    %s191 = sphi 0, %s177
    %s195 = sphi 0, %s195
    %s197 = sphi 0, %s195
    %s198 = sphi 0, %s197
    %s212 = sphi 0, %s198
    %s216 = sphi 0, %s216
    %s218 = sphi 0, %s216
    %s219 = sphi 0, %s218
    %s233 = sphi 0, %s219
    %s237 = sphi 0, %s237
    %s239 = sphi 0, %s237
    %s240 = sphi 0, %s239
    %s254 = sphi 0, %s240
    %s258 = sphi 0, %s258
    %s260 = sphi 0, %s258
    %s261 = sphi 0, %s260
    %s275 = sphi 0, %s261
    %s279 = sphi 0, %s279
    %s281 = sphi 0, %s279
    %s282 = sphi 0, %s281
    %s296 = sphi 0, %s282
    %s300 = sphi 0, %s300
    %s302 = sphi 0, %s300
    %s303 = sphi 0, %s302
    %s317 = sphi 0, %s303
    %s321 = sphi 0, %s321
    %s323 = sphi 0, %s321
    %s324 = sphi 0, %s323
    %s338 = sphi 0, %s324
    %s342 = sphi 0, %s342
    %s344 = sphi 0, %s342
    %s345 = sphi 0, %s344
    %s359 = sphi 0, %s345
    %s363 = sphi 0, %s363
    %s365 = sphi 0, %s363
    %s366 = sphi 0, %s365
    %s380 = sphi 0, %s366
    %s384 = sphi 0, %s384
    %s386 = sphi 0, %s384
    %s387 = sphi 0, %s386
    %s401 = sphi 0, %s387
    %s405 = sphi 0, %s405
    %s407 = sphi 0, %s405
    %s408 = sphi 0, %s407
    %s422 = sphi 0, %s408
    %s426 = sphi 0, %s426
    %s428 = sphi 0, %s426
    %s429 = sphi 0, %s428
    %s443 = sphi 0, %s429
    %s449 = sphi 0, %s451
    %s452 = sphi 0, %s449
    %s453 = sphi 0, %s452
    %s469 = sphi 0, %s453
  $region4: #{modelp_forward_fused.1} parent=0 // loop_header_branch
    %28 = sbr.rel (%p26) target = $region8
  $region5: #{modelp_forward_fused.1} parent=0 // loop_body
    %s30 = ssub.s32 %s25, 1
    %s31 = ssub.s32 %s25, 2
    %s32 = sadd.s32 %s25, 1
    %s33 = ssub.s32 %s25, %s32
    %p34 = scmp.eq.s32.totalorder %s33, 0
    %s36 = sadd.s32 %s35, 1
    %s37 = scalar_select %p34, %s35, %s36
    %p40 = pneg %p34
    %p41 = scmp.eq.s32.totalorder %s25, 1
    %p42 = por %p40, %p41
    %p43 = scmp.ne.s32.totalorder %s35, %s38
    %p44 = scmp.eq.s32.totalorder %s25, 0
    %p45 = por %p43, %p44
    %p46 = scmp.ne.s32.totalorder %s35, %s38
    %p47 = scmp.eq.s32.totalorder %s30, 1
    %p48 = por %p46, %p47
    %p49 = scmp.ne.s32.totalorder %s38, %s39
    %p50 = scmp.eq.s32.totalorder %s30, 0
    %p51 = por %p49, %p50
    %p52 = scmp.ne.s32.totalorder %s38, %s39
    %p53 = scmp.eq.s32.totalorder %s31, 1
    %p54 = por %p52, %p53
    %p56 = scmp.ne.s32.totalorder %s39, %s55
    %p57 = scmp.eq.s32.totalorder %s31, 0
    %p58 = por %p56, %p57
    %s59 = ssub.s32 %s25, %s32
    %p60 = scmp.eq.s32.totalorder %s59, 0
    %s62 = sadd.s32 %s61, 1
    %s63 = scalar_select %p60, %s61, %s62
    %p66 = pneg %p60
    %p67 = scmp.eq.s32.totalorder %s25, 1
    %p68 = por %p66, %p67
    %p69 = scmp.ne.s32.totalorder %s61, %s64
    %p70 = scmp.eq.s32.totalorder %s25, 0
    %p71 = por %p69, %p70
    %p72 = scmp.ne.s32.totalorder %s61, %s64
    %p73 = scmp.eq.s32.totalorder %s30, 1
    %p74 = por %p72, %p73
    %p75 = scmp.ne.s32.totalorder %s64, %s65
    %p76 = scmp.eq.s32.totalorder %s30, 0
    %p77 = por %p75, %p76
    %p78 = scmp.ne.s32.totalorder %s64, %s65
    %p79 = scmp.eq.s32.totalorder %s31, 1
    %p80 = por %p78, %p79
    %p82 = scmp.ne.s32.totalorder %s65, %s81
    %p83 = scmp.eq.s32.totalorder %s31, 0
    %p84 = por %p82, %p83
    %s85 = ssub.s32 %s25, %s32
    %p86 = scmp.eq.s32.totalorder %s85, 0
    %s88 = sadd.s32 %s87, 1
    %s89 = scalar_select %p86, %s87, %s88
    %p92 = pneg %p86
    %p93 = scmp.eq.s32.totalorder %s25, 1
    %p94 = por %p92, %p93
    %p95 = scmp.ne.s32.totalorder %s87, %s90
    %p96 = scmp.eq.s32.totalorder %s25, 0
    %p97 = por %p95, %p96
    %p98 = scmp.ne.s32.totalorder %s87, %s90
    %p99 = scmp.eq.s32.totalorder %s30, 1
    %p100 = por %p98, %p99
    %p101 = scmp.ne.s32.totalorder %s90, %s91
    %p102 = scmp.eq.s32.totalorder %s30, 0
    %p103 = por %p101, %p102
    %p104 = scmp.ne.s32.totalorder %s90, %s91
    %p105 = scmp.eq.s32.totalorder %s31, 1
    %p106 = por %p104, %p105
    %p108 = scmp.ne.s32.totalorder %s91, %s107
    %p109 = scmp.eq.s32.totalorder %s31, 0
    %p110 = por %p108, %p109
    %s112 = sadd.s32 %s111, 1
    %p115 = scmp.eq.s32.totalorder %s25, 1
    %p116 = scmp.ne.s32.totalorder %s111, %s113
    %p117 = scmp.eq.s32.totalorder %s25, 0
    %p118 = por %p116, %p117
    %p119 = scmp.ne.s32.totalorder %s111, %s113
    %p120 = scmp.eq.s32.totalorder %s30, 1
    %p121 = por %p119, %p120
    %p122 = scmp.ne.s32.totalorder %s113, %s114
    %p123 = scmp.eq.s32.totalorder %s30, 0
    %p124 = por %p122, %p123
    %p125 = scmp.ne.s32.totalorder %s113, %s114
    %p126 = scmp.eq.s32.totalorder %s31, 1
    %p127 = por %p125, %p126
    %p129 = scmp.ne.s32.totalorder %s114, %s128
    %p130 = scmp.eq.s32.totalorder %s31, 0
    %p131 = por %p129, %p130
    %s133 = sadd.s32 %s132, 1
    %p136 = scmp.eq.s32.totalorder %s25, 1
    %p137 = scmp.ne.s32.totalorder %s132, %s134
    %p138 = scmp.eq.s32.totalorder %s25, 0
    %p139 = por %p137, %p138
    %p140 = scmp.ne.s32.totalorder %s132, %s134
    %p141 = scmp.eq.s32.totalorder %s30, 1
    %p142 = por %p140, %p141
    %p143 = scmp.ne.s32.totalorder %s134, %s135
    %p144 = scmp.eq.s32.totalorder %s30, 0
    %p145 = por %p143, %p144
    %p146 = scmp.ne.s32.totalorder %s134, %s135
    %p147 = scmp.eq.s32.totalorder %s31, 1
    %p148 = por %p146, %p147
    %p150 = scmp.ne.s32.totalorder %s135, %s149
    %p151 = scmp.eq.s32.totalorder %s31, 0
    %p152 = por %p150, %p151
    %s154 = sadd.s32 %s153, 1
    %p157 = scmp.eq.s32.totalorder %s25, 1
    %p158 = scmp.ne.s32.totalorder %s153, %s155
    %p159 = scmp.eq.s32.totalorder %s25, 0
    %p160 = por %p158, %p159
    %p161 = scmp.ne.s32.totalorder %s153, %s155
    %p162 = scmp.eq.s32.totalorder %s30, 1
    %p163 = por %p161, %p162
    %p164 = scmp.ne.s32.totalorder %s155, %s156
    %p165 = scmp.eq.s32.totalorder %s30, 0
    %p166 = por %p164, %p165
    %p167 = scmp.ne.s32.totalorder %s155, %s156
    %p168 = scmp.eq.s32.totalorder %s31, 1
    %p169 = por %p167, %p168
    %p171 = scmp.ne.s32.totalorder %s156, %s170
    %p172 = scmp.eq.s32.totalorder %s31, 0
    %p173 = por %p171, %p172
    %s175 = sadd.s32 %s174, 1
    %p178 = scmp.eq.s32.totalorder %s25, 1
    %p179 = scmp.ne.s32.totalorder %s174, %s176
    %p180 = scmp.eq.s32.totalorder %s25, 0
    %p181 = por %p179, %p180
    %p182 = scmp.ne.s32.totalorder %s174, %s176
    %p183 = scmp.eq.s32.totalorder %s30, 1
    %p184 = por %p182, %p183
    %p185 = scmp.ne.s32.totalorder %s176, %s177
    %p186 = scmp.eq.s32.totalorder %s30, 0
    %p187 = por %p185, %p186
    %p188 = scmp.ne.s32.totalorder %s176, %s177
    %p189 = scmp.eq.s32.totalorder %s31, 1
    %p190 = por %p188, %p189
    %p192 = scmp.ne.s32.totalorder %s177, %s191
    %p193 = scmp.eq.s32.totalorder %s31, 0
    %p194 = por %p192, %p193
    %s196 = sadd.s32 %s195, 1
    %p199 = scmp.eq.s32.totalorder %s25, 1
    %p200 = scmp.ne.s32.totalorder %s195, %s197
    %p201 = scmp.eq.s32.totalorder %s25, 0
    %p202 = por %p200, %p201
    %p203 = scmp.ne.s32.totalorder %s195, %s197
    %p204 = scmp.eq.s32.totalorder %s30, 1
    %p205 = por %p203, %p204
    %p206 = scmp.ne.s32.totalorder %s197, %s198
    %p207 = scmp.eq.s32.totalorder %s30, 0
    %p208 = por %p206, %p207
    %p209 = scmp.ne.s32.totalorder %s197, %s198
    %p210 = scmp.eq.s32.totalorder %s31, 1
    %p211 = por %p209, %p210
    %p213 = scmp.ne.s32.totalorder %s198, %s212
    %p214 = scmp.eq.s32.totalorder %s31, 0
    %p215 = por %p213, %p214
    %s217 = sadd.s32 %s216, 1
    %p220 = scmp.eq.s32.totalorder %s25, 1
    %p221 = scmp.ne.s32.totalorder %s216, %s218
    %p222 = scmp.eq.s32.totalorder %s25, 0
    %p223 = por %p221, %p222
    %p224 = scmp.ne.s32.totalorder %s216, %s218
    %p225 = scmp.eq.s32.totalorder %s30, 1
    %p226 = por %p224, %p225
    %p227 = scmp.ne.s32.totalorder %s218, %s219
    %p228 = scmp.eq.s32.totalorder %s30, 0
    %p229 = por %p227, %p228
    %p230 = scmp.ne.s32.totalorder %s218, %s219
    %p231 = scmp.eq.s32.totalorder %s31, 1
    %p232 = por %p230, %p231
    %p234 = scmp.ne.s32.totalorder %s219, %s233
    %p235 = scmp.eq.s32.totalorder %s31, 0
    %p236 = por %p234, %p235
    %s238 = sadd.s32 %s237, 1
    %p241 = scmp.eq.s32.totalorder %s25, 1
    %p242 = scmp.ne.s32.totalorder %s237, %s239
    %p243 = scmp.eq.s32.totalorder %s25, 0
    %p244 = por %p242, %p243
    %p245 = scmp.ne.s32.totalorder %s237, %s239
    %p246 = scmp.eq.s32.totalorder %s30, 1
    %p247 = por %p245, %p246
    %p248 = scmp.ne.s32.totalorder %s239, %s240
    %p249 = scmp.eq.s32.totalorder %s30, 0
    %p250 = por %p248, %p249
    %p251 = scmp.ne.s32.totalorder %s239, %s240
    %p252 = scmp.eq.s32.totalorder %s31, 1
    %p253 = por %p251, %p252
    %p255 = scmp.ne.s32.totalorder %s240, %s254
    %p256 = scmp.eq.s32.totalorder %s31, 0
    %p257 = por %p255, %p256
    %s259 = sadd.s32 %s258, 1
    %p262 = scmp.eq.s32.totalorder %s25, 1
    %p263 = scmp.ne.s32.totalorder %s258, %s260
    %p264 = scmp.eq.s32.totalorder %s25, 0
    %p265 = por %p263, %p264
    %p266 = scmp.ne.s32.totalorder %s258, %s260
    %p267 = scmp.eq.s32.totalorder %s30, 1
    %p268 = por %p266, %p267
    %p269 = scmp.ne.s32.totalorder %s260, %s261
    %p270 = scmp.eq.s32.totalorder %s30, 0
    %p271 = por %p269, %p270
    %p272 = scmp.ne.s32.totalorder %s260, %s261
    %p273 = scmp.eq.s32.totalorder %s31, 1
    %p274 = por %p272, %p273
    %p276 = scmp.ne.s32.totalorder %s261, %s275
    %p277 = scmp.eq.s32.totalorder %s31, 0
    %p278 = por %p276, %p277
    %s280 = sadd.s32 %s279, 1
    %p283 = scmp.eq.s32.totalorder %s25, 1
    %p284 = scmp.ne.s32.totalorder %s279, %s281
    %p285 = scmp.eq.s32.totalorder %s25, 0
    %p286 = por %p284, %p285
    %p287 = scmp.ne.s32.totalorder %s279, %s281
    %p288 = scmp.eq.s32.totalorder %s30, 1
    %p289 = por %p287, %p288
    %p290 = scmp.ne.s32.totalorder %s281, %s282
    %p291 = scmp.eq.s32.totalorder %s30, 0
    %p292 = por %p290, %p291
    %p293 = scmp.ne.s32.totalorder %s281, %s282
    %p294 = scmp.eq.s32.totalorder %s31, 1
    %p295 = por %p293, %p294
    %p297 = scmp.ne.s32.totalorder %s282, %s296
    %p298 = scmp.eq.s32.totalorder %s31, 0
    %p299 = por %p297, %p298
    %s301 = sadd.s32 %s300, 1
    %p304 = scmp.eq.s32.totalorder %s25, 1
    %p305 = scmp.ne.s32.totalorder %s300, %s302
    %p306 = scmp.eq.s32.totalorder %s25, 0
    %p307 = por %p305, %p306
    %p308 = scmp.ne.s32.totalorder %s300, %s302
    %p309 = scmp.eq.s32.totalorder %s30, 1
    %p310 = por %p308, %p309
    %p311 = scmp.ne.s32.totalorder %s302, %s303
    %p312 = scmp.eq.s32.totalorder %s30, 0
    %p313 = por %p311, %p312
    %p314 = scmp.ne.s32.totalorder %s302, %s303
    %p315 = scmp.eq.s32.totalorder %s31, 1
    %p316 = por %p314, %p315
    %p318 = scmp.ne.s32.totalorder %s303, %s317
    %p319 = scmp.eq.s32.totalorder %s31, 0
    %p320 = por %p318, %p319
    %s322 = sadd.s32 %s321, 1
    %p325 = scmp.eq.s32.totalorder %s25, 1
    %p326 = scmp.ne.s32.totalorder %s321, %s323
    %p327 = scmp.eq.s32.totalorder %s25, 0
    %p328 = por %p326, %p327
    %p329 = scmp.ne.s32.totalorder %s321, %s323
    %p330 = scmp.eq.s32.totalorder %s30, 1
    %p331 = por %p329, %p330
    %p332 = scmp.ne.s32.totalorder %s323, %s324
    %p333 = scmp.eq.s32.totalorder %s30, 0
    %p334 = por %p332, %p333
    %p335 = scmp.ne.s32.totalorder %s323, %s324
    %p336 = scmp.eq.s32.totalorder %s31, 1
    %p337 = por %p335, %p336
    %p339 = scmp.ne.s32.totalorder %s324, %s338
    %p340 = scmp.eq.s32.totalorder %s31, 0
    %p341 = por %p339, %p340
    %s343 = sadd.s32 %s342, 1
    %p346 = scmp.eq.s32.totalorder %s25, 1
    %p347 = scmp.ne.s32.totalorder %s342, %s344
    %p348 = scmp.eq.s32.totalorder %s25, 0
    %p349 = por %p347, %p348
    %p350 = scmp.ne.s32.totalorder %s342, %s344
    %p351 = scmp.eq.s32.totalorder %s30, 1
    %p352 = por %p350, %p351
    %p353 = scmp.ne.s32.totalorder %s344, %s345
    %p354 = scmp.eq.s32.totalorder %s30, 0
    %p355 = por %p353, %p354
    %p356 = scmp.ne.s32.totalorder %s344, %s345
    %p357 = scmp.eq.s32.totalorder %s31, 1
    %p358 = por %p356, %p357
    %p360 = scmp.ne.s32.totalorder %s345, %s359
    %p361 = scmp.eq.s32.totalorder %s31, 0
    %p362 = por %p360, %p361
    %s364 = sadd.s32 %s363, 1
    %p367 = scmp.eq.s32.totalorder %s25, 1
    %p368 = scmp.ne.s32.totalorder %s363, %s365
    %p369 = scmp.eq.s32.totalorder %s25, 0
    %p370 = por %p368, %p369
    %p371 = scmp.ne.s32.totalorder %s363, %s365
    %p372 = scmp.eq.s32.totalorder %s30, 1
    %p373 = por %p371, %p372
    %p374 = scmp.ne.s32.totalorder %s365, %s366
    %p375 = scmp.eq.s32.totalorder %s30, 0
    %p376 = por %p374, %p375
    %p377 = scmp.ne.s32.totalorder %s365, %s366
    %p378 = scmp.eq.s32.totalorder %s31, 1
    %p379 = por %p377, %p378
    %p381 = scmp.ne.s32.totalorder %s366, %s380
    %p382 = scmp.eq.s32.totalorder %s31, 0
    %p383 = por %p381, %p382
    %s385 = sadd.s32 %s384, 1
    %p388 = scmp.eq.s32.totalorder %s25, 1
    %p389 = scmp.ne.s32.totalorder %s384, %s386
    %p390 = scmp.eq.s32.totalorder %s25, 0
    %p391 = por %p389, %p390
    %p392 = scmp.ne.s32.totalorder %s384, %s386
    %p393 = scmp.eq.s32.totalorder %s30, 1
    %p394 = por %p392, %p393
    %p395 = scmp.ne.s32.totalorder %s386, %s387
    %p396 = scmp.eq.s32.totalorder %s30, 0
    %p397 = por %p395, %p396
    %p398 = scmp.ne.s32.totalorder %s386, %s387
    %p399 = scmp.eq.s32.totalorder %s31, 1
    %p400 = por %p398, %p399
    %p402 = scmp.ne.s32.totalorder %s387, %s401
    %p403 = scmp.eq.s32.totalorder %s31, 0
    %p404 = por %p402, %p403
    %s406 = sadd.s32 %s405, 1
    %p409 = scmp.eq.s32.totalorder %s25, 1
    %p410 = scmp.ne.s32.totalorder %s405, %s407
    %p411 = scmp.eq.s32.totalorder %s25, 0
    %p412 = por %p410, %p411
    %p413 = scmp.ne.s32.totalorder %s405, %s407
    %p414 = scmp.eq.s32.totalorder %s30, 1
    %p415 = por %p413, %p414
    %p416 = scmp.ne.s32.totalorder %s407, %s408
    %p417 = scmp.eq.s32.totalorder %s30, 0
    %p418 = por %p416, %p417
    %p419 = scmp.ne.s32.totalorder %s407, %s408
    %p420 = scmp.eq.s32.totalorder %s31, 1
    %p421 = por %p419, %p420
    %p423 = scmp.ne.s32.totalorder %s408, %s422
    %p424 = scmp.eq.s32.totalorder %s31, 0
    %p425 = por %p423, %p424
    %s427 = sadd.s32 %s426, 1
    %p430 = scmp.eq.s32.totalorder %s25, 1
    %p431 = scmp.ne.s32.totalorder %s426, %s428
    %p432 = scmp.eq.s32.totalorder %s25, 0
    %p433 = por %p431, %p432
    %p434 = scmp.ne.s32.totalorder %s426, %s428
    %p435 = scmp.eq.s32.totalorder %s30, 1
    %p436 = por %p434, %p435
    %p437 = scmp.ne.s32.totalorder %s428, %s429
    %p438 = scmp.eq.s32.totalorder %s30, 0
    %p439 = por %p437, %p438
    %p440 = scmp.ne.s32.totalorder %s428, %s429
    %p441 = scmp.eq.s32.totalorder %s31, 1
    %p442 = por %p440, %p441
    %p444 = scmp.ne.s32.totalorder %s429, %s443
    %p445 = scmp.eq.s32.totalorder %s31, 0
    %p446 = por %p444, %p445
    %s447 = ssub.s32 %s25, %s32
    %p448 = scmp.eq.s32.totalorder %s447, 0
    %s450 = sadd.s32 %s449, 1
    %s451 = scalar_select %p448, %s449, %s450
    %p454 = pneg %p448
    %p455 = scmp.eq.s32.totalorder %s25, 1
    %p456 = por %p454, %p455
    %p457 = scmp.ne.s32.totalorder %s449, %s452
    %p458 = scmp.eq.s32.totalorder %s25, 0
    %p459 = por %p457, %p458
    %p460 = scmp.ne.s32.totalorder %s449, %s452
    %p461 = scmp.eq.s32.totalorder %s30, 1
    %p462 = por %p460, %p461
    %p463 = scmp.ne.s32.totalorder %s452, %s453
    %p464 = scmp.eq.s32.totalorder %s30, 0
    %p465 = por %p463, %p464
    %p466 = scmp.ne.s32.totalorder %s452, %s453
    %p467 = scmp.eq.s32.totalorder %s31, 1
    %p468 = por %p466, %p467
    %p470 = scmp.ne.s32.totalorder %s453, %s469
    %p471 = scmp.eq.s32.totalorder %s31, 0
    %p472 = por %p470, %p471
    %p473 = scmp.le.s32.totalorder 1, %s25
    %p474 = scmp.lt.s32.totalorder %s25, 3
    %p475 = pnand %p473, %p474
    %p476 = pneg %p475
    // Predicated region
    $region9: #{modelp_forward_fused.1} parent=5 // pred_check
      _
    $region10: #{modelp_forward_fused.1} parent=5 // pred_check_branch
      %478 = sbr.rel (%p475) target = $region12
    $region11: #{modelp_forward_fused.1} parent=5 // pred_region
      %s479 = ssub.s32 %s25, 1
      // Predicated region
      $region13: #{modelp_forward_fused.1} parent=11 // pred_check
        %p480 = pneg %p124
      $region14: #{modelp_forward_fused.1} parent=11 // pred_check_branch
        %482 = sbr.rel (%p480) target = $region16
      $region15: #{modelp_forward_fused.1} parent=11 // pred_region
        _
      $region16: #{modelp_forward_fused.1} parent=11 // pred_fallthru
        _
      // Predicated region
      $region17: #{modelp_forward_fused.1} parent=11 // pred_check
        %p483 = pneg %p145
      $region18: #{modelp_forward_fused.1} parent=11 // pred_check_branch
        %485 = sbr.rel (%p483) target = $region20
      $region19: #{modelp_forward_fused.1} parent=11 // pred_region
        _
      $region20: #{modelp_forward_fused.1} parent=11 // pred_fallthru
        _
      // Predicated region
      $region21: #{modelp_forward_fused.1} parent=11 // pred_check
        %p486 = pneg %p166
      $region22: #{modelp_forward_fused.1} parent=11 // pred_check_branch
        %488 = sbr.rel (%p486) target = $region24
      $region23: #{modelp_forward_fused.1} parent=11 // pred_region
        _
      $region24: #{modelp_forward_fused.1} parent=11 // pred_fallthru
        _
      // Predicated region
      $region25: #{modelp_forward_fused.1} parent=11 // pred_check
        %p489 = pneg %p187
      $region26: #{modelp_forward_fused.1} parent=11 // pred_check_branch
        %491 = sbr.rel (%p489) target = $region28
      $region27: #{modelp_forward_fused.1} parent=11 // pred_region
        _
      $region28: #{modelp_forward_fused.1} parent=11 // pred_fallthru
        _
      // Predicated region
      $region29: #{modelp_forward_fused.1} parent=11 // pred_check
        %p492 = pneg %p208
      $region30: #{modelp_forward_fused.1} parent=11 // pred_check_branch
        %494 = sbr.rel (%p492) target = $region32
      $region31: #{modelp_forward_fused.1} parent=11 // pred_region
        _
      $region32: #{modelp_forward_fused.1} parent=11 // pred_fallthru
        _
      // Predicated region
      $region33: #{modelp_forward_fused.1} parent=11 // pred_check
        %p495 = pneg %p229
      $region34: #{modelp_forward_fused.1} parent=11 // pred_check_branch
        %497 = sbr.rel (%p495) target = $region36
      $region35: #{modelp_forward_fused.1} parent=11 // pred_region
        _
      $region36: #{modelp_forward_fused.1} parent=11 // pred_fallthru
        _
      // Predicated region
      $region37: #{modelp_forward_fused.1} parent=11 // pred_check
        %p498 = pneg %p250
      $region38: #{modelp_forward_fused.1} parent=11 // pred_check_branch
        %500 = sbr.rel (%p498) target = $region40
      $region39: #{modelp_forward_fused.1} parent=11 // pred_region
        _
      $region40: #{modelp_forward_fused.1} parent=11 // pred_fallthru
        _
      // Predicated region
      $region41: #{modelp_forward_fused.1} parent=11 // pred_check
        %p501 = pneg %p271
      $region42: #{modelp_forward_fused.1} parent=11 // pred_check_branch
        %503 = sbr.rel (%p501) target = $region44
      $region43: #{modelp_forward_fused.1} parent=11 // pred_region
        _
      $region44: #{modelp_forward_fused.1} parent=11 // pred_fallthru
        _
      // Predicated region
      $region45: #{modelp_forward_fused.1} parent=11 // pred_check
        %p504 = pneg %p292
      $region46: #{modelp_forward_fused.1} parent=11 // pred_check_branch
        %506 = sbr.rel (%p504) target = $region48
      $region47: #{modelp_forward_fused.1} parent=11 // pred_region
        _
      $region48: #{modelp_forward_fused.1} parent=11 // pred_fallthru
        _
      // Predicated region
      $region49: #{modelp_forward_fused.1} parent=11 // pred_check
        %p507 = pneg %p313
      $region50: #{modelp_forward_fused.1} parent=11 // pred_check_branch
        %509 = sbr.rel (%p507) target = $region52
      $region51: #{modelp_forward_fused.1} parent=11 // pred_region
        _
      $region52: #{modelp_forward_fused.1} parent=11 // pred_fallthru
        _
      // Predicated region
      $region53: #{modelp_forward_fused.1} parent=11 // pred_check
        %p510 = pneg %p334
      $region54: #{modelp_forward_fused.1} parent=11 // pred_check_branch
        %512 = sbr.rel (%p510) target = $region56
      $region55: #{modelp_forward_fused.1} parent=11 // pred_region
        _
      $region56: #{modelp_forward_fused.1} parent=11 // pred_fallthru
        _
      // Predicated region
      $region57: #{modelp_forward_fused.1} parent=11 // pred_check
        %p513 = pneg %p355
      $region58: #{modelp_forward_fused.1} parent=11 // pred_check_branch
        %515 = sbr.rel (%p513) target = $region60
      $region59: #{modelp_forward_fused.1} parent=11 // pred_region
        _
      $region60: #{modelp_forward_fused.1} parent=11 // pred_fallthru
        _
      // Predicated region
      $region61: #{modelp_forward_fused.1} parent=11 // pred_check
        %p516 = pneg %p376
      $region62: #{modelp_forward_fused.1} parent=11 // pred_check_branch
        %518 = sbr.rel (%p516) target = $region64
      $region63: #{modelp_forward_fused.1} parent=11 // pred_region
        _
      $region64: #{modelp_forward_fused.1} parent=11 // pred_fallthru
        _
      // Predicated region
      $region65: #{modelp_forward_fused.1} parent=11 // pred_check
        %p519 = pneg %p397
      $region66: #{modelp_forward_fused.1} parent=11 // pred_check_branch
        %521 = sbr.rel (%p519) target = $region68
      $region67: #{modelp_forward_fused.1} parent=11 // pred_region
        _
      $region68: #{modelp_forward_fused.1} parent=11 // pred_fallthru
        _
      // Predicated region
      $region69: #{modelp_forward_fused.1} parent=11 // pred_check
        %p522 = pneg %p418
      $region70: #{modelp_forward_fused.1} parent=11 // pred_check_branch
        %524 = sbr.rel (%p522) target = $region72
      $region71: #{modelp_forward_fused.1} parent=11 // pred_region
        _
      $region72: #{modelp_forward_fused.1} parent=11 // pred_fallthru
        _
      // Predicated region
      $region73: #{modelp_forward_fused.1} parent=11 // pred_check
        %p525 = pneg %p439
      $region74: #{modelp_forward_fused.1} parent=11 // pred_check_branch
        %527 = sbr.rel (%p525) target = $region76
      $region75: #{modelp_forward_fused.1} parent=11 // pred_region
        _
      $region76: #{modelp_forward_fused.1} parent=11 // pred_fallthru
        _
    $region12: #{modelp_forward_fused.1} parent=5 // pred_fallthru
      _
    %p528 = scmp.lt.s32.totalorder %s25, 2
    // Predicated region
    $region77: #{modelp_forward_fused.1} parent=5 // pred_check
      %p529 = pneg %p528
    $region78: #{modelp_forward_fused.1} parent=5 // pred_check_branch
      %531 = sbr.rel (%p529) target = $region80
    $region79: #{modelp_forward_fused.1} parent=5 // pred_region
      // Predicated region
      $region81: #{modelp_forward_fused.1} parent=79 // pred_check
        %p532 = pneg %p45
      $region82: #{modelp_forward_fused.1} parent=79 // pred_check_branch
        %534 = sbr.rel (%p532) target = $region84
      $region83: #{modelp_forward_fused.1} parent=79 // pred_region
        %p535 = scmp.lt.s32.totalorder %s25, 1
        %s536 = scalar_select %p535, %s25, 1
        %s537 = smul.addr %s536, 16
        %s538 = smul.addr %s537, 4
        %s539 = scalar_lea.vmem %s0, %s538
      $region84: #{modelp_forward_fused.1} parent=79 // pred_fallthru
        _
      // Predicated region
      $region85: #{modelp_forward_fused.1} parent=79 // pred_check
        %p540 = pneg %p71
      $region86: #{modelp_forward_fused.1} parent=79 // pred_check_branch
        %542 = sbr.rel (%p540) target = $region88
      $region87: #{modelp_forward_fused.1} parent=79 // pred_region
        %p543 = scmp.lt.s32.totalorder %s25, 1
        %s544 = scalar_select %p543, %s25, 1
        %s545 = smul.addr %s544, 16
        %s546 = smul.addr %s545, 4
        %s547 = scalar_lea.vmem %s1, %s546
      $region88: #{modelp_forward_fused.1} parent=79 // pred_fallthru
        _
      // Predicated region
      $region89: #{modelp_forward_fused.1} parent=79 // pred_check
        %p548 = pneg %p97
      $region90: #{modelp_forward_fused.1} parent=79 // pred_check_branch
        %550 = sbr.rel (%p548) target = $region92
      $region91: #{modelp_forward_fused.1} parent=79 // pred_region
        %p551 = scmp.lt.s32.totalorder %s25, 1
        %s552 = scalar_select %p551, %s25, 1
        %s553 = smul.addr %s552, 8
        %s554 = smul.addr %s553, 4
        %s555 = scalar_lea.vmem %s2, %s554
      $region92: #{modelp_forward_fused.1} parent=79 // pred_fallthru
        _
    $region80: #{modelp_forward_fused.1} parent=5 // pred_fallthru
      _
    %p556 = scmp.le.s32.totalorder 1, %s25
    %p557 = scmp.lt.s32.totalorder %s25, 3
    %p558 = pnand %p556, %p557
    %p559 = pneg %p558
    // Predicated region
    $region93: #{modelp_forward_fused.1} parent=5 // pred_check
      _
    $region94: #{modelp_forward_fused.1} parent=5 // pred_check_branch
      %561 = sbr.rel (%p558) target = $region96
    $region95: #{modelp_forward_fused.1} parent=5 // pred_region
      %s562 = ssub.s32 %s25, 1
      %p563 = scmp.lt.s32.totalorder %s30, 1
      %s564 = scalar_select %p563, %s30, 1
      %s565 = smul.addr %s564, 16
      %s566 = smul.addr %s565, 4
      %s567 = scalar_lea.vmem %s0, %s566
      %p568 = pneg %p51
      %p569 = pneg %p48
      %p570 = scmp.lt.s32.totalorder %s30, 1
      %s571 = scalar_select %p570, %s30, 1
      %s572 = smul.addr %s571, 16
      %s573 = smul.addr %s572, 4
      %s574 = scalar_lea.vmem %s1, %s573
      %p575 = pneg %p77
      %p576 = pneg %p74
      %p577 = scmp.lt.s32.totalorder %s30, 1
      %s578 = scalar_select %p577, %s30, 1
      %s579 = smul.addr %s578, 8
      %s580 = smul.addr %s579, 4
      %s581 = scalar_lea.vmem %s2, %s580
      %p582 = pneg %p103
      %p583 = pneg %p100
      %p584 = pneg %p124
      %p585 = pneg %p121
      %p586 = pneg %p145
      %p587 = pneg %p142
      %p588 = pneg %p166
      %p589 = pneg %p163
      %p590 = pneg %p187
      %p591 = pneg %p184
      %p592 = pneg %p208
      %p593 = pneg %p205
      %p594 = pneg %p229
      %p595 = pneg %p226
      %p596 = pneg %p250
      %p597 = pneg %p247
      %p598 = pneg %p271
      %p599 = pneg %p268
      %p600 = pneg %p292
      %p601 = pneg %p289
      %p602 = pneg %p313
      %p603 = pneg %p310
      %p604 = pneg %p334
      %p605 = pneg %p331
      %p606 = pneg %p355
      %p607 = pneg %p352
      %p608 = pneg %p376
      %p609 = pneg %p373
      %p610 = pneg %p397
      %p611 = pneg %p394
      %p612 = pneg %p418
      %p613 = pneg %p415
      %p614 = pneg %p439
      %p615 = pneg %p436
      %p616 = pneg %p465
      %p617 = pneg %p462
      %p618 = scmp.lt.s32.totalorder %s30, 1
      %s619 = scalar_select %p618, %s30, 1
      %s620 = smul.addr %s619, 64
      %s621 = smul.addr %s620, 8
      %s622 = scalar_lea.vmem %s19, %s621
      %p623 = scmp.lt.s32.totalorder %s30, 1
      %s624 = scalar_select %p623, %s30, 1
      %s625 = smul.addr %s624, 16
      %s626 = smul.addr %s625, 4
      %s627 = scalar_lea.vmem %s0, %s626
      %p628 = scmp.lt.s32.totalorder %s30, 1
      %s629 = scalar_select %p628, %s30, 1
      %s630 = smul.addr %s629, 16
      %s631 = smul.addr %s630, 4
      %s632 = scalar_lea.vmem %s1, %s631
      %p633 = scmp.lt.s32.totalorder %s30, 1
      %s634 = scalar_select %p633, %s30, 1
      %s635 = smul.addr %s634, 8
      %s636 = smul.addr %s635, 4
      %s637 = scalar_lea.vmem %s2, %s636
      %p638 = scmp.lt.s32.totalorder %s30, 1
      %s639 = scalar_select %p638, %s30, 1
      %s640 = smul.addr %s639, 64
      %s641 = smul.addr %s640, 8
      %s642 = scalar_lea.vmem %s19, %s641
      %v644 = vld [vmem:[%s627] sm:$0xf]
      %v645 = vld [vmem:[%s627 + $0x4] sm:$0xf]
      %v646 = vld [vmem:[%s627 + $0x8] sm:$0xf]
      %v647 = vld [vmem:[%s627 + $0xc] sm:$0xf]
      %v648 = vld [vmem:[%s627 + $0x10] sm:$0xf]
      %v649 = vld [vmem:[%s627 + $0x14] sm:$0xf]
      %v650 = vld [vmem:[%s627 + $0x18] sm:$0xf]
      %v651 = vld [vmem:[%s627 + $0x1c] sm:$0xf]
      %v652 = vld [vmem:[%s627 + $0x20] sm:$0xf]
      %v653 = vld [vmem:[%s627 + $0x24] sm:$0xf]
      %v654 = vld [vmem:[%s627 + $0x28] sm:$0xf]
      %v655 = vld [vmem:[%s627 + $0x2c] sm:$0xf]
      %v656 = vld [vmem:[%s627 + $0x30] sm:$0xf]
      %v657 = vld [vmem:[%s627 + $0x34] sm:$0xf]
      %v658 = vld [vmem:[%s627 + $0x38] sm:$0xf]
      %v659 = vld [vmem:[%s627 + $0x3c] sm:$0xf]
      %v660 = vld [vmem:[%s632] sm:$0xf]
      %v661 = vld [vmem:[%s632 + $0x4] sm:$0xf]
      %v662 = vld [vmem:[%s632 + $0x8] sm:$0xf]
      %v663 = vld [vmem:[%s632 + $0xc] sm:$0xf]
      %v664 = vld [vmem:[%s632 + $0x10] sm:$0xf]
      %v665 = vld [vmem:[%s632 + $0x14] sm:$0xf]
      %v666 = vld [vmem:[%s632 + $0x18] sm:$0xf]
      %v667 = vld [vmem:[%s632 + $0x1c] sm:$0xf]
      %v668 = vld [vmem:[%s632 + $0x20] sm:$0xf]
      %v669 = vld [vmem:[%s632 + $0x24] sm:$0xf]
      %v670 = vld [vmem:[%s632 + $0x28] sm:$0xf]
      %v671 = vld [vmem:[%s632 + $0x2c] sm:$0xf]
      %v672 = vld [vmem:[%s632 + $0x30] sm:$0xf]
      %v673 = vld [vmem:[%s632 + $0x34] sm:$0xf]
      %v674 = vld [vmem:[%s632 + $0x38] sm:$0xf]
      %v675 = vld [vmem:[%s632 + $0x3c] sm:$0xf]
      %v676 = vld [vmem:[%s637] sm:$0xf]
      %v677 = vld [vmem:[%s637 + $0x4] sm:$0xf]
      %v678 = vld [vmem:[%s637 + $0x8] sm:$0xf]
      %v679 = vld [vmem:[%s637 + $0xc] sm:$0xf]
      %v680 = vld [vmem:[%s637 + $0x10] sm:$0xf]
      %v681 = vld [vmem:[%s637 + $0x14] sm:$0xf]
      %v682 = vld [vmem:[%s637 + $0x18] sm:$0xf]
      %v683 = vld [vmem:[%s637 + $0x1c] sm:$0xf]
      %v684 = vld [vmem:[%s3] sm:$0xf]
      %v685 = vld [vmem:[%s3 + $0x4] sm:$0xf]
      %v686 = vld [vmem:[%s3 + $0x8] sm:$0xf]
      %v687 = vld [vmem:[%s3 + $0xc] sm:$0xf]
      %v688 = vld [vmem:[%s3 + $0x10] sm:$0xf]
      %v689 = vld [vmem:[%s3 + $0x14] sm:$0xf]
      %v690 = vld [vmem:[%s3 + $0x18] sm:$0xf]
      %v691 = vld [vmem:[%s3 + $0x1c] sm:$0xf]
      %v692 = vld [vmem:[%s3 + $0x20] sm:$0xf]
      %v693 = vld [vmem:[%s3 + $0x24] sm:$0xf]
      %v694 = vld [vmem:[%s3 + $0x28] sm:$0xf]
      %v695 = vld [vmem:[%s3 + $0x2c] sm:$0xf]
      %v696 = vld [vmem:[%s3 + $0x30] sm:$0xf]
      %v697 = vld [vmem:[%s3 + $0x34] sm:$0xf]
      %v698 = vld [vmem:[%s3 + $0x38] sm:$0xf]
      %v699 = vld [vmem:[%s3 + $0x3c] sm:$0xf]
      %v700 = vld [vmem:[%s4] sm:$0x1]
      %v702 = vlaneseq
      %v703 = vshrl.u32 %v702, 7
      %v704 = vsub.s32 0, %v703
      %v705 = vrot.slane %v700, %v704
      %v723 = vunpack.c.l.b16 %v644
      %v724 = vunpack.c.l.b16 %v645
      %v725 = vunpack.c.l.b16 %v646
      %v726 = vunpack.c.l.b16 %v647
      %v727 = vunpack.c.l.b16 %v648
      %v728 = vunpack.c.l.b16 %v649
      %v729 = vunpack.c.l.b16 %v650
      %v730 = vunpack.c.l.b16 %v651
      %v731 = vunpack.c.l.b16 %v652
      %v732 = vunpack.c.l.b16 %v653
      %v733 = vunpack.c.l.b16 %v654
      %v734 = vunpack.c.l.b16 %v655
      %v735 = vunpack.c.l.b16 %v656
      %v736 = vunpack.c.l.b16 %v657
      %v737 = vunpack.c.l.b16 %v658
      %v738 = vunpack.c.l.b16 %v659
      %v739 = vpack.c.b16 %v724, %v723
      %v740 = vpack.c.b16 %v726, %v725
      %v741 = vpack.c.b16 %v728, %v727
      %v742 = vpack.c.b16 %v730, %v729
      %v743 = vpack.c.b16 %v732, %v731
      %v744 = vpack.c.b16 %v734, %v733
      %v745 = vpack.c.b16 %v736, %v735
      %v746 = vpack.c.b16 %v738, %v737
      %v771 = vunpack.c.l.b16 %v684
      %v772 = vunpack.c.l.b16 %v685
      %v773 = vunpack.c.l.b16 %v686
      %v774 = vunpack.c.l.b16 %v687
      %v775 = vunpack.c.l.b16 %v688
      %v776 = vunpack.c.l.b16 %v689
      %v777 = vunpack.c.l.b16 %v690
      %v778 = vunpack.c.l.b16 %v691
      %v779 = vunpack.c.l.b16 %v692
      %v780 = vunpack.c.l.b16 %v693
      %v781 = vunpack.c.l.b16 %v694
      %v782 = vunpack.c.l.b16 %v695
      %v783 = vunpack.c.l.b16 %v696
      %v784 = vunpack.c.l.b16 %v697
      %v785 = vunpack.c.l.b16 %v698
      %v786 = vunpack.c.l.b16 %v699
      %v787 = vpack.c.b16 %v772, %v771
      %v788 = vpack.c.b16 %v774, %v773
      %v789 = vpack.c.b16 %v776, %v775
      %v790 = vpack.c.b16 %v778, %v777
      %v791 = vpack.c.b16 %v780, %v779
      %v792 = vpack.c.b16 %v782, %v781
      %v793 = vpack.c.b16 %v784, %v783
      %v794 = vpack.c.b16 %v786, %v785
      %803 = vmatprep.subr.bf16.mxu0 0
      %804 = vmatpush1.bf16.msra.mxu0 %v794
      %805 = vmatprep.subr.bf16.mxu0 0
      %806 = vmatpush1.bf16.msra.mxu0 %v793
      %807 = vmatprep.subr.bf16.mxu0 0
      %808 = vmatpush1.bf16.msra.mxu0 %v792
      %809 = vmatprep.subr.bf16.mxu0 0
      %810 = vmatpush1.bf16.msra.mxu0 %v791
      %811 = vmatprep.subr.bf16.mxu0 0
      %812 = vmatpush1.bf16.msra.mxu0 %v790
      %813 = vmatprep.subr.bf16.mxu0 0
      %814 = vmatpush1.bf16.msra.mxu0 %v789
      %815 = vmatprep.subr.bf16.mxu0 0
      %816 = vmatpush1.bf16.msra.mxu0 %v788
      %817 = vmatprep.subr.bf16.mxu0 0
      %818 = vmatpush1.bf16.msra.mxu0 %v787
      %819 = vmatprep.subr.bf16.mxu0 0
      %820 = vmatpush2.bf16.msra.mxu0 0
      %821 = vmatprep.subr.bf16.mxu0 0
      %822 = vmatpush2.bf16.msra.mxu0 0
      %823 = vmatprep.subr.bf16.mxu0 0
      %824 = vmatpush2.bf16.msra.mxu0 0
      %825 = vmatprep.subr.bf16.mxu0 0
      %826 = vmatpush2.bf16.msra.mxu0 0
      %827 = vmatprep.subr.bf16.mxu0 0
      %828 = vmatpush2.bf16.msra.mxu0 0
      %829 = vmatprep.subr.bf16.mxu0 0
      %830 = vmatpush2.bf16.msra.mxu0 0
      %831 = vmatprep.subr.bf16.mxu0 0
      %832 = vmatpush2.bf16.msra.mxu0 0
      %833 = vmatprep.subr.bf16.mxu0 0
      %834 = vmatpush2.bf16.msra.mxu0 0
      %835 = vmatprep.mubr.bf16.mxu0 0
      %836 = vmatmul.mubr.bf16.gmra.mxu0 %v739
      %v837 = vpop.f32.mrf.mxu0
      %v838 = vadd.f32 %v705, %v837
      %v839 = vpop.f32.mrf.mxu0
      %v840 = vpop.f32.mrf.mxu0
      %v841 = vadd.f32 %v705, %v840
      %v842 = vpop.f32.mrf.mxu0
      %843 = vmatprep.mubr.bf16.mxu0 0
      %844 = vmatmul.mubr.bf16.gmra.mxu0 %v740
      %v845 = vpop.f32.mrf.mxu0
      %v846 = vadd.f32 %v705, %v845
      %v847 = vpop.f32.mrf.mxu0
      %v848 = vpop.f32.mrf.mxu0
      %v849 = vadd.f32 %v705, %v848
      %v850 = vpop.f32.mrf.mxu0
      %851 = vmatprep.mubr.bf16.mxu0 0
      %852 = vmatmul.mubr.bf16.gmra.mxu0 %v741
      %v853 = vpop.f32.mrf.mxu0
      %v854 = vadd.f32 %v705, %v853
      %v855 = vpop.f32.mrf.mxu0
      %v856 = vpop.f32.mrf.mxu0
      %v857 = vadd.f32 %v705, %v856
      %v858 = vpop.f32.mrf.mxu0
      %859 = vmatprep.mubr.bf16.mxu0 0
      %860 = vmatmul.mubr.bf16.gmra.mxu0 %v742
      %v861 = vpop.f32.mrf.mxu0
      %v862 = vadd.f32 %v705, %v861
      %v863 = vpop.f32.mrf.mxu0
      %v864 = vpop.f32.mrf.mxu0
      %v865 = vadd.f32 %v705, %v864
      %v866 = vpop.f32.mrf.mxu0
      %867 = vmatprep.mubr.bf16.mxu0 0
      %868 = vmatmul.mubr.bf16.gmra.mxu0 %v743
      %v869 = vpop.f32.mrf.mxu0
      %v870 = vadd.f32 %v705, %v869
      %v871 = vpop.f32.mrf.mxu0
      %v872 = vpop.f32.mrf.mxu0
      %v873 = vadd.f32 %v705, %v872
      %v874 = vpop.f32.mrf.mxu0
      %875 = vmatprep.mubr.bf16.mxu0 0
      %876 = vmatmul.mubr.bf16.gmra.mxu0 %v744
      %v877 = vpop.f32.mrf.mxu0
      %v878 = vadd.f32 %v705, %v877
      %v879 = vpop.f32.mrf.mxu0
      %v880 = vpop.f32.mrf.mxu0
      %v881 = vadd.f32 %v705, %v880
      %v882 = vpop.f32.mrf.mxu0
      %883 = vmatprep.mubr.bf16.mxu0 0
      %884 = vmatmul.mubr.bf16.gmra.mxu0 %v745
      %v885 = vpop.f32.mrf.mxu0
      %v886 = vadd.f32 %v705, %v885
      %v887 = vpop.f32.mrf.mxu0
      %v888 = vpop.f32.mrf.mxu0
      %v889 = vadd.f32 %v705, %v888
      %v890 = vpop.f32.mrf.mxu0
      %891 = vmatprep.mubr.bf16.mxu0 0
      %892 = vmatmul.mubr.bf16.gmra.mxu0 %v746
      %v893 = vpop.f32.mrf.mxu0
      %v894 = vadd.f32 %v705, %v893
      %v895 = vpop.f32.mrf.mxu0
      %v896 = vpop.f32.mrf.mxu0
      %v897 = vadd.f32 %v705, %v896
      %v898 = vpop.f32.mrf.mxu0
      %899 = vdwg.mxu0
      %v900 = vpack.c.bf16 %v841, %v838
      %v901 = vpack.c.bf16 %v849, %v846
      %v902 = vpack.c.bf16 %v857, %v854
      %v903 = vpack.c.bf16 %v865, %v862
      %v904 = vpack.c.bf16 %v873, %v870
      %v905 = vpack.c.bf16 %v881, %v878
      %v906 = vpack.c.bf16 %v889, %v886
      %v907 = vpack.c.bf16 %v897, %v894
      %v916 = vunpack.c.l.b16 %v676
      %v917 = vunpack.c.l.b16 %v677
      %v918 = vunpack.c.l.b16 %v678
      %v919 = vunpack.c.l.b16 %v679
      %v920 = vunpack.c.l.b16 %v680
      %v921 = vunpack.c.l.b16 %v681
      %v922 = vunpack.c.l.b16 %v682
      %v923 = vunpack.c.l.b16 %v683
      %v924 = vpack.c.b16 %v917, %v916
      %v925 = vpack.c.b16 %v919, %v918
      %v926 = vpack.c.b16 %v921, %v920
      %v927 = vpack.c.b16 %v923, %v922
      %932 = vmatprep.subr.bf16.mxu0 0
      %933 = vmatpush1.bf16.msra.mxu0 %v907
      %934 = vmatprep.subr.bf16.mxu0 0
      %935 = vmatpush1.bf16.msra.mxu0 %v906
      %936 = vmatprep.subr.bf16.mxu0 0
      %937 = vmatpush1.bf16.msra.mxu0 %v905
      %938 = vmatprep.subr.bf16.mxu0 0
      %939 = vmatpush1.bf16.msra.mxu0 %v904
      %940 = vmatprep.subr.bf16.mxu0 0
      %941 = vmatpush1.bf16.msra.mxu0 %v903
      %942 = vmatprep.subr.bf16.mxu0 0
      %943 = vmatpush1.bf16.msra.mxu0 %v902
      %944 = vmatprep.subr.bf16.mxu0 0
      %945 = vmatpush1.bf16.msra.mxu0 %v901
      %946 = vmatprep.subr.bf16.mxu0 0
      %947 = vmatpush1.bf16.msra.mxu0 %v900
      %948 = vmatprep.subr.bf16.mxu0 0
      %949 = vmatpush2.bf16.msra.mxu0 0
      %950 = vmatprep.subr.bf16.mxu0 0
      %951 = vmatpush2.bf16.msra.mxu0 0
      %952 = vmatprep.subr.bf16.mxu0 0
      %953 = vmatpush2.bf16.msra.mxu0 0
      %954 = vmatprep.subr.bf16.mxu0 0
      %955 = vmatpush2.bf16.msra.mxu0 0
      %956 = vmatprep.subr.bf16.mxu0 0
      %957 = vmatpush2.bf16.msra.mxu0 0
      %958 = vmatprep.subr.bf16.mxu0 0
      %959 = vmatpush2.bf16.msra.mxu0 0
      %960 = vmatprep.subr.bf16.mxu0 0
      %961 = vmatpush2.bf16.msra.mxu0 0
      %962 = vmatprep.subr.bf16.mxu0 0
      %963 = vmatpush2.bf16.msra.mxu0 0
      %964 = vmatprep.mubr.bf16.mxu0 0
      %965 = vmatmul.mubr.bf16.gmra.mxu0 %v924
      %v966 = vpop.f32.mrf.mxu0
      %v967 = vadd.f32 0.0, %v966
      %v968 = vpop.f32.mrf.mxu0
      %v969 = vpop.f32.mrf.mxu0
      %v970 = vadd.f32 0.0, %v969
      %v971 = vpop.f32.mrf.mxu0
      %972 = vmatprep.mubr.bf16.mxu0 0
      %973 = vmatmul.mubr.bf16.gmra.mxu0 %v925
      %v974 = vpop.f32.mrf.mxu0
      %v975 = vadd.f32 0.0, %v974
      %v976 = vpop.f32.mrf.mxu0
      %v977 = vpop.f32.mrf.mxu0
      %v978 = vadd.f32 0.0, %v977
      %v979 = vpop.f32.mrf.mxu0
      %980 = vmatprep.mubr.bf16.mxu0 0
      %981 = vmatmul.mubr.bf16.gmra.mxu0 %v926
      %v982 = vpop.f32.mrf.mxu0
      %v983 = vadd.f32 0.0, %v982
      %v984 = vpop.f32.mrf.mxu0
      %v985 = vpop.f32.mrf.mxu0
      %v986 = vadd.f32 0.0, %v985
      %v987 = vpop.f32.mrf.mxu0
      %988 = vmatprep.mubr.bf16.mxu0 0
      %989 = vmatmul.mubr.bf16.gmra.mxu0 %v927
      %v990 = vpop.f32.mrf.mxu0
      %v991 = vadd.f32 0.0, %v990
      %v992 = vpop.f32.mrf.mxu0
      %v993 = vpop.f32.mrf.mxu0
      %v994 = vadd.f32 0.0, %v993
      %v995 = vpop.f32.mrf.mxu0
      %996 = vdwg.mxu0
      %v997 = vpack.c.bf16 %v970, %v967
      %v998 = vpack.c.bf16 %v978, %v975
      %v999 = vpack.c.bf16 %v986, %v983
      %v1000 = vpack.c.bf16 %v994, %v991
      %v1017 = vunpack.c.l.b16 %v660
      %v1018 = vunpack.c.l.b16 %v661
      %v1019 = vunpack.c.l.b16 %v662
      %v1020 = vunpack.c.l.b16 %v663
      %v1021 = vunpack.c.l.b16 %v664
      %v1022 = vunpack.c.l.b16 %v665
      %v1023 = vunpack.c.l.b16 %v666
      %v1024 = vunpack.c.l.b16 %v667
      %v1025 = vunpack.c.l.b16 %v668
      %v1026 = vunpack.c.l.b16 %v669
      %v1027 = vunpack.c.l.b16 %v670
      %v1028 = vunpack.c.l.b16 %v671
      %v1029 = vunpack.c.l.b16 %v672
      %v1030 = vunpack.c.l.b16 %v673
      %v1031 = vunpack.c.l.b16 %v674
      %v1032 = vunpack.c.l.b16 %v675
      %v1033 = vpack.c.b16 %v1018, %v1017
      %v1034 = vpack.c.b16 %v1020, %v1019
      %v1035 = vpack.c.b16 %v1022, %v1021
      %v1036 = vpack.c.b16 %v1024, %v1023
      %v1037 = vpack.c.b16 %v1026, %v1025
      %v1038 = vpack.c.b16 %v1028, %v1027
      %v1039 = vpack.c.b16 %v1030, %v1029
      %v1040 = vpack.c.b16 %v1032, %v1031
      %vm1041 = vcmask 523264
      %v1043 = vsel %vm1041, %v1033, 0
      %v1046 = vsel %vm1041, %v1034, 0
      %v1049 = vsel %vm1041, %v1035, 0
      %v1052 = vsel %vm1041, %v1036, 0
      %v1055 = vsel %vm1041, %v1037, 0
      %v1058 = vsel %vm1041, %v1038, 0
      %v1061 = vsel %vm1041, %v1039, 0
      %v1064 = vsel %vm1041, %v1040, 0
      %1066 = vmatprep.subr.bf16.mxu0 0
      %1067 = vmatpush1.bf16.msra.mxu0 0
      %1068 = vmatprep.subr.bf16.mxu0 0
      %1069 = vmatpush1.bf16.msra.mxu0 0
      %1070 = vmatprep.subr.bf16.mxu0 0
      %1071 = vmatpush1.bf16.msra.mxu0 0
      %1072 = vmatprep.subr.bf16.mxu0 0
      %1073 = vmatpush1.bf16.msra.mxu0 0
      %1074 = vmatprep.subr.bf16.mxu0 0
      %1075 = vmatpush1.bf16.msra.mxu0 %v1000
      %1076 = vmatprep.subr.bf16.mxu0 0
      %1077 = vmatpush1.bf16.msra.mxu0 %v999
      %1078 = vmatprep.subr.bf16.mxu0 0
      %1079 = vmatpush1.bf16.msra.mxu0 %v998
      %1080 = vmatprep.subr.bf16.mxu0 0
      %1081 = vmatpush1.bf16.msra.mxu0 %v997
      %1082 = vmatprep.subr.bf16.mxu0 0
      %1083 = vmatpush2.bf16.msra.mxu0 0
      %1084 = vmatprep.subr.bf16.mxu0 0
      %1085 = vmatpush2.bf16.msra.mxu0 0
      %1086 = vmatprep.subr.bf16.mxu0 0
      %1087 = vmatpush2.bf16.msra.mxu0 0
      %1088 = vmatprep.subr.bf16.mxu0 0
      %1089 = vmatpush2.bf16.msra.mxu0 0
      %1090 = vmatprep.subr.bf16.mxu0 0
      %1091 = vmatpush2.bf16.msra.mxu0 0
      %1092 = vmatprep.subr.bf16.mxu0 0
      %1093 = vmatpush2.bf16.msra.mxu0 0
      %1094 = vmatprep.subr.bf16.mxu0 0
      %1095 = vmatpush2.bf16.msra.mxu0 0
      %1096 = vmatprep.subr.bf16.mxu0 0
      %1097 = vmatpush2.bf16.msra.mxu0 0
      %1098 = vmatprep.mubr.bf16.mxu0 0
      %1099 = vmatmul.mubr.bf16.gmra.mxu0 %v1043
      %v1100 = vpop.f32.mrf.mxu0
      %v1101 = vadd.f32 0.0, %v1100
      %v1102 = vpop.f32.mrf.mxu0
      %v1103 = vpop.f32.mrf.mxu0
      %v1104 = vadd.f32 0.0, %v1103
      %v1105 = vpop.f32.mrf.mxu0
      %1106 = vmatprep.mubr.bf16.mxu0 0
      %1107 = vmatmul.mubr.bf16.gmra.mxu0 %v1046
      %v1108 = vpop.f32.mrf.mxu0
      %v1109 = vadd.f32 0.0, %v1108
      %v1110 = vpop.f32.mrf.mxu0
      %v1111 = vpop.f32.mrf.mxu0
      %v1112 = vadd.f32 0.0, %v1111
      %v1113 = vpop.f32.mrf.mxu0
      %1114 = vmatprep.mubr.bf16.mxu0 0
      %1115 = vmatmul.mubr.bf16.gmra.mxu0 %v1049
      %v1116 = vpop.f32.mrf.mxu0
      %v1117 = vadd.f32 0.0, %v1116
      %v1118 = vpop.f32.mrf.mxu0
      %v1119 = vpop.f32.mrf.mxu0
      %v1120 = vadd.f32 0.0, %v1119
      %v1121 = vpop.f32.mrf.mxu0
      %1122 = vmatprep.mubr.bf16.mxu0 0
      %1123 = vmatmul.mubr.bf16.gmra.mxu0 %v1052
      %v1124 = vpop.f32.mrf.mxu0
      %v1125 = vadd.f32 0.0, %v1124
      %v1126 = vpop.f32.mrf.mxu0
      %v1127 = vpop.f32.mrf.mxu0
      %v1128 = vadd.f32 0.0, %v1127
      %v1129 = vpop.f32.mrf.mxu0
      %1130 = vmatprep.mubr.bf16.mxu0 0
      %1131 = vmatmul.mubr.bf16.gmra.mxu0 %v1055
      %v1132 = vpop.f32.mrf.mxu0
      %v1133 = vadd.f32 0.0, %v1132
      %v1134 = vpop.f32.mrf.mxu0
      %v1135 = vpop.f32.mrf.mxu0
      %v1136 = vadd.f32 0.0, %v1135
      %v1137 = vpop.f32.mrf.mxu0
      %1138 = vmatprep.mubr.bf16.mxu0 0
      %1139 = vmatmul.mubr.bf16.gmra.mxu0 %v1058
      %v1140 = vpop.f32.mrf.mxu0
      %v1141 = vadd.f32 0.0, %v1140
      %v1142 = vpop.f32.mrf.mxu0
      %v1143 = vpop.f32.mrf.mxu0
      %v1144 = vadd.f32 0.0, %v1143
      %v1145 = vpop.f32.mrf.mxu0
      %1146 = vmatprep.mubr.bf16.mxu0 0
      %1147 = vmatmul.mubr.bf16.gmra.mxu0 %v1061
      %v1148 = vpop.f32.mrf.mxu0
      %v1149 = vadd.f32 0.0, %v1148
      %v1150 = vpop.f32.mrf.mxu0
      %v1151 = vpop.f32.mrf.mxu0
      %v1152 = vadd.f32 0.0, %v1151
      %v1153 = vpop.f32.mrf.mxu0
      %1154 = vmatprep.mubr.bf16.mxu0 0
      %1155 = vmatmul.mubr.bf16.gmra.mxu0 %v1064
      %v1156 = vpop.f32.mrf.mxu0
      %v1157 = vadd.f32 0.0, %v1156
      %v1158 = vpop.f32.mrf.mxu0
      %v1159 = vpop.f32.mrf.mxu0
      %v1160 = vadd.f32 0.0, %v1159
      %v1161 = vpop.f32.mrf.mxu0
      %1162 = vdwg.mxu0
      %v1163 = vmax.f32 %v1101, 0.0
      %v1164 = vmax.f32 %v1104, 0.0
      %v1165 = vmax.f32 %v1109, 0.0
      %v1166 = vmax.f32 %v1112, 0.0
      %v1167 = vmax.f32 %v1117, 0.0
      %v1168 = vmax.f32 %v1120, 0.0
      %v1169 = vmax.f32 %v1125, 0.0
      %v1170 = vmax.f32 %v1128, 0.0
      %v1171 = vmax.f32 %v1133, 0.0
      %v1172 = vmax.f32 %v1136, 0.0
      %v1173 = vmax.f32 %v1141, 0.0
      %v1174 = vmax.f32 %v1144, 0.0
      %v1175 = vmax.f32 %v1149, 0.0
      %v1176 = vmax.f32 %v1152, 0.0
      %v1177 = vmax.f32 %v1157, 0.0
      %v1178 = vmax.f32 %v1160, 0.0
      %v1179 = vpack.c.bf16 %v1164, %v1163
      %v1180 = vpack.c.bf16 %v1166, %v1165
      %v1181 = vpack.c.bf16 %v1168, %v1167
      %v1182 = vpack.c.bf16 %v1170, %v1169
      %v1183 = vpack.c.bf16 %v1172, %v1171
      %v1184 = vpack.c.bf16 %v1174, %v1173
      %v1185 = vpack.c.bf16 %v1176, %v1175
      %v1186 = vpack.c.bf16 %v1178, %v1177
      %v1187 = vld [vmem:[%s5] sm:$0xff]
      %v1188 = vld [vmem:[%s5 + $0x8] sm:$0xff]
      %v1189 = vld [vmem:[%s5 + $0x10] sm:$0xff]
      %v1190 = vld [vmem:[%s5 + $0x18] sm:$0xff]
      %v1191 = vld [vmem:[%s5 + $0x20] sm:$0xff]
      %v1192 = vld [vmem:[%s5 + $0x28] sm:$0xff]
      %v1193 = vld [vmem:[%s5 + $0x30] sm:$0xff]
      %v1194 = vld [vmem:[%s5 + $0x38] sm:$0xff]
      %v1195 = vld [vmem:[%s5 + $0x40] sm:$0xff]
      %v1196 = vld [vmem:[%s5 + $0x48] sm:$0xff]
      %v1197 = vld [vmem:[%s5 + $0x50] sm:$0xff]
      %v1198 = vld [vmem:[%s5 + $0x58] sm:$0xff]
      %v1199 = vld [vmem:[%s5 + $0x60] sm:$0xff]
      %v1200 = vld [vmem:[%s5 + $0x68] sm:$0xff]
      %v1201 = vld [vmem:[%s5 + $0x70] sm:$0xff]
      %v1202 = vld [vmem:[%s5 + $0x78] sm:$0xff]
      %v1203 = vld [vmem:[%s6] sm:$0x3]
      %v1205 = vlaneseq
      %v1206 = vshrl.u32 %v1205, 7
      %v1207 = vsub.s32 0, %v1206
      %v1208 = vrot.slane %v1203, %v1207
      %v1209 = vlaneseq
      %v1210 = vshrl.u32 %v1209, 7
      %v1211 = vsub.s32 1, %v1210
      %v1212 = vrot.slane %v1203, %v1211
      %v1231 = vunpack.c.l.b16 %v1187
      %v1232 = vunpack.c.h.b16 %v1187
      %v1233 = vunpack.c.l.b16 %v1188
      %v1234 = vunpack.c.h.b16 %v1188
      %v1235 = vunpack.c.l.b16 %v1189
      %v1236 = vunpack.c.h.b16 %v1189
      %v1237 = vunpack.c.l.b16 %v1190
      %v1238 = vunpack.c.h.b16 %v1190
      %v1239 = vunpack.c.l.b16 %v1191
      %v1240 = vunpack.c.h.b16 %v1191
      %v1241 = vunpack.c.l.b16 %v1192
      %v1242 = vunpack.c.h.b16 %v1192
      %v1243 = vunpack.c.l.b16 %v1193
      %v1244 = vunpack.c.h.b16 %v1193
      %v1245 = vunpack.c.l.b16 %v1194
      %v1246 = vunpack.c.h.b16 %v1194
      %v1247 = vunpack.c.l.b16 %v1195
      %v1248 = vunpack.c.h.b16 %v1195
      %v1249 = vunpack.c.l.b16 %v1196
      %v1250 = vunpack.c.h.b16 %v1196
      %v1251 = vunpack.c.l.b16 %v1197
      %v1252 = vunpack.c.h.b16 %v1197
      %v1253 = vunpack.c.l.b16 %v1198
      %v1254 = vunpack.c.h.b16 %v1198
      %v1255 = vunpack.c.l.b16 %v1199
      %v1256 = vunpack.c.h.b16 %v1199
      %v1257 = vunpack.c.l.b16 %v1200
      %v1258 = vunpack.c.h.b16 %v1200
      %v1259 = vunpack.c.l.b16 %v1201
      %v1260 = vunpack.c.h.b16 %v1201
      %v1261 = vunpack.c.l.b16 %v1202
      %v1262 = vunpack.c.h.b16 %v1202
      %v1263 = vpack.c.b16 %v1233, %v1231
      %v1264 = vpack.c.b16 %v1234, %v1232
      %v1265 = vpack.c.b16 %v1237, %v1235
      %v1266 = vpack.c.b16 %v1238, %v1236
      %v1267 = vpack.c.b16 %v1241, %v1239
      %v1268 = vpack.c.b16 %v1242, %v1240
      %v1269 = vpack.c.b16 %v1245, %v1243
      %v1270 = vpack.c.b16 %v1246, %v1244
      %v1271 = vpack.c.b16 %v1249, %v1247
      %v1272 = vpack.c.b16 %v1250, %v1248
      %v1273 = vpack.c.b16 %v1253, %v1251
      %v1274 = vpack.c.b16 %v1254, %v1252
      %v1275 = vpack.c.b16 %v1257, %v1255
      %v1276 = vpack.c.b16 %v1258, %v1256
      %v1277 = vpack.c.b16 %v1261, %v1259
      %v1278 = vpack.c.b16 %v1262, %v1260
      %1295 = vmatprep.subr.bf16.mxu0 %v1278
      %1296 = vmatpush1.bf16.msra.mxu0 %v1277
      %1297 = vmatprep.subr.bf16.mxu0 %v1276
      %1298 = vmatpush1.bf16.msra.mxu0 %v1275
      %1299 = vmatprep.subr.bf16.mxu0 %v1274
      %1300 = vmatpush1.bf16.msra.mxu0 %v1273
      %1301 = vmatprep.subr.bf16.mxu0 %v1272
      %1302 = vmatpush1.bf16.msra.mxu0 %v1271
      %1303 = vmatprep.subr.bf16.mxu0 %v1270
      %1304 = vmatpush1.bf16.msra.mxu0 %v1269
      %1305 = vmatprep.subr.bf16.mxu0 %v1268
      %1306 = vmatpush1.bf16.msra.mxu0 %v1267
      %1307 = vmatprep.subr.bf16.mxu0 %v1266
      %1308 = vmatpush1.bf16.msra.mxu0 %v1265
      %1309 = vmatprep.subr.bf16.mxu0 %v1264
      %1310 = vmatpush1.bf16.msra.mxu0 %v1263
      %1311 = vmatprep.subr.bf16.mxu0 0
      %1312 = vmatpush2.bf16.msra.mxu0 0
      %1313 = vmatprep.subr.bf16.mxu0 0
      %1314 = vmatpush2.bf16.msra.mxu0 0
      %1315 = vmatprep.subr.bf16.mxu0 0
      %1316 = vmatpush2.bf16.msra.mxu0 0
      %1317 = vmatprep.subr.bf16.mxu0 0
      %1318 = vmatpush2.bf16.msra.mxu0 0
      %1319 = vmatprep.subr.bf16.mxu0 0
      %1320 = vmatpush2.bf16.msra.mxu0 0
      %1321 = vmatprep.subr.bf16.mxu0 0
      %1322 = vmatpush2.bf16.msra.mxu0 0
      %1323 = vmatprep.subr.bf16.mxu0 0
      %1324 = vmatpush2.bf16.msra.mxu0 0
      %1325 = vmatprep.subr.bf16.mxu0 0
      %1326 = vmatpush2.bf16.msra.mxu0 0
      %1327 = vmatprep.mubr.bf16.mxu0 0
      %1328 = vmatmul.mubr.bf16.gmra.mxu0 %v1179
      %v1329 = vpop.f32.mrf.mxu0
      %v1330 = vadd.f32 %v1208, %v1329
      %v1331 = vpop.f32.mrf.mxu0
      %v1332 = vadd.f32 %v1212, %v1331
      %v1333 = vpop.f32.mrf.mxu0
      %v1334 = vadd.f32 %v1208, %v1333
      %v1335 = vpop.f32.mrf.mxu0
      %v1336 = vadd.f32 %v1212, %v1335
      %1337 = vmatprep.mubr.bf16.mxu0 0
      %1338 = vmatmul.mubr.bf16.gmra.mxu0 %v1180
      %v1339 = vpop.f32.mrf.mxu0
      %v1340 = vadd.f32 %v1208, %v1339
      %v1341 = vpop.f32.mrf.mxu0
      %v1342 = vadd.f32 %v1212, %v1341
      %v1343 = vpop.f32.mrf.mxu0
      %v1344 = vadd.f32 %v1208, %v1343
      %v1345 = vpop.f32.mrf.mxu0
      %v1346 = vadd.f32 %v1212, %v1345
      %1347 = vmatprep.mubr.bf16.mxu0 0
      %1348 = vmatmul.mubr.bf16.gmra.mxu0 %v1181
      %v1349 = vpop.f32.mrf.mxu0
      %v1350 = vadd.f32 %v1208, %v1349
      %v1351 = vpop.f32.mrf.mxu0
      %v1352 = vadd.f32 %v1212, %v1351
      %v1353 = vpop.f32.mrf.mxu0
      %v1354 = vadd.f32 %v1208, %v1353
      %v1355 = vpop.f32.mrf.mxu0
      %v1356 = vadd.f32 %v1212, %v1355
      %1357 = vmatprep.mubr.bf16.mxu0 0
      %1358 = vmatmul.mubr.bf16.gmra.mxu0 %v1182
      %v1359 = vpop.f32.mrf.mxu0
      %v1360 = vadd.f32 %v1208, %v1359
      %v1361 = vpop.f32.mrf.mxu0
      %v1362 = vadd.f32 %v1212, %v1361
      %v1363 = vpop.f32.mrf.mxu0
      %v1364 = vadd.f32 %v1208, %v1363
      %v1365 = vpop.f32.mrf.mxu0
      %v1366 = vadd.f32 %v1212, %v1365
      %1367 = vmatprep.mubr.bf16.mxu0 0
      %1368 = vmatmul.mubr.bf16.gmra.mxu0 %v1183
      %v1369 = vpop.f32.mrf.mxu0
      %v1370 = vadd.f32 %v1208, %v1369
      %v1371 = vpop.f32.mrf.mxu0
      %v1372 = vadd.f32 %v1212, %v1371
      %v1373 = vpop.f32.mrf.mxu0
      %v1374 = vadd.f32 %v1208, %v1373
      %v1375 = vpop.f32.mrf.mxu0
      %v1376 = vadd.f32 %v1212, %v1375
      %1377 = vmatprep.mubr.bf16.mxu0 0
      %1378 = vmatmul.mubr.bf16.gmra.mxu0 %v1184
      %v1379 = vpop.f32.mrf.mxu0
      %v1380 = vadd.f32 %v1208, %v1379
      %v1381 = vpop.f32.mrf.mxu0
      %v1382 = vadd.f32 %v1212, %v1381
      %v1383 = vpop.f32.mrf.mxu0
      %v1384 = vadd.f32 %v1208, %v1383
      %v1385 = vpop.f32.mrf.mxu0
      %v1386 = vadd.f32 %v1212, %v1385
      %1387 = vmatprep.mubr.bf16.mxu0 0
      %1388 = vmatmul.mubr.bf16.gmra.mxu0 %v1185
      %v1389 = vpop.f32.mrf.mxu0
      %v1390 = vadd.f32 %v1208, %v1389
      %v1391 = vpop.f32.mrf.mxu0
      %v1392 = vadd.f32 %v1212, %v1391
      %v1393 = vpop.f32.mrf.mxu0
      %v1394 = vadd.f32 %v1208, %v1393
      %v1395 = vpop.f32.mrf.mxu0
      %v1396 = vadd.f32 %v1212, %v1395
      %1397 = vmatprep.mubr.bf16.mxu0 0
      %1398 = vmatmul.mubr.bf16.gmra.mxu0 %v1186
      %v1399 = vpop.f32.mrf.mxu0
      %v1400 = vadd.f32 %v1208, %v1399
      %v1401 = vpop.f32.mrf.mxu0
      %v1402 = vadd.f32 %v1212, %v1401
      %v1403 = vpop.f32.mrf.mxu0
      %v1404 = vadd.f32 %v1208, %v1403
      %v1405 = vpop.f32.mrf.mxu0
      %v1406 = vadd.f32 %v1212, %v1405
      %1407 = vdwg.mxu0
      %v1408 = vpack.c.bf16 %v1334, %v1330
      %v1409 = vpack.c.bf16 %v1344, %v1340
      %v1410 = vpack.c.bf16 %v1354, %v1350
      %v1411 = vpack.c.bf16 %v1364, %v1360
      %v1412 = vpack.c.bf16 %v1374, %v1370
      %v1413 = vpack.c.bf16 %v1384, %v1380
      %v1414 = vpack.c.bf16 %v1394, %v1390
      %v1415 = vpack.c.bf16 %v1404, %v1400
      %1416 = vmatprep.subr.bf16.mxu0 0
      %1417 = vmatpush1.bf16.msra.mxu0 %v1415
      %1418 = vmatprep.subr.bf16.mxu0 0
      %1419 = vmatpush1.bf16.msra.mxu0 %v1414
      %1420 = vmatprep.subr.bf16.mxu0 0
      %1421 = vmatpush1.bf16.msra.mxu0 %v1413
      %1422 = vmatprep.subr.bf16.mxu0 0
      %1423 = vmatpush1.bf16.msra.mxu0 %v1412
      %1424 = vmatprep.subr.bf16.mxu0 0
      %1425 = vmatpush1.bf16.msra.mxu0 %v1411
      %1426 = vmatprep.subr.bf16.mxu0 0
      %1427 = vmatpush1.bf16.msra.mxu0 %v1410
      %1428 = vmatprep.subr.bf16.mxu0 0
      %1429 = vmatpush1.bf16.msra.mxu0 %v1409
      %1430 = vmatprep.subr.bf16.mxu0 0
      %1431 = vmatpush1.bf16.msra.mxu0 %v1408
      %1432 = vmatprep.subr.bf16.mxu0 0
      %1433 = vmatpush2.bf16.msra.mxu0 0
      %1434 = vmatprep.subr.bf16.mxu0 0
      %1435 = vmatpush2.bf16.msra.mxu0 0
      %1436 = vmatprep.subr.bf16.mxu0 0
      %1437 = vmatpush2.bf16.msra.mxu0 0
      %1438 = vmatprep.subr.bf16.mxu0 0
      %1439 = vmatpush2.bf16.msra.mxu0 0
      %1440 = vmatprep.subr.bf16.mxu0 0
      %1441 = vmatpush2.bf16.msra.mxu0 0
      %1442 = vmatprep.subr.bf16.mxu0 0
      %1443 = vmatpush2.bf16.msra.mxu0 0
      %1444 = vmatprep.subr.bf16.mxu0 0
      %1445 = vmatpush2.bf16.msra.mxu0 0
      %1446 = vmatprep.subr.bf16.mxu0 0
      %1447 = vmatpush2.bf16.msra.mxu0 0
      %1448 = vmatprep.mubr.bf16.mxu0 0
      %1449 = vmatmul.mubr.bf16.gmra.mxu0 %v924
      %v1450 = vpop.f32.mrf.mxu0
      %v1451 = vadd.f32 0.0, %v1450
      %v1452 = vpop.f32.mrf.mxu0
      %v1453 = vpop.f32.mrf.mxu0
      %v1454 = vadd.f32 0.0, %v1453
      %v1455 = vpop.f32.mrf.mxu0
      %1456 = vmatprep.mubr.bf16.mxu0 0
      %1457 = vmatmul.mubr.bf16.gmra.mxu0 %v925
      %v1458 = vpop.f32.mrf.mxu0
      %v1459 = vadd.f32 0.0, %v1458
      %v1460 = vpop.f32.mrf.mxu0
      %v1461 = vpop.f32.mrf.mxu0
      %v1462 = vadd.f32 0.0, %v1461
      %v1463 = vpop.f32.mrf.mxu0
      %1464 = vmatprep.mubr.bf16.mxu0 0
      %1465 = vmatmul.mubr.bf16.gmra.mxu0 %v926
      %v1466 = vpop.f32.mrf.mxu0
      %v1467 = vadd.f32 0.0, %v1466
      %v1468 = vpop.f32.mrf.mxu0
      %v1469 = vpop.f32.mrf.mxu0
      %v1470 = vadd.f32 0.0, %v1469
      %v1471 = vpop.f32.mrf.mxu0
      %1472 = vmatprep.mubr.bf16.mxu0 0
      %1473 = vmatmul.mubr.bf16.gmra.mxu0 %v927
      %v1474 = vpop.f32.mrf.mxu0
      %v1475 = vadd.f32 0.0, %v1474
      %v1476 = vpop.f32.mrf.mxu0
      %v1477 = vpop.f32.mrf.mxu0
      %v1478 = vadd.f32 0.0, %v1477
      %v1479 = vpop.f32.mrf.mxu0
      %1480 = vdwg.mxu0
      %v1481 = vpack.c.bf16 %v1454, %v1451
      %v1482 = vpack.c.bf16 %v1462, %v1459
      %v1483 = vpack.c.bf16 %v1470, %v1467
      %v1484 = vpack.c.bf16 %v1478, %v1475
      %1485 = vmatprep.subr.bf16.mxu0 0
      %1486 = vmatpush1.bf16.msra.mxu0 0
      %1487 = vmatprep.subr.bf16.mxu0 0
      %1488 = vmatpush1.bf16.msra.mxu0 0
      %1489 = vmatprep.subr.bf16.mxu0 0
      %1490 = vmatpush1.bf16.msra.mxu0 0
      %1491 = vmatprep.subr.bf16.mxu0 0
      %1492 = vmatpush1.bf16.msra.mxu0 0
      %1493 = vmatprep.subr.bf16.mxu0 0
      %1494 = vmatpush1.bf16.msra.mxu0 %v1484
      %1495 = vmatprep.subr.bf16.mxu0 0
      %1496 = vmatpush1.bf16.msra.mxu0 %v1483
      %1497 = vmatprep.subr.bf16.mxu0 0
      %1498 = vmatpush1.bf16.msra.mxu0 %v1482
      %1499 = vmatprep.subr.bf16.mxu0 0
      %1500 = vmatpush1.bf16.msra.mxu0 %v1481
      %1501 = vmatprep.subr.bf16.mxu0 0
      %1502 = vmatpush2.bf16.msra.mxu0 0
      %1503 = vmatprep.subr.bf16.mxu0 0
      %1504 = vmatpush2.bf16.msra.mxu0 0
      %1505 = vmatprep.subr.bf16.mxu0 0
      %1506 = vmatpush2.bf16.msra.mxu0 0
      %1507 = vmatprep.subr.bf16.mxu0 0
      %1508 = vmatpush2.bf16.msra.mxu0 0
      %1509 = vmatprep.subr.bf16.mxu0 0
      %1510 = vmatpush2.bf16.msra.mxu0 0
      %1511 = vmatprep.subr.bf16.mxu0 0
      %1512 = vmatpush2.bf16.msra.mxu0 0
      %1513 = vmatprep.subr.bf16.mxu0 0
      %1514 = vmatpush2.bf16.msra.mxu0 0
      %1515 = vmatprep.subr.bf16.mxu0 0
      %1516 = vmatpush2.bf16.msra.mxu0 0
      %1517 = vmatprep.mubr.bf16.mxu0 0
      %1518 = vmatmul.mubr.bf16.gmra.mxu0 %v1043
      %v1519 = vpop.f32.mrf.mxu0
      %v1520 = vadd.f32 0.0, %v1519
      %v1521 = vpop.f32.mrf.mxu0
      %v1522 = vpop.f32.mrf.mxu0
      %v1523 = vadd.f32 0.0, %v1522
      %v1524 = vpop.f32.mrf.mxu0
      %1525 = vmatprep.mubr.bf16.mxu0 0
      %1526 = vmatmul.mubr.bf16.gmra.mxu0 %v1046
      %v1527 = vpop.f32.mrf.mxu0
      %v1528 = vadd.f32 0.0, %v1527
      %v1529 = vpop.f32.mrf.mxu0
      %v1530 = vpop.f32.mrf.mxu0
      %v1531 = vadd.f32 0.0, %v1530
      %v1532 = vpop.f32.mrf.mxu0
      %1533 = vmatprep.mubr.bf16.mxu0 0
      %1534 = vmatmul.mubr.bf16.gmra.mxu0 %v1049
      %v1535 = vpop.f32.mrf.mxu0
      %v1536 = vadd.f32 0.0, %v1535
      %v1537 = vpop.f32.mrf.mxu0
      %v1538 = vpop.f32.mrf.mxu0
      %v1539 = vadd.f32 0.0, %v1538
      %v1540 = vpop.f32.mrf.mxu0
      %1541 = vmatprep.mubr.bf16.mxu0 0
      %1542 = vmatmul.mubr.bf16.gmra.mxu0 %v1052
      %v1543 = vpop.f32.mrf.mxu0
      %v1544 = vadd.f32 0.0, %v1543
      %v1545 = vpop.f32.mrf.mxu0
      %v1546 = vpop.f32.mrf.mxu0
      %v1547 = vadd.f32 0.0, %v1546
      %v1548 = vpop.f32.mrf.mxu0
      %1549 = vmatprep.mubr.bf16.mxu0 0
      %1550 = vmatmul.mubr.bf16.gmra.mxu0 %v1055
      %v1551 = vpop.f32.mrf.mxu0
      %v1552 = vadd.f32 0.0, %v1551
      %v1553 = vpop.f32.mrf.mxu0
      %v1554 = vpop.f32.mrf.mxu0
      %v1555 = vadd.f32 0.0, %v1554
      %v1556 = vpop.f32.mrf.mxu0
      %1557 = vmatprep.mubr.bf16.mxu0 0
      %1558 = vmatmul.mubr.bf16.gmra.mxu0 %v1058
      %v1559 = vpop.f32.mrf.mxu0
      %v1560 = vadd.f32 0.0, %v1559
      %v1561 = vpop.f32.mrf.mxu0
      %v1562 = vpop.f32.mrf.mxu0
      %v1563 = vadd.f32 0.0, %v1562
      %v1564 = vpop.f32.mrf.mxu0
      %1565 = vmatprep.mubr.bf16.mxu0 0
      %1566 = vmatmul.mubr.bf16.gmra.mxu0 %v1061
      %v1567 = vpop.f32.mrf.mxu0
      %v1568 = vadd.f32 0.0, %v1567
      %v1569 = vpop.f32.mrf.mxu0
      %v1570 = vpop.f32.mrf.mxu0
      %v1571 = vadd.f32 0.0, %v1570
      %v1572 = vpop.f32.mrf.mxu0
      %1573 = vmatprep.mubr.bf16.mxu0 0
      %1574 = vmatmul.mubr.bf16.gmra.mxu0 %v1064
      %v1575 = vpop.f32.mrf.mxu0
      %v1576 = vadd.f32 0.0, %v1575
      %v1577 = vpop.f32.mrf.mxu0
      %v1578 = vpop.f32.mrf.mxu0
      %v1579 = vadd.f32 0.0, %v1578
      %v1580 = vpop.f32.mrf.mxu0
      %1581 = vdwg.mxu0
      %v1582 = vpack.c.bf16 %v1336, %v1332
      %v1583 = vpack.c.bf16 %v1346, %v1342
      %v1584 = vpack.c.bf16 %v1356, %v1352
      %v1585 = vpack.c.bf16 %v1366, %v1362
      %v1586 = vpack.c.bf16 %v1376, %v1372
      %v1587 = vpack.c.bf16 %v1386, %v1382
      %v1588 = vpack.c.bf16 %v1396, %v1392
      %v1589 = vpack.c.bf16 %v1406, %v1402
      %v1590 = vld [vmem:[%s7] sm:$0xff]
      %v1591 = vld [vmem:[%s7 + $0x8] sm:$0xf]
      %v1592 = vld [vmem:[%s7 + $0xc] sm:$0xff]
      %v1593 = vld [vmem:[%s7 + $0x14] sm:$0xf]
      %v1594 = vld [vmem:[%s7 + $0x18] sm:$0xff]
      %v1595 = vld [vmem:[%s7 + $0x20] sm:$0xf]
      %v1596 = vld [vmem:[%s7 + $0x24] sm:$0xff]
      %v1597 = vld [vmem:[%s7 + $0x2c] sm:$0xf]
      %v1598 = vld [vmem:[%s7 + $0x30] sm:$0xff]
      %v1599 = vld [vmem:[%s7 + $0x38] sm:$0xf]
      %v1600 = vld [vmem:[%s7 + $0x3c] sm:$0xff]
      %v1601 = vld [vmem:[%s7 + $0x44] sm:$0xf]
      %v1602 = vld [vmem:[%s7 + $0x48] sm:$0xff]
      %v1603 = vld [vmem:[%s7 + $0x50] sm:$0xf]
      %v1604 = vld [vmem:[%s7 + $0x54] sm:$0xff]
      %v1605 = vld [vmem:[%s7 + $0x5c] sm:$0xf]
      %v1606 = vld [vmem:[%s7 + $0x60] sm:$0xff]
      %v1607 = vld [vmem:[%s7 + $0x68] sm:$0xf]
      %v1608 = vld [vmem:[%s7 + $0x6c] sm:$0xff]
      %v1609 = vld [vmem:[%s7 + $0x74] sm:$0xf]
      %v1610 = vld [vmem:[%s7 + $0x78] sm:$0xff]
      %v1611 = vld [vmem:[%s7 + $0x80] sm:$0xf]
      %v1612 = vld [vmem:[%s7 + $0x84] sm:$0xff]
      %v1613 = vld [vmem:[%s7 + $0x8c] sm:$0xf]
      %v1614 = vld [vmem:[%s7 + $0x90] sm:$0xff]
      %v1615 = vld [vmem:[%s7 + $0x98] sm:$0xf]
      %v1616 = vld [vmem:[%s7 + $0x9c] sm:$0xff]
      %v1617 = vld [vmem:[%s7 + $0xa4] sm:$0xf]
      %v1618 = vld [vmem:[%s7 + $0xa8] sm:$0xff]
      %v1619 = vld [vmem:[%s7 + $0xb0] sm:$0xf]
      %v1620 = vld [vmem:[%s7 + $0xb4] sm:$0xff]
      %v1621 = vld [vmem:[%s7 + $0xbc] sm:$0xf]
      %v1622 = vld [vmem:[%s8] sm:$0x7]
      %v1624 = vlaneseq
      %v1625 = vshrl.u32 %v1624, 7
      %v1626 = vsub.s32 0, %v1625
      %v1627 = vrot.slane %v1622, %v1626
      %v1628 = vlaneseq
      %v1629 = vshrl.u32 %v1628, 7
      %v1630 = vsub.s32 1, %v1629
      %v1631 = vrot.slane %v1622, %v1630
      %v1632 = vlaneseq
      %v1633 = vshrl.u32 %v1632, 7
      %v1634 = vsub.s32 2, %v1633
      %v1635 = vrot.slane %v1622, %v1634
      %v1671 = vunpack.c.l.b16 %v1590
      %v1672 = vunpack.c.h.b16 %v1590
      %v1673 = vunpack.c.l.b16 %v1591
      %v1674 = vunpack.c.l.b16 %v1592
      %v1675 = vunpack.c.h.b16 %v1592
      %v1676 = vunpack.c.l.b16 %v1593
      %v1677 = vunpack.c.l.b16 %v1594
      %v1678 = vunpack.c.h.b16 %v1594
      %v1679 = vunpack.c.l.b16 %v1595
      %v1680 = vunpack.c.l.b16 %v1596
      %v1681 = vunpack.c.h.b16 %v1596
      %v1682 = vunpack.c.l.b16 %v1597
      %v1683 = vunpack.c.l.b16 %v1598
      %v1684 = vunpack.c.h.b16 %v1598
      %v1685 = vunpack.c.l.b16 %v1599
      %v1686 = vunpack.c.l.b16 %v1600
      %v1687 = vunpack.c.h.b16 %v1600
      %v1688 = vunpack.c.l.b16 %v1601
      %v1689 = vunpack.c.l.b16 %v1602
      %v1690 = vunpack.c.h.b16 %v1602
      %v1691 = vunpack.c.l.b16 %v1603
      %v1692 = vunpack.c.l.b16 %v1604
      %v1693 = vunpack.c.h.b16 %v1604
      %v1694 = vunpack.c.l.b16 %v1605
      %v1695 = vunpack.c.l.b16 %v1606
      %v1696 = vunpack.c.h.b16 %v1606
      %v1697 = vunpack.c.l.b16 %v1607
      %v1698 = vunpack.c.l.b16 %v1608
      %v1699 = vunpack.c.h.b16 %v1608
      %v1700 = vunpack.c.l.b16 %v1609
      %v1701 = vunpack.c.l.b16 %v1610
      %v1702 = vunpack.c.h.b16 %v1610
      %v1703 = vunpack.c.l.b16 %v1611
      %v1704 = vunpack.c.l.b16 %v1612
      %v1705 = vunpack.c.h.b16 %v1612
      %v1706 = vunpack.c.l.b16 %v1613
      %v1707 = vunpack.c.l.b16 %v1614
      %v1708 = vunpack.c.h.b16 %v1614
      %v1709 = vunpack.c.l.b16 %v1615
      %v1710 = vunpack.c.l.b16 %v1616
      %v1711 = vunpack.c.h.b16 %v1616
      %v1712 = vunpack.c.l.b16 %v1617
      %v1713 = vunpack.c.l.b16 %v1618
      %v1714 = vunpack.c.h.b16 %v1618
      %v1715 = vunpack.c.l.b16 %v1619
      %v1716 = vunpack.c.l.b16 %v1620
      %v1717 = vunpack.c.h.b16 %v1620
      %v1718 = vunpack.c.l.b16 %v1621
      %v1719 = vpack.c.b16 %v1674, %v1671
      %v1720 = vpack.c.b16 %v1675, %v1672
      %v1721 = vpack.c.b16 %v1676, %v1673
      %v1722 = vpack.c.b16 %v1680, %v1677
      %v1723 = vpack.c.b16 %v1681, %v1678
      %v1724 = vpack.c.b16 %v1682, %v1679
      %v1725 = vpack.c.b16 %v1686, %v1683
      %v1726 = vpack.c.b16 %v1687, %v1684
      %v1727 = vpack.c.b16 %v1688, %v1685
      %v1728 = vpack.c.b16 %v1692, %v1689
      %v1729 = vpack.c.b16 %v1693, %v1690
      %v1730 = vpack.c.b16 %v1694, %v1691
      %v1731 = vpack.c.b16 %v1698, %v1695
      %v1732 = vpack.c.b16 %v1699, %v1696
      %v1733 = vpack.c.b16 %v1700, %v1697
      %v1734 = vpack.c.b16 %v1704, %v1701
      %v1735 = vpack.c.b16 %v1705, %v1702
      %v1736 = vpack.c.b16 %v1706, %v1703
      %v1737 = vpack.c.b16 %v1710, %v1707
      %v1738 = vpack.c.b16 %v1711, %v1708
      %v1739 = vpack.c.b16 %v1712, %v1709
      %v1740 = vpack.c.b16 %v1716, %v1713
      %v1741 = vpack.c.b16 %v1717, %v1714
      %v1742 = vpack.c.b16 %v1718, %v1715
      %1767 = vmatprep.subr.bf16.mxu0 %v1741
      %1768 = vmatpush1.bf16.msra.mxu0 %v1740
      %1769 = vmatprep.subr.bf16.mxu0 %v1738
      %1770 = vmatpush1.bf16.msra.mxu0 %v1737
      %1771 = vmatprep.subr.bf16.mxu0 %v1735
      %1772 = vmatpush1.bf16.msra.mxu0 %v1734
      %1773 = vmatprep.subr.bf16.mxu0 %v1732
      %1774 = vmatpush1.bf16.msra.mxu0 %v1731
      %1775 = vmatprep.subr.bf16.mxu0 %v1729
      %1776 = vmatpush1.bf16.msra.mxu0 %v1728
      %1777 = vmatprep.subr.bf16.mxu0 %v1726
      %1778 = vmatpush1.bf16.msra.mxu0 %v1725
      %1779 = vmatprep.subr.bf16.mxu0 %v1723
      %1780 = vmatpush1.bf16.msra.mxu0 %v1722
      %1781 = vmatprep.subr.bf16.mxu0 %v1720
      %1782 = vmatpush1.bf16.msra.mxu0 %v1719
      %1783 = vmatprep.subr.bf16.mxu0 0
      %1784 = vmatpush2.bf16.msra.mxu0 0
      %1785 = vmatprep.subr.bf16.mxu0 0
      %1786 = vmatpush2.bf16.msra.mxu0 0
      %1787 = vmatprep.subr.bf16.mxu0 0
      %1788 = vmatpush2.bf16.msra.mxu0 0
      %1789 = vmatprep.subr.bf16.mxu0 0
      %1790 = vmatpush2.bf16.msra.mxu0 0
      %1791 = vmatprep.subr.bf16.mxu0 0
      %1792 = vmatpush2.bf16.msra.mxu0 0
      %1793 = vmatprep.subr.bf16.mxu0 0
      %1794 = vmatpush2.bf16.msra.mxu0 0
      %1795 = vmatprep.subr.bf16.mxu0 0
      %1796 = vmatpush2.bf16.msra.mxu0 0
      %1797 = vmatprep.subr.bf16.mxu0 0
      %1798 = vmatpush2.bf16.msra.mxu0 0
      %1799 = vmatprep.mubr.bf16.mxu0 0
      %1800 = vmatmul.mubr.bf16.gmra.mxu0 %v1582
      %v1801 = vpop.f32.mrf.mxu0
      %v1802 = vadd.f32 %v1627, %v1801
      %v1803 = vpop.f32.mrf.mxu0
      %v1804 = vadd.f32 %v1631, %v1803
      %v1805 = vpop.f32.mrf.mxu0
      %v1806 = vadd.f32 %v1627, %v1805
      %v1807 = vpop.f32.mrf.mxu0
      %v1808 = vadd.f32 %v1631, %v1807
      %1809 = vmatprep.mubr.bf16.mxu0 0
      %1810 = vmatmul.mubr.bf16.gmra.mxu0 %v1583
      %v1811 = vpop.f32.mrf.mxu0
      %v1812 = vadd.f32 %v1627, %v1811
      %v1813 = vpop.f32.mrf.mxu0
      %v1814 = vadd.f32 %v1631, %v1813
      %v1815 = vpop.f32.mrf.mxu0
      %v1816 = vadd.f32 %v1627, %v1815
      %v1817 = vpop.f32.mrf.mxu0
      %v1818 = vadd.f32 %v1631, %v1817
      %1819 = vmatprep.mubr.bf16.mxu0 0
      %1820 = vmatmul.mubr.bf16.gmra.mxu0 %v1584
      %v1821 = vpop.f32.mrf.mxu0
      %v1822 = vadd.f32 %v1627, %v1821
      %v1823 = vpop.f32.mrf.mxu0
      %v1824 = vadd.f32 %v1631, %v1823
      %v1825 = vpop.f32.mrf.mxu0
      %v1826 = vadd.f32 %v1627, %v1825
      %v1827 = vpop.f32.mrf.mxu0
      %v1828 = vadd.f32 %v1631, %v1827
      %1829 = vmatprep.mubr.bf16.mxu0 0
      %1830 = vmatmul.mubr.bf16.gmra.mxu0 %v1585
      %v1831 = vpop.f32.mrf.mxu0
      %v1832 = vadd.f32 %v1627, %v1831
      %v1833 = vpop.f32.mrf.mxu0
      %v1834 = vadd.f32 %v1631, %v1833
      %v1835 = vpop.f32.mrf.mxu0
      %v1836 = vadd.f32 %v1627, %v1835
      %v1837 = vpop.f32.mrf.mxu0
      %v1838 = vadd.f32 %v1631, %v1837
      %1839 = vmatprep.mubr.bf16.mxu0 0
      %1840 = vmatmul.mubr.bf16.gmra.mxu0 %v1586
      %v1841 = vpop.f32.mrf.mxu0
      %v1842 = vadd.f32 %v1627, %v1841
      %v1843 = vpop.f32.mrf.mxu0
      %v1844 = vadd.f32 %v1631, %v1843
      %v1845 = vpop.f32.mrf.mxu0
      %v1846 = vadd.f32 %v1627, %v1845
      %v1847 = vpop.f32.mrf.mxu0
      %v1848 = vadd.f32 %v1631, %v1847
      %1849 = vmatprep.mubr.bf16.mxu0 0
      %1850 = vmatmul.mubr.bf16.gmra.mxu0 %v1587
      %v1851 = vpop.f32.mrf.mxu0
      %v1852 = vadd.f32 %v1627, %v1851
      %v1853 = vpop.f32.mrf.mxu0
      %v1854 = vadd.f32 %v1631, %v1853
      %v1855 = vpop.f32.mrf.mxu0
      %v1856 = vadd.f32 %v1627, %v1855
      %v1857 = vpop.f32.mrf.mxu0
      %v1858 = vadd.f32 %v1631, %v1857
      %1859 = vmatprep.mubr.bf16.mxu0 0
      %1860 = vmatmul.mubr.bf16.gmra.mxu0 %v1588
      %v1861 = vpop.f32.mrf.mxu0
      %v1862 = vadd.f32 %v1627, %v1861
      %v1863 = vpop.f32.mrf.mxu0
      %v1864 = vadd.f32 %v1631, %v1863
      %v1865 = vpop.f32.mrf.mxu0
      %v1866 = vadd.f32 %v1627, %v1865
      %v1867 = vpop.f32.mrf.mxu0
      %v1868 = vadd.f32 %v1631, %v1867
      %1869 = vmatprep.mubr.bf16.mxu0 0
      %1870 = vmatmul.mubr.bf16.gmra.mxu0 %v1589
      %v1871 = vpop.f32.mrf.mxu0
      %v1872 = vadd.f32 %v1627, %v1871
      %v1873 = vpop.f32.mrf.mxu0
      %v1874 = vadd.f32 %v1631, %v1873
      %v1875 = vpop.f32.mrf.mxu0
      %v1876 = vadd.f32 %v1627, %v1875
      %v1877 = vpop.f32.mrf.mxu0
      %v1878 = vadd.f32 %v1631, %v1877
      %1879 = vdwg.mxu0
      %1880 = vmatprep.subr.bf16.mxu0 0
      %1881 = vmatpush1.bf16.msra.mxu0 %v1742
      %1882 = vmatprep.subr.bf16.mxu0 0
      %1883 = vmatpush1.bf16.msra.mxu0 %v1739
      %1884 = vmatprep.subr.bf16.mxu0 0
      %1885 = vmatpush1.bf16.msra.mxu0 %v1736
      %1886 = vmatprep.subr.bf16.mxu0 0
      %1887 = vmatpush1.bf16.msra.mxu0 %v1733
      %1888 = vmatprep.subr.bf16.mxu0 0
      %1889 = vmatpush1.bf16.msra.mxu0 %v1730
      %1890 = vmatprep.subr.bf16.mxu0 0
      %1891 = vmatpush1.bf16.msra.mxu0 %v1727
      %1892 = vmatprep.subr.bf16.mxu0 0
      %1893 = vmatpush1.bf16.msra.mxu0 %v1724
      %1894 = vmatprep.subr.bf16.mxu0 0
      %1895 = vmatpush1.bf16.msra.mxu0 %v1721
      %1896 = vmatprep.subr.bf16.mxu0 0
      %1897 = vmatpush2.bf16.msra.mxu0 0
      %1898 = vmatprep.subr.bf16.mxu0 0
      %1899 = vmatpush2.bf16.msra.mxu0 0
      %1900 = vmatprep.subr.bf16.mxu0 0
      %1901 = vmatpush2.bf16.msra.mxu0 0
      %1902 = vmatprep.subr.bf16.mxu0 0
      %1903 = vmatpush2.bf16.msra.mxu0 0
      %1904 = vmatprep.subr.bf16.mxu0 0
      %1905 = vmatpush2.bf16.msra.mxu0 0
      %1906 = vmatprep.subr.bf16.mxu0 0
      %1907 = vmatpush2.bf16.msra.mxu0 0
      %1908 = vmatprep.subr.bf16.mxu0 0
      %1909 = vmatpush2.bf16.msra.mxu0 0
      %1910 = vmatprep.subr.bf16.mxu0 0
      %1911 = vmatpush2.bf16.msra.mxu0 0
      %1912 = vmatprep.mubr.bf16.mxu0 0
      %1913 = vmatmul.mubr.bf16.gmra.mxu0 %v1582
      %v1914 = vpop.f32.mrf.mxu0
      %v1915 = vadd.f32 %v1635, %v1914
      %v1916 = vpop.f32.mrf.mxu0
      %v1917 = vpop.f32.mrf.mxu0
      %v1918 = vadd.f32 %v1635, %v1917
      %v1919 = vpop.f32.mrf.mxu0
      %1920 = vmatprep.mubr.bf16.mxu0 0
      %1921 = vmatmul.mubr.bf16.gmra.mxu0 %v1583
      %v1922 = vpop.f32.mrf.mxu0
      %v1923 = vadd.f32 %v1635, %v1922
      %v1924 = vpop.f32.mrf.mxu0
      %v1925 = vpop.f32.mrf.mxu0
      %v1926 = vadd.f32 %v1635, %v1925
      %v1927 = vpop.f32.mrf.mxu0
      %1928 = vmatprep.mubr.bf16.mxu0 0
      %1929 = vmatmul.mubr.bf16.gmra.mxu0 %v1584
      %v1930 = vpop.f32.mrf.mxu0
      %v1931 = vadd.f32 %v1635, %v1930
      %v1932 = vpop.f32.mrf.mxu0
      %v1933 = vpop.f32.mrf.mxu0
      %v1934 = vadd.f32 %v1635, %v1933
      %v1935 = vpop.f32.mrf.mxu0
      %1936 = vmatprep.mubr.bf16.mxu0 0
      %1937 = vmatmul.mubr.bf16.gmra.mxu0 %v1585
      %v1938 = vpop.f32.mrf.mxu0
      %v1939 = vadd.f32 %v1635, %v1938
      %v1940 = vpop.f32.mrf.mxu0
      %v1941 = vpop.f32.mrf.mxu0
      %v1942 = vadd.f32 %v1635, %v1941
      %v1943 = vpop.f32.mrf.mxu0
      %1944 = vmatprep.mubr.bf16.mxu0 0
      %1945 = vmatmul.mubr.bf16.gmra.mxu0 %v1586
      %v1946 = vpop.f32.mrf.mxu0
      %v1947 = vadd.f32 %v1635, %v1946
      %v1948 = vpop.f32.mrf.mxu0
      %v1949 = vpop.f32.mrf.mxu0
      %v1950 = vadd.f32 %v1635, %v1949
      %v1951 = vpop.f32.mrf.mxu0
      %1952 = vmatprep.mubr.bf16.mxu0 0
      %1953 = vmatmul.mubr.bf16.gmra.mxu0 %v1587
      %v1954 = vpop.f32.mrf.mxu0
      %v1955 = vadd.f32 %v1635, %v1954
      %v1956 = vpop.f32.mrf.mxu0
      %v1957 = vpop.f32.mrf.mxu0
      %v1958 = vadd.f32 %v1635, %v1957
      %v1959 = vpop.f32.mrf.mxu0
      %1960 = vmatprep.mubr.bf16.mxu0 0
      %1961 = vmatmul.mubr.bf16.gmra.mxu0 %v1588
      %v1962 = vpop.f32.mrf.mxu0
      %v1963 = vadd.f32 %v1635, %v1962
      %v1964 = vpop.f32.mrf.mxu0
      %v1965 = vpop.f32.mrf.mxu0
      %v1966 = vadd.f32 %v1635, %v1965
      %v1967 = vpop.f32.mrf.mxu0
      %1968 = vmatprep.mubr.bf16.mxu0 0
      %1969 = vmatmul.mubr.bf16.gmra.mxu0 %v1589
      %v1970 = vpop.f32.mrf.mxu0
      %v1971 = vadd.f32 %v1635, %v1970
      %v1972 = vpop.f32.mrf.mxu0
      %v1973 = vpop.f32.mrf.mxu0
      %v1974 = vadd.f32 %v1635, %v1973
      %v1975 = vpop.f32.mrf.mxu0
      %1976 = vdwg.mxu0
      %v1977 = vpack.c.bf16 %v1523, %v1520
      %v1978 = vpack.c.bf16 %v1531, %v1528
      %v1979 = vpack.c.bf16 %v1539, %v1536
      %v1980 = vpack.c.bf16 %v1547, %v1544
      %v1981 = vpack.c.bf16 %v1555, %v1552
      %v1982 = vpack.c.bf16 %v1563, %v1560
      %v1983 = vpack.c.bf16 %v1571, %v1568
      %v1984 = vpack.c.bf16 %v1579, %v1576
      %v1985 = vld [vmem:[%s9] sm:$0xff]
      %v1986 = vld [vmem:[%s9 + $0x8] sm:$0xff]
      %v1987 = vld [vmem:[%s9 + $0x10] sm:$0xff]
      %v1988 = vld [vmem:[%s9 + $0x18] sm:$0xff]
      %v1989 = vld [vmem:[%s9 + $0x20] sm:$0xff]
      %v1990 = vld [vmem:[%s9 + $0x28] sm:$0xff]
      %v1991 = vld [vmem:[%s9 + $0x30] sm:$0xff]
      %v1992 = vld [vmem:[%s9 + $0x38] sm:$0xff]
      %v1993 = vld [vmem:[%s9 + $0x40] sm:$0xff]
      %v1994 = vld [vmem:[%s9 + $0x48] sm:$0xff]
      %v1995 = vld [vmem:[%s9 + $0x50] sm:$0xff]
      %v1996 = vld [vmem:[%s9 + $0x58] sm:$0xff]
      %v1997 = vld [vmem:[%s9 + $0x60] sm:$0xff]
      %v1998 = vld [vmem:[%s9 + $0x68] sm:$0xff]
      %v1999 = vld [vmem:[%s9 + $0x70] sm:$0xff]
      %v2000 = vld [vmem:[%s9 + $0x78] sm:$0xff]
      %v2001 = vld [vmem:[%s10] sm:$0x3]
      %v2003 = vlaneseq
      %v2004 = vshrl.u32 %v2003, 7
      %v2005 = vsub.s32 0, %v2004
      %v2006 = vrot.slane %v2001, %v2005
      %v2007 = vlaneseq
      %v2008 = vshrl.u32 %v2007, 7
      %v2009 = vsub.s32 1, %v2008
      %v2010 = vrot.slane %v2001, %v2009
      %v2029 = vunpack.c.l.b16 %v1985
      %v2030 = vunpack.c.h.b16 %v1985
      %v2031 = vunpack.c.l.b16 %v1986
      %v2032 = vunpack.c.h.b16 %v1986
      %v2033 = vunpack.c.l.b16 %v1987
      %v2034 = vunpack.c.h.b16 %v1987
      %v2035 = vunpack.c.l.b16 %v1988
      %v2036 = vunpack.c.h.b16 %v1988
      %v2037 = vunpack.c.l.b16 %v1989
      %v2038 = vunpack.c.h.b16 %v1989
      %v2039 = vunpack.c.l.b16 %v1990
      %v2040 = vunpack.c.h.b16 %v1990
      %v2041 = vunpack.c.l.b16 %v1991
      %v2042 = vunpack.c.h.b16 %v1991
      %v2043 = vunpack.c.l.b16 %v1992
      %v2044 = vunpack.c.h.b16 %v1992
      %v2045 = vunpack.c.l.b16 %v1993
      %v2046 = vunpack.c.h.b16 %v1993
      %v2047 = vunpack.c.l.b16 %v1994
      %v2048 = vunpack.c.h.b16 %v1994
      %v2049 = vunpack.c.l.b16 %v1995
      %v2050 = vunpack.c.h.b16 %v1995
      %v2051 = vunpack.c.l.b16 %v1996
      %v2052 = vunpack.c.h.b16 %v1996
      %v2053 = vunpack.c.l.b16 %v1997
      %v2054 = vunpack.c.h.b16 %v1997
      %v2055 = vunpack.c.l.b16 %v1998
      %v2056 = vunpack.c.h.b16 %v1998
      %v2057 = vunpack.c.l.b16 %v1999
      %v2058 = vunpack.c.h.b16 %v1999
      %v2059 = vunpack.c.l.b16 %v2000
      %v2060 = vunpack.c.h.b16 %v2000
      %v2061 = vpack.c.b16 %v2031, %v2029
      %v2062 = vpack.c.b16 %v2032, %v2030
      %v2063 = vpack.c.b16 %v2035, %v2033
      %v2064 = vpack.c.b16 %v2036, %v2034
      %v2065 = vpack.c.b16 %v2039, %v2037
      %v2066 = vpack.c.b16 %v2040, %v2038
      %v2067 = vpack.c.b16 %v2043, %v2041
      %v2068 = vpack.c.b16 %v2044, %v2042
      %v2069 = vpack.c.b16 %v2047, %v2045
      %v2070 = vpack.c.b16 %v2048, %v2046
      %v2071 = vpack.c.b16 %v2051, %v2049
      %v2072 = vpack.c.b16 %v2052, %v2050
      %v2073 = vpack.c.b16 %v2055, %v2053
      %v2074 = vpack.c.b16 %v2056, %v2054
      %v2075 = vpack.c.b16 %v2059, %v2057
      %v2076 = vpack.c.b16 %v2060, %v2058
      %2093 = vmatprep.subr.bf16.mxu0 %v2076
      %2094 = vmatpush1.bf16.msra.mxu0 %v2075
      %2095 = vmatprep.subr.bf16.mxu0 %v2074
      %2096 = vmatpush1.bf16.msra.mxu0 %v2073
      %2097 = vmatprep.subr.bf16.mxu0 %v2072
      %2098 = vmatpush1.bf16.msra.mxu0 %v2071
      %2099 = vmatprep.subr.bf16.mxu0 %v2070
      %2100 = vmatpush1.bf16.msra.mxu0 %v2069
      %2101 = vmatprep.subr.bf16.mxu0 %v2068
      %2102 = vmatpush1.bf16.msra.mxu0 %v2067
      %2103 = vmatprep.subr.bf16.mxu0 %v2066
      %2104 = vmatpush1.bf16.msra.mxu0 %v2065
      %2105 = vmatprep.subr.bf16.mxu0 %v2064
      %2106 = vmatpush1.bf16.msra.mxu0 %v2063
      %2107 = vmatprep.subr.bf16.mxu0 %v2062
      %2108 = vmatpush1.bf16.msra.mxu0 %v2061
      %2109 = vmatprep.subr.bf16.mxu0 0
      %2110 = vmatpush2.bf16.msra.mxu0 0
      %2111 = vmatprep.subr.bf16.mxu0 0
      %2112 = vmatpush2.bf16.msra.mxu0 0
      %2113 = vmatprep.subr.bf16.mxu0 0
      %2114 = vmatpush2.bf16.msra.mxu0 0
      %2115 = vmatprep.subr.bf16.mxu0 0
      %2116 = vmatpush2.bf16.msra.mxu0 0
      %2117 = vmatprep.subr.bf16.mxu0 0
      %2118 = vmatpush2.bf16.msra.mxu0 0
      %2119 = vmatprep.subr.bf16.mxu0 0
      %2120 = vmatpush2.bf16.msra.mxu0 0
      %2121 = vmatprep.subr.bf16.mxu0 0
      %2122 = vmatpush2.bf16.msra.mxu0 0
      %2123 = vmatprep.subr.bf16.mxu0 0
      %2124 = vmatpush2.bf16.msra.mxu0 0
      %2125 = vmatprep.mubr.bf16.mxu0 0
      %2126 = vmatmul.mubr.bf16.gmra.mxu0 %v1977
      %v2127 = vpop.f32.mrf.mxu0
      %v2128 = vadd.f32 %v2006, %v2127
      %v2129 = vpop.f32.mrf.mxu0
      %v2130 = vadd.f32 %v2010, %v2129
      %v2131 = vpop.f32.mrf.mxu0
      %v2132 = vadd.f32 %v2006, %v2131
      %v2133 = vpop.f32.mrf.mxu0
      %v2134 = vadd.f32 %v2010, %v2133
      %2135 = vmatprep.mubr.bf16.mxu0 0
      %2136 = vmatmul.mubr.bf16.gmra.mxu0 %v1978
      %v2137 = vpop.f32.mrf.mxu0
      %v2138 = vadd.f32 %v2006, %v2137
      %v2139 = vpop.f32.mrf.mxu0
      %v2140 = vadd.f32 %v2010, %v2139
      %v2141 = vpop.f32.mrf.mxu0
      %v2142 = vadd.f32 %v2006, %v2141
      %v2143 = vpop.f32.mrf.mxu0
      %v2144 = vadd.f32 %v2010, %v2143
      %2145 = vmatprep.mubr.bf16.mxu0 0
      %2146 = vmatmul.mubr.bf16.gmra.mxu0 %v1979
      %v2147 = vpop.f32.mrf.mxu0
      %v2148 = vadd.f32 %v2006, %v2147
      %v2149 = vpop.f32.mrf.mxu0
      %v2150 = vadd.f32 %v2010, %v2149
      %v2151 = vpop.f32.mrf.mxu0
      %v2152 = vadd.f32 %v2006, %v2151
      %v2153 = vpop.f32.mrf.mxu0
      %v2154 = vadd.f32 %v2010, %v2153
      %2155 = vmatprep.mubr.bf16.mxu0 0
      %2156 = vmatmul.mubr.bf16.gmra.mxu0 %v1980
      %v2157 = vpop.f32.mrf.mxu0
      %v2158 = vadd.f32 %v2006, %v2157
      %v2159 = vpop.f32.mrf.mxu0
      %v2160 = vadd.f32 %v2010, %v2159
      %v2161 = vpop.f32.mrf.mxu0
      %v2162 = vadd.f32 %v2006, %v2161
      %v2163 = vpop.f32.mrf.mxu0
      %v2164 = vadd.f32 %v2010, %v2163
      %2165 = vmatprep.mubr.bf16.mxu0 0
      %2166 = vmatmul.mubr.bf16.gmra.mxu0 %v1981
      %v2167 = vpop.f32.mrf.mxu0
      %v2168 = vadd.f32 %v2006, %v2167
      %v2169 = vpop.f32.mrf.mxu0
      %v2170 = vadd.f32 %v2010, %v2169
      %v2171 = vpop.f32.mrf.mxu0
      %v2172 = vadd.f32 %v2006, %v2171
      %v2173 = vpop.f32.mrf.mxu0
      %v2174 = vadd.f32 %v2010, %v2173
      %2175 = vmatprep.mubr.bf16.mxu0 0
      %2176 = vmatmul.mubr.bf16.gmra.mxu0 %v1982
      %v2177 = vpop.f32.mrf.mxu0
      %v2178 = vadd.f32 %v2006, %v2177
      %v2179 = vpop.f32.mrf.mxu0
      %v2180 = vadd.f32 %v2010, %v2179
      %v2181 = vpop.f32.mrf.mxu0
      %v2182 = vadd.f32 %v2006, %v2181
      %v2183 = vpop.f32.mrf.mxu0
      %v2184 = vadd.f32 %v2010, %v2183
      %2185 = vmatprep.mubr.bf16.mxu0 0
      %2186 = vmatmul.mubr.bf16.gmra.mxu0 %v1983
      %v2187 = vpop.f32.mrf.mxu0
      %v2188 = vadd.f32 %v2006, %v2187
      %v2189 = vpop.f32.mrf.mxu0
      %v2190 = vadd.f32 %v2010, %v2189
      %v2191 = vpop.f32.mrf.mxu0
      %v2192 = vadd.f32 %v2006, %v2191
      %v2193 = vpop.f32.mrf.mxu0
      %v2194 = vadd.f32 %v2010, %v2193
      %2195 = vmatprep.mubr.bf16.mxu0 0
      %2196 = vmatmul.mubr.bf16.gmra.mxu0 %v1984
      %v2197 = vpop.f32.mrf.mxu0
      %v2198 = vadd.f32 %v2006, %v2197
      %v2199 = vpop.f32.mrf.mxu0
      %v2200 = vadd.f32 %v2010, %v2199
      %v2201 = vpop.f32.mrf.mxu0
      %v2202 = vadd.f32 %v2006, %v2201
      %v2203 = vpop.f32.mrf.mxu0
      %v2204 = vadd.f32 %v2010, %v2203
      %2205 = vdwg.mxu0
      %v2206 = vadd.f32 %v1802, %v2128
      %v2207 = vadd.f32 %v1806, %v2132
      %v2208 = vadd.f32 %v1812, %v2138
      %v2209 = vadd.f32 %v1816, %v2142
      %v2210 = vadd.f32 %v1822, %v2148
      %v2211 = vadd.f32 %v1826, %v2152
      %v2212 = vadd.f32 %v1832, %v2158
      %v2213 = vadd.f32 %v1836, %v2162
      %v2214 = vadd.f32 %v1842, %v2168
      %v2215 = vadd.f32 %v1846, %v2172
      %v2216 = vadd.f32 %v1852, %v2178
      %v2217 = vadd.f32 %v1856, %v2182
      %v2218 = vadd.f32 %v1862, %v2188
      %v2219 = vadd.f32 %v1866, %v2192
      %v2220 = vadd.f32 %v1872, %v2198
      %v2221 = vadd.f32 %v1876, %v2202
      %v2222 = vxor.u32 %v2206, 2147483648
      %v2223 = vxor.u32 %v2207, 2147483648
      %v2224 = vxor.u32 %v2208, 2147483648
      %v2225 = vxor.u32 %v2209, 2147483648
      %v2226 = vxor.u32 %v2210, 2147483648
      %v2227 = vxor.u32 %v2211, 2147483648
      %v2228 = vxor.u32 %v2212, 2147483648
      %v2229 = vxor.u32 %v2213, 2147483648
      %v2230 = vxor.u32 %v2214, 2147483648
      %v2231 = vxor.u32 %v2215, 2147483648
      %v2232 = vxor.u32 %v2216, 2147483648
      %v2233 = vxor.u32 %v2217, 2147483648
      %v2234 = vxor.u32 %v2218, 2147483648
      %v2235 = vxor.u32 %v2219, 2147483648
      %v2236 = vxor.u32 %v2220, 2147483648
      %v2237 = vxor.u32 %v2221, 2147483648
      %v2238 = vmul.f32 %v2222, 1.442695
      %v2239 = vpow.pop %v2238
      %v2240 = vmul.f32 %v2223, 1.442695
      %v2241 = vpow.pop %v2240
      %v2242 = vmul.f32 %v2224, 1.442695
      %v2243 = vpow.pop %v2242
      %v2244 = vmul.f32 %v2225, 1.442695
      %v2245 = vpow.pop %v2244
      %v2246 = vmul.f32 %v2226, 1.442695
      %v2247 = vpow.pop %v2246
      %v2248 = vmul.f32 %v2227, 1.442695
      %v2249 = vpow.pop %v2248
      %v2250 = vmul.f32 %v2228, 1.442695
      %v2251 = vpow.pop %v2250
      %v2252 = vmul.f32 %v2229, 1.442695
      %v2253 = vpow.pop %v2252
      %v2254 = vmul.f32 %v2230, 1.442695
      %v2255 = vpow.pop %v2254
      %v2256 = vmul.f32 %v2231, 1.442695
      %v2257 = vpow.pop %v2256
      %v2258 = vmul.f32 %v2232, 1.442695
      %v2259 = vpow.pop %v2258
      %v2260 = vmul.f32 %v2233, 1.442695
      %v2261 = vpow.pop %v2260
      %v2262 = vmul.f32 %v2234, 1.442695
      %v2263 = vpow.pop %v2262
      %v2264 = vmul.f32 %v2235, 1.442695
      %v2265 = vpow.pop %v2264
      %v2266 = vmul.f32 %v2236, 1.442695
      %v2267 = vpow.pop %v2266
      %v2268 = vmul.f32 %v2237, 1.442695
      %v2269 = vpow.pop %v2268
      %v2270 = vadd.f32 %v2239, 1.0
      %v2271 = vadd.f32 %v2241, 1.0
      %v2272 = vadd.f32 %v2243, 1.0
      %v2273 = vadd.f32 %v2245, 1.0
      %v2274 = vadd.f32 %v2247, 1.0
      %v2275 = vadd.f32 %v2249, 1.0
      %v2276 = vadd.f32 %v2251, 1.0
      %v2277 = vadd.f32 %v2253, 1.0
      %v2278 = vadd.f32 %v2255, 1.0
      %v2279 = vadd.f32 %v2257, 1.0
      %v2280 = vadd.f32 %v2259, 1.0
      %v2281 = vadd.f32 %v2261, 1.0
      %v2282 = vadd.f32 %v2263, 1.0
      %v2283 = vadd.f32 %v2265, 1.0
      %v2284 = vadd.f32 %v2267, 1.0
      %v2285 = vadd.f32 %v2269, 1.0
      %v2286 = vrcp.pop %v2270
      %v2287 = vmul.f32 1.0, %v2286
      %v2288 = vrcp.pop %v2271
      %v2289 = vmul.f32 1.0, %v2288
      %v2290 = vrcp.pop %v2272
      %v2291 = vmul.f32 1.0, %v2290
      %v2292 = vrcp.pop %v2273
      %v2293 = vmul.f32 1.0, %v2292
      %v2294 = vrcp.pop %v2274
      %v2295 = vmul.f32 1.0, %v2294
      %v2296 = vrcp.pop %v2275
      %v2297 = vmul.f32 1.0, %v2296
      %v2298 = vrcp.pop %v2276
      %v2299 = vmul.f32 1.0, %v2298
      %v2300 = vrcp.pop %v2277
      %v2301 = vmul.f32 1.0, %v2300
      %v2302 = vrcp.pop %v2278
      %v2303 = vmul.f32 1.0, %v2302
      %v2304 = vrcp.pop %v2279
      %v2305 = vmul.f32 1.0, %v2304
      %v2306 = vrcp.pop %v2280
      %v2307 = vmul.f32 1.0, %v2306
      %v2308 = vrcp.pop %v2281
      %v2309 = vmul.f32 1.0, %v2308
      %v2310 = vrcp.pop %v2282
      %v2311 = vmul.f32 1.0, %v2310
      %v2312 = vrcp.pop %v2283
      %v2313 = vmul.f32 1.0, %v2312
      %v2314 = vrcp.pop %v2284
      %v2315 = vmul.f32 1.0, %v2314
      %v2316 = vrcp.pop %v2285
      %v2317 = vmul.f32 1.0, %v2316
      %v2318 = vadd.f32 %v1804, %v2130
      %v2319 = vadd.f32 %v1808, %v2134
      %v2320 = vadd.f32 %v1814, %v2140
      %v2321 = vadd.f32 %v1818, %v2144
      %v2322 = vadd.f32 %v1824, %v2150
      %v2323 = vadd.f32 %v1828, %v2154
      %v2324 = vadd.f32 %v1834, %v2160
      %v2325 = vadd.f32 %v1838, %v2164
      %v2326 = vadd.f32 %v1844, %v2170
      %v2327 = vadd.f32 %v1848, %v2174
      %v2328 = vadd.f32 %v1854, %v2180
      %v2329 = vadd.f32 %v1858, %v2184
      %v2330 = vadd.f32 %v1864, %v2190
      %v2331 = vadd.f32 %v1868, %v2194
      %v2332 = vadd.f32 %v1874, %v2200
      %v2333 = vadd.f32 %v1878, %v2204
      %v2334 = vxor.u32 %v2318, 2147483648
      %v2335 = vxor.u32 %v2319, 2147483648
      %v2336 = vxor.u32 %v2320, 2147483648
      %v2337 = vxor.u32 %v2321, 2147483648
      %v2338 = vxor.u32 %v2322, 2147483648
      %v2339 = vxor.u32 %v2323, 2147483648
      %v2340 = vxor.u32 %v2324, 2147483648
      %v2341 = vxor.u32 %v2325, 2147483648
      %v2342 = vxor.u32 %v2326, 2147483648
      %v2343 = vxor.u32 %v2327, 2147483648
      %v2344 = vxor.u32 %v2328, 2147483648
      %v2345 = vxor.u32 %v2329, 2147483648
      %v2346 = vxor.u32 %v2330, 2147483648
      %v2347 = vxor.u32 %v2331, 2147483648
      %v2348 = vxor.u32 %v2332, 2147483648
      %v2349 = vxor.u32 %v2333, 2147483648
      %v2350 = vmul.f32 %v2334, 1.442695
      %v2351 = vpow.pop %v2350
      %v2352 = vmul.f32 %v2335, 1.442695
      %v2353 = vpow.pop %v2352
      %v2354 = vmul.f32 %v2336, 1.442695
      %v2355 = vpow.pop %v2354
      %v2356 = vmul.f32 %v2337, 1.442695
      %v2357 = vpow.pop %v2356
      %v2358 = vmul.f32 %v2338, 1.442695
      %v2359 = vpow.pop %v2358
      %v2360 = vmul.f32 %v2339, 1.442695
      %v2361 = vpow.pop %v2360
      %v2362 = vmul.f32 %v2340, 1.442695
      %v2363 = vpow.pop %v2362
      %v2364 = vmul.f32 %v2341, 1.442695
      %v2365 = vpow.pop %v2364
      %v2366 = vmul.f32 %v2342, 1.442695
      %v2367 = vpow.pop %v2366
      %v2368 = vmul.f32 %v2343, 1.442695
      %v2369 = vpow.pop %v2368
      %v2370 = vmul.f32 %v2344, 1.442695
      %v2371 = vpow.pop %v2370
      %v2372 = vmul.f32 %v2345, 1.442695
      %v2373 = vpow.pop %v2372
      %v2374 = vmul.f32 %v2346, 1.442695
      %v2375 = vpow.pop %v2374
      %v2376 = vmul.f32 %v2347, 1.442695
      %v2377 = vpow.pop %v2376
      %v2378 = vmul.f32 %v2348, 1.442695
      %v2379 = vpow.pop %v2378
      %v2380 = vmul.f32 %v2349, 1.442695
      %v2381 = vpow.pop %v2380
      %v2382 = vadd.f32 %v2351, 1.0
      %v2383 = vadd.f32 %v2353, 1.0
      %v2384 = vadd.f32 %v2355, 1.0
      %v2385 = vadd.f32 %v2357, 1.0
      %v2386 = vadd.f32 %v2359, 1.0
      %v2387 = vadd.f32 %v2361, 1.0
      %v2388 = vadd.f32 %v2363, 1.0
      %v2389 = vadd.f32 %v2365, 1.0
      %v2390 = vadd.f32 %v2367, 1.0
      %v2391 = vadd.f32 %v2369, 1.0
      %v2392 = vadd.f32 %v2371, 1.0
      %v2393 = vadd.f32 %v2373, 1.0
      %v2394 = vadd.f32 %v2375, 1.0
      %v2395 = vadd.f32 %v2377, 1.0
      %v2396 = vadd.f32 %v2379, 1.0
      %v2397 = vadd.f32 %v2381, 1.0
      %v2398 = vrcp.pop %v2382
      %v2399 = vmul.f32 1.0, %v2398
      %v2400 = vrcp.pop %v2383
      %v2401 = vmul.f32 1.0, %v2400
      %v2402 = vrcp.pop %v2384
      %v2403 = vmul.f32 1.0, %v2402
      %v2404 = vrcp.pop %v2385
      %v2405 = vmul.f32 1.0, %v2404
      %v2406 = vrcp.pop %v2386
      %v2407 = vmul.f32 1.0, %v2406
      %v2408 = vrcp.pop %v2387
      %v2409 = vmul.f32 1.0, %v2408
      %v2410 = vrcp.pop %v2388
      %v2411 = vmul.f32 1.0, %v2410
      %v2412 = vrcp.pop %v2389
      %v2413 = vmul.f32 1.0, %v2412
      %v2414 = vrcp.pop %v2390
      %v2415 = vmul.f32 1.0, %v2414
      %v2416 = vrcp.pop %v2391
      %v2417 = vmul.f32 1.0, %v2416
      %v2418 = vrcp.pop %v2392
      %v2419 = vmul.f32 1.0, %v2418
      %v2420 = vrcp.pop %v2393
      %v2421 = vmul.f32 1.0, %v2420
      %v2422 = vrcp.pop %v2394
      %v2423 = vmul.f32 1.0, %v2422
      %v2424 = vrcp.pop %v2395
      %v2425 = vmul.f32 1.0, %v2424
      %v2426 = vrcp.pop %v2396
      %v2427 = vmul.f32 1.0, %v2426
      %v2428 = vrcp.pop %v2397
      %v2429 = vmul.f32 1.0, %v2428
      %v2430 = vmul.f32 %v2399, %v1520
      %v2431 = vmul.f32 %v2401, %v1523
      %v2432 = vmul.f32 %v2403, %v1528
      %v2433 = vmul.f32 %v2405, %v1531
      %v2434 = vmul.f32 %v2407, %v1536
      %v2435 = vmul.f32 %v2409, %v1539
      %v2436 = vmul.f32 %v2411, %v1544
      %v2437 = vmul.f32 %v2413, %v1547
      %v2438 = vmul.f32 %v2415, %v1552
      %v2439 = vmul.f32 %v2417, %v1555
      %v2440 = vmul.f32 %v2419, %v1560
      %v2441 = vmul.f32 %v2421, %v1563
      %v2442 = vmul.f32 %v2423, %v1568
      %v2443 = vmul.f32 %v2425, %v1571
      %v2444 = vmul.f32 %v2427, %v1576
      %v2445 = vmul.f32 %v2429, %v1579
      %v2446 = vpack.c.bf16 %v2431, %v2430
      %v2447 = vpack.c.bf16 %v2433, %v2432
      %v2448 = vpack.c.bf16 %v2435, %v2434
      %v2449 = vpack.c.bf16 %v2437, %v2436
      %v2450 = vpack.c.bf16 %v2439, %v2438
      %v2451 = vpack.c.bf16 %v2441, %v2440
      %v2452 = vpack.c.bf16 %v2443, %v2442
      %v2453 = vpack.c.bf16 %v2445, %v2444
      %v2454 = vld [vmem:[%s11] sm:$0xf]
      %v2455 = vld [vmem:[%s11 + $0x4] sm:$0xf]
      %v2456 = vld [vmem:[%s11 + $0x8] sm:$0xf]
      %v2457 = vld [vmem:[%s11 + $0xc] sm:$0xf]
      %v2458 = vld [vmem:[%s11 + $0x10] sm:$0xf]
      %v2459 = vld [vmem:[%s11 + $0x14] sm:$0xf]
      %v2460 = vld [vmem:[%s11 + $0x18] sm:$0xf]
      %v2461 = vld [vmem:[%s11 + $0x1c] sm:$0xf]
      %v2462 = vld [vmem:[%s11 + $0x20] sm:$0xf]
      %v2463 = vld [vmem:[%s11 + $0x24] sm:$0xf]
      %v2464 = vld [vmem:[%s11 + $0x28] sm:$0xf]
      %v2465 = vld [vmem:[%s11 + $0x2c] sm:$0xf]
      %v2466 = vld [vmem:[%s11 + $0x30] sm:$0xf]
      %v2467 = vld [vmem:[%s11 + $0x34] sm:$0xf]
      %v2468 = vld [vmem:[%s11 + $0x38] sm:$0xf]
      %v2469 = vld [vmem:[%s11 + $0x3c] sm:$0xf]
      %v2470 = vld [vmem:[%s12] sm:$0x1]
      %v2472 = vlaneseq
      %v2473 = vshrl.u32 %v2472, 7
      %v2474 = vsub.s32 0, %v2473
      %v2475 = vrot.slane %v2470, %v2474
      %v2493 = vunpack.c.l.b16 %v2454
      %v2494 = vunpack.c.l.b16 %v2455
      %v2495 = vunpack.c.l.b16 %v2456
      %v2496 = vunpack.c.l.b16 %v2457
      %v2497 = vunpack.c.l.b16 %v2458
      %v2498 = vunpack.c.l.b16 %v2459
      %v2499 = vunpack.c.l.b16 %v2460
      %v2500 = vunpack.c.l.b16 %v2461
      %v2501 = vunpack.c.l.b16 %v2462
      %v2502 = vunpack.c.l.b16 %v2463
      %v2503 = vunpack.c.l.b16 %v2464
      %v2504 = vunpack.c.l.b16 %v2465
      %v2505 = vunpack.c.l.b16 %v2466
      %v2506 = vunpack.c.l.b16 %v2467
      %v2507 = vunpack.c.l.b16 %v2468
      %v2508 = vunpack.c.l.b16 %v2469
      %v2509 = vpack.c.b16 %v2494, %v2493
      %v2510 = vpack.c.b16 %v2496, %v2495
      %v2511 = vpack.c.b16 %v2498, %v2497
      %v2512 = vpack.c.b16 %v2500, %v2499
      %v2513 = vpack.c.b16 %v2502, %v2501
      %v2514 = vpack.c.b16 %v2504, %v2503
      %v2515 = vpack.c.b16 %v2506, %v2505
      %v2516 = vpack.c.b16 %v2508, %v2507
      %2525 = vmatprep.subr.bf16.mxu0 0
      %2526 = vmatpush1.bf16.msra.mxu0 %v2516
      %2527 = vmatprep.subr.bf16.mxu0 0
      %2528 = vmatpush1.bf16.msra.mxu0 %v2515
      %2529 = vmatprep.subr.bf16.mxu0 0
      %2530 = vmatpush1.bf16.msra.mxu0 %v2514
      %2531 = vmatprep.subr.bf16.mxu0 0
      %2532 = vmatpush1.bf16.msra.mxu0 %v2513
      %2533 = vmatprep.subr.bf16.mxu0 0
      %2534 = vmatpush1.bf16.msra.mxu0 %v2512
      %2535 = vmatprep.subr.bf16.mxu0 0
      %2536 = vmatpush1.bf16.msra.mxu0 %v2511
      %2537 = vmatprep.subr.bf16.mxu0 0
      %2538 = vmatpush1.bf16.msra.mxu0 %v2510
      %2539 = vmatprep.subr.bf16.mxu0 0
      %2540 = vmatpush1.bf16.msra.mxu0 %v2509
      %2541 = vmatprep.subr.bf16.mxu0 0
      %2542 = vmatpush2.bf16.msra.mxu0 0
      %2543 = vmatprep.subr.bf16.mxu0 0
      %2544 = vmatpush2.bf16.msra.mxu0 0
      %2545 = vmatprep.subr.bf16.mxu0 0
      %2546 = vmatpush2.bf16.msra.mxu0 0
      %2547 = vmatprep.subr.bf16.mxu0 0
      %2548 = vmatpush2.bf16.msra.mxu0 0
      %2549 = vmatprep.subr.bf16.mxu0 0
      %2550 = vmatpush2.bf16.msra.mxu0 0
      %2551 = vmatprep.subr.bf16.mxu0 0
      %2552 = vmatpush2.bf16.msra.mxu0 0
      %2553 = vmatprep.subr.bf16.mxu0 0
      %2554 = vmatpush2.bf16.msra.mxu0 0
      %2555 = vmatprep.subr.bf16.mxu0 0
      %2556 = vmatpush2.bf16.msra.mxu0 0
      %2557 = vmatprep.mubr.bf16.mxu0 0
      %2558 = vmatmul.mubr.bf16.gmra.mxu0 %v2446
      %v2559 = vpop.f32.mrf.mxu0
      %v2560 = vadd.f32 %v2475, %v2559
      %v2561 = vpop.f32.mrf.mxu0
      %v2562 = vpop.f32.mrf.mxu0
      %v2563 = vadd.f32 %v2475, %v2562
      %v2564 = vpop.f32.mrf.mxu0
      %2565 = vmatprep.mubr.bf16.mxu0 0
      %2566 = vmatmul.mubr.bf16.gmra.mxu0 %v2447
      %v2567 = vpop.f32.mrf.mxu0
      %v2568 = vadd.f32 %v2475, %v2567
      %v2569 = vpop.f32.mrf.mxu0
      %v2570 = vpop.f32.mrf.mxu0
      %v2571 = vadd.f32 %v2475, %v2570
      %v2572 = vpop.f32.mrf.mxu0
      %2573 = vmatprep.mubr.bf16.mxu0 0
      %2574 = vmatmul.mubr.bf16.gmra.mxu0 %v2448
      %v2575 = vpop.f32.mrf.mxu0
      %v2576 = vadd.f32 %v2475, %v2575
      %v2577 = vpop.f32.mrf.mxu0
      %v2578 = vpop.f32.mrf.mxu0
      %v2579 = vadd.f32 %v2475, %v2578
      %v2580 = vpop.f32.mrf.mxu0
      %2581 = vmatprep.mubr.bf16.mxu0 0
      %2582 = vmatmul.mubr.bf16.gmra.mxu0 %v2449
      %v2583 = vpop.f32.mrf.mxu0
      %v2584 = vadd.f32 %v2475, %v2583
      %v2585 = vpop.f32.mrf.mxu0
      %v2586 = vpop.f32.mrf.mxu0
      %v2587 = vadd.f32 %v2475, %v2586
      %v2588 = vpop.f32.mrf.mxu0
      %2589 = vmatprep.mubr.bf16.mxu0 0
      %2590 = vmatmul.mubr.bf16.gmra.mxu0 %v2450
      %v2591 = vpop.f32.mrf.mxu0
      %v2592 = vadd.f32 %v2475, %v2591
      %v2593 = vpop.f32.mrf.mxu0
      %v2594 = vpop.f32.mrf.mxu0
      %v2595 = vadd.f32 %v2475, %v2594
      %v2596 = vpop.f32.mrf.mxu0
      %2597 = vmatprep.mubr.bf16.mxu0 0
      %2598 = vmatmul.mubr.bf16.gmra.mxu0 %v2451
      %v2599 = vpop.f32.mrf.mxu0
      %v2600 = vadd.f32 %v2475, %v2599
      %v2601 = vpop.f32.mrf.mxu0
      %v2602 = vpop.f32.mrf.mxu0
      %v2603 = vadd.f32 %v2475, %v2602
      %v2604 = vpop.f32.mrf.mxu0
      %2605 = vmatprep.mubr.bf16.mxu0 0
      %2606 = vmatmul.mubr.bf16.gmra.mxu0 %v2452
      %v2607 = vpop.f32.mrf.mxu0
      %v2608 = vadd.f32 %v2475, %v2607
      %v2609 = vpop.f32.mrf.mxu0
      %v2610 = vpop.f32.mrf.mxu0
      %v2611 = vadd.f32 %v2475, %v2610
      %v2612 = vpop.f32.mrf.mxu0
      %2613 = vmatprep.mubr.bf16.mxu0 0
      %2614 = vmatmul.mubr.bf16.gmra.mxu0 %v2453
      %v2615 = vpop.f32.mrf.mxu0
      %v2616 = vadd.f32 %v2475, %v2615
      %v2617 = vpop.f32.mrf.mxu0
      %v2618 = vpop.f32.mrf.mxu0
      %v2619 = vadd.f32 %v2475, %v2618
      %v2620 = vpop.f32.mrf.mxu0
      %2621 = vdwg.mxu0
      %v2622 = vadd.f32 %v1915, %v2560
      %v2623 = vadd.f32 %v1918, %v2563
      %v2624 = vadd.f32 %v1923, %v2568
      %v2625 = vadd.f32 %v1926, %v2571
      %v2626 = vadd.f32 %v1931, %v2576
      %v2627 = vadd.f32 %v1934, %v2579
      %v2628 = vadd.f32 %v1939, %v2584
      %v2629 = vadd.f32 %v1942, %v2587
      %v2630 = vadd.f32 %v1947, %v2592
      %v2631 = vadd.f32 %v1950, %v2595
      %v2632 = vadd.f32 %v1955, %v2600
      %v2633 = vadd.f32 %v1958, %v2603
      %v2634 = vadd.f32 %v1963, %v2608
      %v2635 = vadd.f32 %v1966, %v2611
      %v2636 = vadd.f32 %v1971, %v2616
      %v2637 = vadd.f32 %v1974, %v2619
      %v2638 = vtanh.pop %v2622
      %v2639 = vtanh.pop %v2623
      %v2640 = vtanh.pop %v2624
      %v2641 = vtanh.pop %v2625
      %v2642 = vtanh.pop %v2626
      %v2643 = vtanh.pop %v2627
      %v2644 = vtanh.pop %v2628
      %v2645 = vtanh.pop %v2629
      %v2646 = vtanh.pop %v2630
      %v2647 = vtanh.pop %v2631
      %v2648 = vtanh.pop %v2632
      %v2649 = vtanh.pop %v2633
      %v2650 = vtanh.pop %v2634
      %v2651 = vtanh.pop %v2635
      %v2652 = vtanh.pop %v2636
      %v2653 = vtanh.pop %v2637
      %v2654 = vmul.f32 %v2287, %v2638
      %v2655 = vmul.f32 %v2289, %v2639
      %v2656 = vmul.f32 %v2291, %v2640
      %v2657 = vmul.f32 %v2293, %v2641
      %v2658 = vmul.f32 %v2295, %v2642
      %v2659 = vmul.f32 %v2297, %v2643
      %v2660 = vmul.f32 %v2299, %v2644
      %v2661 = vmul.f32 %v2301, %v2645
      %v2662 = vmul.f32 %v2303, %v2646
      %v2663 = vmul.f32 %v2305, %v2647
      %v2664 = vmul.f32 %v2307, %v2648
      %v2665 = vmul.f32 %v2309, %v2649
      %v2666 = vmul.f32 %v2311, %v2650
      %v2667 = vmul.f32 %v2313, %v2651
      %v2668 = vmul.f32 %v2315, %v2652
      %v2669 = vmul.f32 %v2317, %v2653
      %v2670 = vsub.f32 1.0, %v2287
      %v2671 = vsub.f32 1.0, %v2289
      %v2672 = vsub.f32 1.0, %v2291
      %v2673 = vsub.f32 1.0, %v2293
      %v2674 = vsub.f32 1.0, %v2295
      %v2675 = vsub.f32 1.0, %v2297
      %v2676 = vsub.f32 1.0, %v2299
      %v2677 = vsub.f32 1.0, %v2301
      %v2678 = vsub.f32 1.0, %v2303
      %v2679 = vsub.f32 1.0, %v2305
      %v2680 = vsub.f32 1.0, %v2307
      %v2681 = vsub.f32 1.0, %v2309
      %v2682 = vsub.f32 1.0, %v2311
      %v2683 = vsub.f32 1.0, %v2313
      %v2684 = vsub.f32 1.0, %v2315
      %v2685 = vsub.f32 1.0, %v2317
      %v2686 = vmul.f32 %v2670, %v1520
      %v2687 = vmul.f32 %v2671, %v1523
      %v2688 = vmul.f32 %v2672, %v1528
      %v2689 = vmul.f32 %v2673, %v1531
      %v2690 = vmul.f32 %v2674, %v1536
      %v2691 = vmul.f32 %v2675, %v1539
      %v2692 = vmul.f32 %v2676, %v1544
      %v2693 = vmul.f32 %v2677, %v1547
      %v2694 = vmul.f32 %v2678, %v1552
      %v2695 = vmul.f32 %v2679, %v1555
      %v2696 = vmul.f32 %v2680, %v1560
      %v2697 = vmul.f32 %v2681, %v1563
      %v2698 = vmul.f32 %v2682, %v1568
      %v2699 = vmul.f32 %v2683, %v1571
      %v2700 = vmul.f32 %v2684, %v1576
      %v2701 = vmul.f32 %v2685, %v1579
      %v2702 = vadd.f32 %v2654, %v2686
      %v2703 = vadd.f32 %v2655, %v2687
      %v2704 = vadd.f32 %v2656, %v2688
      %v2705 = vadd.f32 %v2657, %v2689
      %v2706 = vadd.f32 %v2658, %v2690
      %v2707 = vadd.f32 %v2659, %v2691
      %v2708 = vadd.f32 %v2660, %v2692
      %v2709 = vadd.f32 %v2661, %v2693
      %v2710 = vadd.f32 %v2662, %v2694
      %v2711 = vadd.f32 %v2663, %v2695
      %v2712 = vadd.f32 %v2664, %v2696
      %v2713 = vadd.f32 %v2665, %v2697
      %v2714 = vadd.f32 %v2666, %v2698
      %v2715 = vadd.f32 %v2667, %v2699
      %v2716 = vadd.f32 %v2668, %v2700
      %v2717 = vadd.f32 %v2669, %v2701
      %v2718 = vld [vmem:[%s13] sm:$0xf]
      %v2719 = vpack.c.bf16 %v2703, %v2702
      %v2720 = vpack.c.bf16 %v2705, %v2704
      %v2721 = vpack.c.bf16 %v2707, %v2706
      %v2722 = vpack.c.bf16 %v2709, %v2708
      %v2723 = vpack.c.bf16 %v2711, %v2710
      %v2724 = vpack.c.bf16 %v2713, %v2712
      %v2725 = vpack.c.bf16 %v2715, %v2714
      %v2726 = vpack.c.bf16 %v2717, %v2716
      %2727 = vmatprep.subr.bf16.mxu0 0
      %2728 = vmatpush1.bf16.msra.mxu0 %v2726
      %2729 = vmatprep.subr.bf16.mxu0 0
      %2730 = vmatpush1.bf16.msra.mxu0 %v2725
      %2731 = vmatprep.subr.bf16.mxu0 0
      %2732 = vmatpush1.bf16.msra.mxu0 %v2724
      %2733 = vmatprep.subr.bf16.mxu0 0
      %2734 = vmatpush1.bf16.msra.mxu0 %v2723
      %2735 = vmatprep.subr.bf16.mxu0 0
      %2736 = vmatpush1.bf16.msra.mxu0 %v2722
      %2737 = vmatprep.subr.bf16.mxu0 0
      %2738 = vmatpush1.bf16.msra.mxu0 %v2721
      %2739 = vmatprep.subr.bf16.mxu0 0
      %2740 = vmatpush1.bf16.msra.mxu0 %v2720
      %2741 = vmatprep.subr.bf16.mxu0 0
      %2742 = vmatpush1.bf16.msra.mxu0 %v2719
      %2743 = vmatprep.subr.bf16.mxu0 0
      %2744 = vmatpush2.bf16.msra.mxu0 0
      %2745 = vmatprep.subr.bf16.mxu0 0
      %2746 = vmatpush2.bf16.msra.mxu0 0
      %2747 = vmatprep.subr.bf16.mxu0 0
      %2748 = vmatpush2.bf16.msra.mxu0 0
      %2749 = vmatprep.subr.bf16.mxu0 0
      %2750 = vmatpush2.bf16.msra.mxu0 0
      %2751 = vmatprep.subr.bf16.mxu0 0
      %2752 = vmatpush2.bf16.msra.mxu0 0
      %2753 = vmatprep.subr.bf16.mxu0 0
      %2754 = vmatpush2.bf16.msra.mxu0 0
      %2755 = vmatprep.subr.bf16.mxu0 0
      %2756 = vmatpush2.bf16.msra.mxu0 0
      %2757 = vmatprep.subr.bf16.mxu0 0
      %2758 = vmatpush2.bf16.msra.mxu0 0
      %2759 = vmatprep.mubr.bf16.mxu0 0
      %2760 = vmatmul.mubr.bf16.gmra.mxu0 %v2718
      %v2761 = vpop.f32.mrf.mxu0
      %v2762 = vadd.f32 0.0, %v2761
      %v2763 = vpop.f32.mrf.mxu0
      %v2764 = vpop.f32.mrf.mxu0
      %v2765 = vpop.f32.mrf.mxu0
      %2766 = vdwg.mxu0
      %v2767 = vld [vmem:[%s14] sm:$0xff]
      %v2768 = vld [vmem:[%s14 + $0x8] sm:$0xff]
      %v2769 = vld [vmem:[%s14 + $0x10] sm:$0xff]
      %v2770 = vld [vmem:[%s14 + $0x18] sm:$0xff]
      %v2771 = vld [vmem:[%s14 + $0x20] sm:$0xff]
      %v2772 = vld [vmem:[%s14 + $0x28] sm:$0xff]
      %v2773 = vld [vmem:[%s14 + $0x30] sm:$0xff]
      %v2774 = vld [vmem:[%s14 + $0x38] sm:$0xff]
      %v2775 = vld [vmem:[%s14 + $0x40] sm:$0xff]
      %v2776 = vld [vmem:[%s14 + $0x48] sm:$0xff]
      %v2777 = vld [vmem:[%s14 + $0x50] sm:$0xff]
      %v2778 = vld [vmem:[%s14 + $0x58] sm:$0xff]
      %v2779 = vld [vmem:[%s14 + $0x60] sm:$0xff]
      %v2780 = vld [vmem:[%s14 + $0x68] sm:$0xff]
      %v2781 = vld [vmem:[%s14 + $0x70] sm:$0xff]
      %v2782 = vld [vmem:[%s14 + $0x78] sm:$0xff]
      %vm2783 = vcmask 64512
      %v2785 = vsel %vm2783, %v2767, 0
      %v2788 = vsel %vm2783, %v2768, 0
      %v2791 = vsel %vm2783, %v2769, 0
      %v2794 = vsel %vm2783, %v2770, 0
      %v2797 = vsel %vm2783, %v2771, 0
      %v2800 = vsel %vm2783, %v2772, 0
      %v2803 = vsel %vm2783, %v2773, 0
      %v2806 = vsel %vm2783, %v2774, 0
      %v2809 = vsel %vm2783, %v2775, 0
      %v2812 = vsel %vm2783, %v2776, 0
      %v2815 = vsel %vm2783, %v2777, 0
      %v2818 = vsel %vm2783, %v2778, 0
      %v2821 = vsel %vm2783, %v2779, 0
      %v2824 = vsel %vm2783, %v2780, 0
      %v2827 = vsel %vm2783, %v2781, 0
      %v2830 = vsel %vm2783, %v2782, 0
      %2832 = vmatprep.subr.mxu0 0.0
      %2833 = vmatpush1.msra.mxu0 0.0
      %2834 = vmatprep.subr.mxu0 0.0
      %2835 = vmatpush1.msra.mxu0 0.0
      %2836 = vmatprep.subr.mxu0 0.0
      %2837 = vmatpush1.msra.mxu0 0.0
      %2838 = vmatprep.subr.mxu0 0.0
      %2839 = vmatpush1.msra.mxu0 0.0
      %2840 = vmatprep.subr.mxu0 0.0
      %2841 = vmatpush1.msra.mxu0 0.0
      %2842 = vmatprep.subr.mxu0 0.0
      %2843 = vmatpush1.msra.mxu0 0.0
      %2844 = vmatprep.subr.mxu0 0.0
      %2845 = vmatpush1.msra.mxu0 0.0
      %2846 = vmatprep.subr.mxu0 0.0
      %2847 = vmatpush1.msra.mxu0 0.0
      %2848 = vmatprep.subr.mxu0 0.0
      %2849 = vmatpush1.msra.mxu0 0.0
      %2850 = vmatprep.subr.mxu0 0.0
      %2851 = vmatpush1.msra.mxu0 0.0
      %2852 = vmatprep.subr.mxu0 0.0
      %2853 = vmatpush1.msra.mxu0 0.0
      %2854 = vmatprep.subr.mxu0 0.0
      %2855 = vmatpush1.msra.mxu0 0.0
      %2856 = vmatprep.subr.mxu0 0.0
      %2857 = vmatpush1.msra.mxu0 0.0
      %2858 = vmatprep.subr.mxu0 0.0
      %2859 = vmatpush1.msra.mxu0 0.0
      %2860 = vmatprep.subr.mxu0 0.0
      %2861 = vmatpush1.msra.mxu0 0.0
      %2862 = vmatprep.subr.mxu0 0.0
      %2863 = vmatpush1.msra.mxu0 %v2762
      %2864 = vmatprep.subr.mxu0 0.0
      %2865 = vmatpush2.msra.mxu0 0.0
      %2866 = vmatprep.subr.mxu0 0.0
      %2867 = vmatpush2.msra.mxu0 0.0
      %2868 = vmatprep.subr.mxu0 0.0
      %2869 = vmatpush2.msra.mxu0 0.0
      %2870 = vmatprep.subr.mxu0 0.0
      %2871 = vmatpush2.msra.mxu0 0.0
      %2872 = vmatprep.subr.mxu0 0.0
      %2873 = vmatpush2.msra.mxu0 0.0
      %2874 = vmatprep.subr.mxu0 0.0
      %2875 = vmatpush2.msra.mxu0 0.0
      %2876 = vmatprep.subr.mxu0 0.0
      %2877 = vmatpush2.msra.mxu0 0.0
      %2878 = vmatprep.subr.mxu0 0.0
      %2879 = vmatpush2.msra.mxu0 0.0
      %2880 = vmatprep.subr.mxu0 0.0
      %2881 = vmatpush2.msra.mxu0 0.0
      %2882 = vmatprep.subr.mxu0 0.0
      %2883 = vmatpush2.msra.mxu0 0.0
      %2884 = vmatprep.subr.mxu0 0.0
      %2885 = vmatpush2.msra.mxu0 0.0
      %2886 = vmatprep.subr.mxu0 0.0
      %2887 = vmatpush2.msra.mxu0 0.0
      %2888 = vmatprep.subr.mxu0 0.0
      %2889 = vmatpush2.msra.mxu0 0.0
      %2890 = vmatprep.subr.mxu0 0.0
      %2891 = vmatpush2.msra.mxu0 0.0
      %2892 = vmatprep.subr.mxu0 0.0
      %2893 = vmatpush2.msra.mxu0 0.0
      %2894 = vmatprep.subr.mxu0 0.0
      %2895 = vmatpush2.msra.mxu0 0.0
      %2896 = vmatprep.mubr.f32.mxu0 0.0
      %2897 = vmatmul.mubr.f32.gmra.mxu0 %v2785
      %v2898 = vpop.f32.mrf.mxu0
      %v2899 = vadd.f32 0.0, %v2898
      %v2900 = vpop.f32.mrf.mxu0
      %2901 = vmatprep.mubr.f32.mxu0 0.0
      %2902 = vmatmul.mubr.f32.gmra.mxu0 %v2788
      %v2903 = vpop.f32.mrf.mxu0
      %v2904 = vadd.f32 0.0, %v2903
      %v2905 = vpop.f32.mrf.mxu0
      %2906 = vmatprep.mubr.f32.mxu0 0.0
      %2907 = vmatmul.mubr.f32.gmra.mxu0 %v2791
      %v2908 = vpop.f32.mrf.mxu0
      %v2909 = vadd.f32 0.0, %v2908
      %v2910 = vpop.f32.mrf.mxu0
      %2911 = vmatprep.mubr.f32.mxu0 0.0
      %2912 = vmatmul.mubr.f32.gmra.mxu0 %v2794
      %v2913 = vpop.f32.mrf.mxu0
      %v2914 = vadd.f32 0.0, %v2913
      %v2915 = vpop.f32.mrf.mxu0
      %2916 = vmatprep.mubr.f32.mxu0 0.0
      %2917 = vmatmul.mubr.f32.gmra.mxu0 %v2797
      %v2918 = vpop.f32.mrf.mxu0
      %v2919 = vadd.f32 0.0, %v2918
      %v2920 = vpop.f32.mrf.mxu0
      %2921 = vmatprep.mubr.f32.mxu0 0.0
      %2922 = vmatmul.mubr.f32.gmra.mxu0 %v2800
      %v2923 = vpop.f32.mrf.mxu0
      %v2924 = vadd.f32 0.0, %v2923
      %v2925 = vpop.f32.mrf.mxu0
      %2926 = vmatprep.mubr.f32.mxu0 0.0
      %2927 = vmatmul.mubr.f32.gmra.mxu0 %v2803
      %v2928 = vpop.f32.mrf.mxu0
      %v2929 = vadd.f32 0.0, %v2928
      %v2930 = vpop.f32.mrf.mxu0
      %2931 = vmatprep.mubr.f32.mxu0 0.0
      %2932 = vmatmul.mubr.f32.gmra.mxu0 %v2806
      %v2933 = vpop.f32.mrf.mxu0
      %v2934 = vadd.f32 0.0, %v2933
      %v2935 = vpop.f32.mrf.mxu0
      %2936 = vmatprep.mubr.f32.mxu0 0.0
      %2937 = vmatmul.mubr.f32.gmra.mxu0 %v2809
      %v2938 = vpop.f32.mrf.mxu0
      %v2939 = vadd.f32 0.0, %v2938
      %v2940 = vpop.f32.mrf.mxu0
      %2941 = vmatprep.mubr.f32.mxu0 0.0
      %2942 = vmatmul.mubr.f32.gmra.mxu0 %v2812
      %v2943 = vpop.f32.mrf.mxu0
      %v2944 = vadd.f32 0.0, %v2943
      %v2945 = vpop.f32.mrf.mxu0
      %2946 = vmatprep.mubr.f32.mxu0 0.0
      %2947 = vmatmul.mubr.f32.gmra.mxu0 %v2815
      %v2948 = vpop.f32.mrf.mxu0
      %v2949 = vadd.f32 0.0, %v2948
      %v2950 = vpop.f32.mrf.mxu0
      %2951 = vmatprep.mubr.f32.mxu0 0.0
      %2952 = vmatmul.mubr.f32.gmra.mxu0 %v2818
      %v2953 = vpop.f32.mrf.mxu0
      %v2954 = vadd.f32 0.0, %v2953
      %v2955 = vpop.f32.mrf.mxu0
      %2956 = vmatprep.mubr.f32.mxu0 0.0
      %2957 = vmatmul.mubr.f32.gmra.mxu0 %v2821
      %v2958 = vpop.f32.mrf.mxu0
      %v2959 = vadd.f32 0.0, %v2958
      %v2960 = vpop.f32.mrf.mxu0
      %2961 = vmatprep.mubr.f32.mxu0 0.0
      %2962 = vmatmul.mubr.f32.gmra.mxu0 %v2824
      %v2963 = vpop.f32.mrf.mxu0
      %v2964 = vadd.f32 0.0, %v2963
      %v2965 = vpop.f32.mrf.mxu0
      %2966 = vmatprep.mubr.f32.mxu0 0.0
      %2967 = vmatmul.mubr.f32.gmra.mxu0 %v2827
      %v2968 = vpop.f32.mrf.mxu0
      %v2969 = vadd.f32 0.0, %v2968
      %v2970 = vpop.f32.mrf.mxu0
      %2971 = vmatprep.mubr.f32.mxu0 0.0
      %2972 = vmatmul.mubr.f32.gmra.mxu0 %v2830
      %v2973 = vpop.f32.mrf.mxu0
      %v2974 = vadd.f32 0.0, %v2973
      %v2975 = vpop.f32.mrf.mxu0
      %2976 = vdwg.mxu0
      %v2977 = vld [vmem:[%s15] sm:$0xff]
      %v2978 = vld [vmem:[%s15 + $0x8] sm:$0xff]
      %v2979 = vld [vmem:[%s15 + $0x10] sm:$0xff]
      %v2980 = vld [vmem:[%s15 + $0x18] sm:$0xff]
      %v2981 = vld [vmem:[%s15 + $0x20] sm:$0xff]
      %v2982 = vld [vmem:[%s15 + $0x28] sm:$0xff]
      %v2983 = vld [vmem:[%s15 + $0x30] sm:$0xff]
      %v2984 = vld [vmem:[%s15 + $0x38] sm:$0xff]
      %v2985 = vld [vmem:[%s15 + $0x40] sm:$0xff]
      %v2986 = vld [vmem:[%s15 + $0x48] sm:$0xff]
      %v2987 = vld [vmem:[%s15 + $0x50] sm:$0xff]
      %v2988 = vld [vmem:[%s15 + $0x58] sm:$0xff]
      %v2989 = vld [vmem:[%s15 + $0x60] sm:$0xff]
      %v2990 = vld [vmem:[%s15 + $0x68] sm:$0xff]
      %v2991 = vld [vmem:[%s15 + $0x70] sm:$0xff]
      %v2992 = vld [vmem:[%s15 + $0x78] sm:$0xff]
      %v2993 = vld [vmem:[%s16] sm:$0x3]
      %v2995 = vlaneseq
      %v2996 = vshrl.u32 %v2995, 7
      %v2997 = vsub.s32 0, %v2996
      %v2998 = vrot.slane %v2993, %v2997
      %v2999 = vlaneseq
      %v3000 = vshrl.u32 %v2999, 7
      %v3001 = vsub.s32 1, %v3000
      %v3002 = vrot.slane %v2993, %v3001
      %v3021 = vunpack.c.l.b16 %v2977
      %v3022 = vunpack.c.h.b16 %v2977
      %v3023 = vunpack.c.l.b16 %v2978
      %v3024 = vunpack.c.h.b16 %v2978
      %v3025 = vunpack.c.l.b16 %v2979
      %v3026 = vunpack.c.h.b16 %v2979
      %v3027 = vunpack.c.l.b16 %v2980
      %v3028 = vunpack.c.h.b16 %v2980
      %v3029 = vunpack.c.l.b16 %v2981
      %v3030 = vunpack.c.h.b16 %v2981
      %v3031 = vunpack.c.l.b16 %v2982
      %v3032 = vunpack.c.h.b16 %v2982
      %v3033 = vunpack.c.l.b16 %v2983
      %v3034 = vunpack.c.h.b16 %v2983
      %v3035 = vunpack.c.l.b16 %v2984
      %v3036 = vunpack.c.h.b16 %v2984
      %v3037 = vunpack.c.l.b16 %v2985
      %v3038 = vunpack.c.h.b16 %v2985
      %v3039 = vunpack.c.l.b16 %v2986
      %v3040 = vunpack.c.h.b16 %v2986
      %v3041 = vunpack.c.l.b16 %v2987
      %v3042 = vunpack.c.h.b16 %v2987
      %v3043 = vunpack.c.l.b16 %v2988
      %v3044 = vunpack.c.h.b16 %v2988
      %v3045 = vunpack.c.l.b16 %v2989
      %v3046 = vunpack.c.h.b16 %v2989
      %v3047 = vunpack.c.l.b16 %v2990
      %v3048 = vunpack.c.h.b16 %v2990
      %v3049 = vunpack.c.l.b16 %v2991
      %v3050 = vunpack.c.h.b16 %v2991
      %v3051 = vunpack.c.l.b16 %v2992
      %v3052 = vunpack.c.h.b16 %v2992
      %v3053 = vpack.c.b16 %v3023, %v3021
      %v3054 = vpack.c.b16 %v3024, %v3022
      %v3055 = vpack.c.b16 %v3027, %v3025
      %v3056 = vpack.c.b16 %v3028, %v3026
      %v3057 = vpack.c.b16 %v3031, %v3029
      %v3058 = vpack.c.b16 %v3032, %v3030
      %v3059 = vpack.c.b16 %v3035, %v3033
      %v3060 = vpack.c.b16 %v3036, %v3034
      %v3061 = vpack.c.b16 %v3039, %v3037
      %v3062 = vpack.c.b16 %v3040, %v3038
      %v3063 = vpack.c.b16 %v3043, %v3041
      %v3064 = vpack.c.b16 %v3044, %v3042
      %v3065 = vpack.c.b16 %v3047, %v3045
      %v3066 = vpack.c.b16 %v3048, %v3046
      %v3067 = vpack.c.b16 %v3051, %v3049
      %v3068 = vpack.c.b16 %v3052, %v3050
      %3085 = vmatprep.subr.bf16.mxu0 %v3068
      %3086 = vmatpush1.bf16.msra.mxu0 %v3067
      %3087 = vmatprep.subr.bf16.mxu0 %v3066
      %3088 = vmatpush1.bf16.msra.mxu0 %v3065
      %3089 = vmatprep.subr.bf16.mxu0 %v3064
      %3090 = vmatpush1.bf16.msra.mxu0 %v3063
      %3091 = vmatprep.subr.bf16.mxu0 %v3062
      %3092 = vmatpush1.bf16.msra.mxu0 %v3061
      %3093 = vmatprep.subr.bf16.mxu0 %v3060
      %3094 = vmatpush1.bf16.msra.mxu0 %v3059
      %3095 = vmatprep.subr.bf16.mxu0 %v3058
      %3096 = vmatpush1.bf16.msra.mxu0 %v3057
      %3097 = vmatprep.subr.bf16.mxu0 %v3056
      %3098 = vmatpush1.bf16.msra.mxu0 %v3055
      %3099 = vmatprep.subr.bf16.mxu0 %v3054
      %3100 = vmatpush1.bf16.msra.mxu0 %v3053
      %3101 = vmatprep.subr.bf16.mxu0 0
      %3102 = vmatpush2.bf16.msra.mxu0 0
      %3103 = vmatprep.subr.bf16.mxu0 0
      %3104 = vmatpush2.bf16.msra.mxu0 0
      %3105 = vmatprep.subr.bf16.mxu0 0
      %3106 = vmatpush2.bf16.msra.mxu0 0
      %3107 = vmatprep.subr.bf16.mxu0 0
      %3108 = vmatpush2.bf16.msra.mxu0 0
      %3109 = vmatprep.subr.bf16.mxu0 0
      %3110 = vmatpush2.bf16.msra.mxu0 0
      %3111 = vmatprep.subr.bf16.mxu0 0
      %3112 = vmatpush2.bf16.msra.mxu0 0
      %3113 = vmatprep.subr.bf16.mxu0 0
      %3114 = vmatpush2.bf16.msra.mxu0 0
      %3115 = vmatprep.subr.bf16.mxu0 0
      %3116 = vmatpush2.bf16.msra.mxu0 0
      %3117 = vmatprep.mubr.bf16.mxu0 0
      %3118 = vmatmul.mubr.bf16.gmra.mxu0 %v2719
      %v3119 = vpop.f32.mrf.mxu0
      %v3120 = vadd.f32 %v2998, %v3119
      %v3121 = vpop.f32.mrf.mxu0
      %v3122 = vadd.f32 %v3002, %v3121
      %v3123 = vpop.f32.mrf.mxu0
      %v3124 = vadd.f32 %v2998, %v3123
      %v3125 = vpop.f32.mrf.mxu0
      %v3126 = vadd.f32 %v3002, %v3125
      %3127 = vmatprep.mubr.bf16.mxu0 0
      %3128 = vmatmul.mubr.bf16.gmra.mxu0 %v2720
      %v3129 = vpop.f32.mrf.mxu0
      %v3130 = vadd.f32 %v2998, %v3129
      %v3131 = vpop.f32.mrf.mxu0
      %v3132 = vadd.f32 %v3002, %v3131
      %v3133 = vpop.f32.mrf.mxu0
      %v3134 = vadd.f32 %v2998, %v3133
      %v3135 = vpop.f32.mrf.mxu0
      %v3136 = vadd.f32 %v3002, %v3135
      %3137 = vmatprep.mubr.bf16.mxu0 0
      %3138 = vmatmul.mubr.bf16.gmra.mxu0 %v2721
      %v3139 = vpop.f32.mrf.mxu0
      %v3140 = vadd.f32 %v2998, %v3139
      %v3141 = vpop.f32.mrf.mxu0
      %v3142 = vadd.f32 %v3002, %v3141
      %v3143 = vpop.f32.mrf.mxu0
      %v3144 = vadd.f32 %v2998, %v3143
      %v3145 = vpop.f32.mrf.mxu0
      %v3146 = vadd.f32 %v3002, %v3145
      %3147 = vmatprep.mubr.bf16.mxu0 0
      %3148 = vmatmul.mubr.bf16.gmra.mxu0 %v2722
      %v3149 = vpop.f32.mrf.mxu0
      %v3150 = vadd.f32 %v2998, %v3149
      %v3151 = vpop.f32.mrf.mxu0
      %v3152 = vadd.f32 %v3002, %v3151
      %v3153 = vpop.f32.mrf.mxu0
      %v3154 = vadd.f32 %v2998, %v3153
      %v3155 = vpop.f32.mrf.mxu0
      %v3156 = vadd.f32 %v3002, %v3155
      %3157 = vmatprep.mubr.bf16.mxu0 0
      %3158 = vmatmul.mubr.bf16.gmra.mxu0 %v2723
      %v3159 = vpop.f32.mrf.mxu0
      %v3160 = vadd.f32 %v2998, %v3159
      %v3161 = vpop.f32.mrf.mxu0
      %v3162 = vadd.f32 %v3002, %v3161
      %v3163 = vpop.f32.mrf.mxu0
      %v3164 = vadd.f32 %v2998, %v3163
      %v3165 = vpop.f32.mrf.mxu0
      %v3166 = vadd.f32 %v3002, %v3165
      %3167 = vmatprep.mubr.bf16.mxu0 0
      %3168 = vmatmul.mubr.bf16.gmra.mxu0 %v2724
      %v3169 = vpop.f32.mrf.mxu0
      %v3170 = vadd.f32 %v2998, %v3169
      %v3171 = vpop.f32.mrf.mxu0
      %v3172 = vadd.f32 %v3002, %v3171
      %v3173 = vpop.f32.mrf.mxu0
      %v3174 = vadd.f32 %v2998, %v3173
      %v3175 = vpop.f32.mrf.mxu0
      %v3176 = vadd.f32 %v3002, %v3175
      %3177 = vmatprep.mubr.bf16.mxu0 0
      %3178 = vmatmul.mubr.bf16.gmra.mxu0 %v2725
      %v3179 = vpop.f32.mrf.mxu0
      %v3180 = vadd.f32 %v2998, %v3179
      %v3181 = vpop.f32.mrf.mxu0
      %v3182 = vadd.f32 %v3002, %v3181
      %v3183 = vpop.f32.mrf.mxu0
      %v3184 = vadd.f32 %v2998, %v3183
      %v3185 = vpop.f32.mrf.mxu0
      %v3186 = vadd.f32 %v3002, %v3185
      %3187 = vmatprep.mubr.bf16.mxu0 0
      %3188 = vmatmul.mubr.bf16.gmra.mxu0 %v2726
      %v3189 = vpop.f32.mrf.mxu0
      %v3190 = vadd.f32 %v2998, %v3189
      %v3191 = vpop.f32.mrf.mxu0
      %v3192 = vadd.f32 %v3002, %v3191
      %v3193 = vpop.f32.mrf.mxu0
      %v3194 = vadd.f32 %v2998, %v3193
      %v3195 = vpop.f32.mrf.mxu0
      %v3196 = vadd.f32 %v3002, %v3195
      %3197 = vdwg.mxu0
      %v3198 = vpack.c.bf16 %v3124, %v3120
      %v3199 = vpack.c.bf16 %v3126, %v3122
      %v3200 = vpack.c.bf16 %v3134, %v3130
      %v3201 = vpack.c.bf16 %v3136, %v3132
      %v3202 = vpack.c.bf16 %v3144, %v3140
      %v3203 = vpack.c.bf16 %v3146, %v3142
      %v3204 = vpack.c.bf16 %v3154, %v3150
      %v3205 = vpack.c.bf16 %v3156, %v3152
      %v3206 = vpack.c.bf16 %v3164, %v3160
      %v3207 = vpack.c.bf16 %v3166, %v3162
      %v3208 = vpack.c.bf16 %v3174, %v3170
      %v3209 = vpack.c.bf16 %v3176, %v3172
      %v3210 = vpack.c.bf16 %v3184, %v3180
      %v3211 = vpack.c.bf16 %v3186, %v3182
      %v3212 = vpack.c.bf16 %v3194, %v3190
      %v3213 = vpack.c.bf16 %v3196, %v3192
      %3214 = vmatprep.subr.bf16.mxu0 %v3213
      %3215 = vmatpush1.bf16.msra.mxu0 %v3212
      %3216 = vmatprep.subr.bf16.mxu0 %v3211
      %3217 = vmatpush1.bf16.msra.mxu0 %v3210
      %3218 = vmatprep.subr.bf16.mxu0 %v3209
      %3219 = vmatpush1.bf16.msra.mxu0 %v3208
      %3220 = vmatprep.subr.bf16.mxu0 %v3207
      %3221 = vmatpush1.bf16.msra.mxu0 %v3206
      %3222 = vmatprep.subr.bf16.mxu0 %v3205
      %3223 = vmatpush1.bf16.msra.mxu0 %v3204
      %3224 = vmatprep.subr.bf16.mxu0 %v3203
      %3225 = vmatpush1.bf16.msra.mxu0 %v3202
      %3226 = vmatprep.subr.bf16.mxu0 %v3201
      %3227 = vmatpush1.bf16.msra.mxu0 %v3200
      %3228 = vmatprep.subr.bf16.mxu0 %v3199
      %3229 = vmatpush1.bf16.msra.mxu0 %v3198
      %3230 = vmatprep.subr.bf16.mxu0 0
      %3231 = vmatpush2.bf16.msra.mxu0 0
      %3232 = vmatprep.subr.bf16.mxu0 0
      %3233 = vmatpush2.bf16.msra.mxu0 0
      %3234 = vmatprep.subr.bf16.mxu0 0
      %3235 = vmatpush2.bf16.msra.mxu0 0
      %3236 = vmatprep.subr.bf16.mxu0 0
      %3237 = vmatpush2.bf16.msra.mxu0 0
      %3238 = vmatprep.subr.bf16.mxu0 0
      %3239 = vmatpush2.bf16.msra.mxu0 0
      %3240 = vmatprep.subr.bf16.mxu0 0
      %3241 = vmatpush2.bf16.msra.mxu0 0
      %3242 = vmatprep.subr.bf16.mxu0 0
      %3243 = vmatpush2.bf16.msra.mxu0 0
      %3244 = vmatprep.subr.bf16.mxu0 0
      %3245 = vmatpush2.bf16.msra.mxu0 0
      %3246 = vmatprep.mubr.bf16.mxu0 0
      %3247 = vmatmul.mubr.bf16.gmra.mxu0 %v924
      %v3248 = vpop.f32.mrf.mxu0
      %v3249 = vadd.f32 0.0, %v3248
      %v3250 = vpop.f32.mrf.mxu0
      %v3251 = vadd.f32 0.0, %v3250
      %v3252 = vpop.f32.mrf.mxu0
      %v3253 = vadd.f32 0.0, %v3252
      %v3254 = vpop.f32.mrf.mxu0
      %v3255 = vadd.f32 0.0, %v3254
      %3256 = vmatprep.mubr.bf16.mxu0 0
      %3257 = vmatmul.mubr.bf16.gmra.mxu0 %v925
      %v3258 = vpop.f32.mrf.mxu0
      %v3259 = vadd.f32 0.0, %v3258
      %v3260 = vpop.f32.mrf.mxu0
      %v3261 = vadd.f32 0.0, %v3260
      %v3262 = vpop.f32.mrf.mxu0
      %v3263 = vadd.f32 0.0, %v3262
      %v3264 = vpop.f32.mrf.mxu0
      %v3265 = vadd.f32 0.0, %v3264
      %3266 = vmatprep.mubr.bf16.mxu0 0
      %3267 = vmatmul.mubr.bf16.gmra.mxu0 %v926
      %v3268 = vpop.f32.mrf.mxu0
      %v3269 = vadd.f32 0.0, %v3268
      %v3270 = vpop.f32.mrf.mxu0
      %v3271 = vadd.f32 0.0, %v3270
      %v3272 = vpop.f32.mrf.mxu0
      %v3273 = vadd.f32 0.0, %v3272
      %v3274 = vpop.f32.mrf.mxu0
      %v3275 = vadd.f32 0.0, %v3274
      %3276 = vmatprep.mubr.bf16.mxu0 0
      %3277 = vmatmul.mubr.bf16.gmra.mxu0 %v927
      %v3278 = vpop.f32.mrf.mxu0
      %v3279 = vadd.f32 0.0, %v3278
      %v3280 = vpop.f32.mrf.mxu0
      %v3281 = vadd.f32 0.0, %v3280
      %v3282 = vpop.f32.mrf.mxu0
      %v3283 = vadd.f32 0.0, %v3282
      %v3284 = vpop.f32.mrf.mxu0
      %v3285 = vadd.f32 0.0, %v3284
      %3286 = vdwg.mxu0
      %v3287 = vpack.c.bf16 %v3253, %v3249
      %v3288 = vpack.c.bf16 %v3255, %v3251
      %v3289 = vpack.c.bf16 %v3263, %v3259
      %v3290 = vpack.c.bf16 %v3265, %v3261
      %v3291 = vpack.c.bf16 %v3273, %v3269
      %v3292 = vpack.c.bf16 %v3275, %v3271
      %v3293 = vpack.c.bf16 %v3283, %v3279
      %v3294 = vpack.c.bf16 %v3285, %v3281
      %3295 = vmatprep.subr.bf16.mxu0 0
      %3296 = vmatpush1.bf16.msra.mxu0 0
      %3297 = vmatprep.subr.bf16.mxu0 0
      %3298 = vmatpush1.bf16.msra.mxu0 0
      %3299 = vmatprep.subr.bf16.mxu0 0
      %3300 = vmatpush1.bf16.msra.mxu0 0
      %3301 = vmatprep.subr.bf16.mxu0 0
      %3302 = vmatpush1.bf16.msra.mxu0 0
      %3303 = vmatprep.subr.bf16.mxu0 %v3294
      %3304 = vmatpush1.bf16.msra.mxu0 %v3293
      %3305 = vmatprep.subr.bf16.mxu0 %v3292
      %3306 = vmatpush1.bf16.msra.mxu0 %v3291
      %3307 = vmatprep.subr.bf16.mxu0 %v3290
      %3308 = vmatpush1.bf16.msra.mxu0 %v3289
      %3309 = vmatprep.subr.bf16.mxu0 %v3288
      %3310 = vmatpush1.bf16.msra.mxu0 %v3287
      %3311 = vmatprep.subr.bf16.mxu0 0
      %3312 = vmatpush2.bf16.msra.mxu0 0
      %3313 = vmatprep.subr.bf16.mxu0 0
      %3314 = vmatpush2.bf16.msra.mxu0 0
      %3315 = vmatprep.subr.bf16.mxu0 0
      %3316 = vmatpush2.bf16.msra.mxu0 0
      %3317 = vmatprep.subr.bf16.mxu0 0
      %3318 = vmatpush2.bf16.msra.mxu0 0
      %3319 = vmatprep.subr.bf16.mxu0 0
      %3320 = vmatpush2.bf16.msra.mxu0 0
      %3321 = vmatprep.subr.bf16.mxu0 0
      %3322 = vmatpush2.bf16.msra.mxu0 0
      %3323 = vmatprep.subr.bf16.mxu0 0
      %3324 = vmatpush2.bf16.msra.mxu0 0
      %3325 = vmatprep.subr.bf16.mxu0 0
      %3326 = vmatpush2.bf16.msra.mxu0 0
      %3327 = vmatprep.mubr.bf16.mxu0 0
      %3328 = vmatmul.mubr.bf16.gmra.mxu0 %v1043
      %v3329 = vpop.f32.mrf.mxu0
      %v3330 = vadd.f32 0.0, %v3329
      %v3331 = vpop.f32.mrf.mxu0
      %v3332 = vadd.f32 0.0, %v3331
      %v3333 = vpop.f32.mrf.mxu0
      %v3334 = vadd.f32 0.0, %v3333
      %v3335 = vpop.f32.mrf.mxu0
      %v3336 = vadd.f32 0.0, %v3335
      %3337 = vmatprep.mubr.bf16.mxu0 0
      %3338 = vmatmul.mubr.bf16.gmra.mxu0 %v1046
      %v3339 = vpop.f32.mrf.mxu0
      %v3340 = vadd.f32 0.0, %v3339
      %v3341 = vpop.f32.mrf.mxu0
      %v3342 = vadd.f32 0.0, %v3341
      %v3343 = vpop.f32.mrf.mxu0
      %v3344 = vadd.f32 0.0, %v3343
      %v3345 = vpop.f32.mrf.mxu0
      %v3346 = vadd.f32 0.0, %v3345
      %3347 = vmatprep.mubr.bf16.mxu0 0
      %3348 = vmatmul.mubr.bf16.gmra.mxu0 %v1049
      %v3349 = vpop.f32.mrf.mxu0
      %v3350 = vadd.f32 0.0, %v3349
      %v3351 = vpop.f32.mrf.mxu0
      %v3352 = vadd.f32 0.0, %v3351
      %v3353 = vpop.f32.mrf.mxu0
      %v3354 = vadd.f32 0.0, %v3353
      %v3355 = vpop.f32.mrf.mxu0
      %v3356 = vadd.f32 0.0, %v3355
      %3357 = vmatprep.mubr.bf16.mxu0 0
      %3358 = vmatmul.mubr.bf16.gmra.mxu0 %v1052
      %v3359 = vpop.f32.mrf.mxu0
      %v3360 = vadd.f32 0.0, %v3359
      %v3361 = vpop.f32.mrf.mxu0
      %v3362 = vadd.f32 0.0, %v3361
      %v3363 = vpop.f32.mrf.mxu0
      %v3364 = vadd.f32 0.0, %v3363
      %v3365 = vpop.f32.mrf.mxu0
      %v3366 = vadd.f32 0.0, %v3365
      %3367 = vmatprep.mubr.bf16.mxu0 0
      %3368 = vmatmul.mubr.bf16.gmra.mxu0 %v1055
      %v3369 = vpop.f32.mrf.mxu0
      %v3370 = vadd.f32 0.0, %v3369
      %v3371 = vpop.f32.mrf.mxu0
      %v3372 = vadd.f32 0.0, %v3371
      %v3373 = vpop.f32.mrf.mxu0
      %v3374 = vadd.f32 0.0, %v3373
      %v3375 = vpop.f32.mrf.mxu0
      %v3376 = vadd.f32 0.0, %v3375
      %3377 = vmatprep.mubr.bf16.mxu0 0
      %3378 = vmatmul.mubr.bf16.gmra.mxu0 %v1058
      %v3379 = vpop.f32.mrf.mxu0
      %v3380 = vadd.f32 0.0, %v3379
      %v3381 = vpop.f32.mrf.mxu0
      %v3382 = vadd.f32 0.0, %v3381
      %v3383 = vpop.f32.mrf.mxu0
      %v3384 = vadd.f32 0.0, %v3383
      %v3385 = vpop.f32.mrf.mxu0
      %v3386 = vadd.f32 0.0, %v3385
      %3387 = vmatprep.mubr.bf16.mxu0 0
      %3388 = vmatmul.mubr.bf16.gmra.mxu0 %v1061
      %v3389 = vpop.f32.mrf.mxu0
      %v3390 = vadd.f32 0.0, %v3389
      %v3391 = vpop.f32.mrf.mxu0
      %v3392 = vadd.f32 0.0, %v3391
      %v3393 = vpop.f32.mrf.mxu0
      %v3394 = vadd.f32 0.0, %v3393
      %v3395 = vpop.f32.mrf.mxu0
      %v3396 = vadd.f32 0.0, %v3395
      %3397 = vmatprep.mubr.bf16.mxu0 0
      %3398 = vmatmul.mubr.bf16.gmra.mxu0 %v1064
      %v3399 = vpop.f32.mrf.mxu0
      %v3400 = vadd.f32 0.0, %v3399
      %v3401 = vpop.f32.mrf.mxu0
      %v3402 = vadd.f32 0.0, %v3401
      %v3403 = vpop.f32.mrf.mxu0
      %v3404 = vadd.f32 0.0, %v3403
      %v3405 = vpop.f32.mrf.mxu0
      %v3406 = vadd.f32 0.0, %v3405
      %3407 = vdwg.mxu0
      %v3408 = vmax.f32 %v3330, 0.0
      %v3409 = vmax.f32 %v3332, 0.0
      %v3410 = vmax.f32 %v3334, 0.0
      %v3411 = vmax.f32 %v3336, 0.0
      %v3412 = vmax.f32 %v3340, 0.0
      %v3413 = vmax.f32 %v3342, 0.0
      %v3414 = vmax.f32 %v3344, 0.0
      %v3415 = vmax.f32 %v3346, 0.0
      %v3416 = vmax.f32 %v3350, 0.0
      %v3417 = vmax.f32 %v3352, 0.0
      %v3418 = vmax.f32 %v3354, 0.0
      %v3419 = vmax.f32 %v3356, 0.0
      %v3420 = vmax.f32 %v3360, 0.0
      %v3421 = vmax.f32 %v3362, 0.0
      %v3422 = vmax.f32 %v3364, 0.0
      %v3423 = vmax.f32 %v3366, 0.0
      %v3424 = vmax.f32 %v3370, 0.0
      %v3425 = vmax.f32 %v3372, 0.0
      %v3426 = vmax.f32 %v3374, 0.0
      %v3427 = vmax.f32 %v3376, 0.0
      %v3428 = vmax.f32 %v3380, 0.0
      %v3429 = vmax.f32 %v3382, 0.0
      %v3430 = vmax.f32 %v3384, 0.0
      %v3431 = vmax.f32 %v3386, 0.0
      %v3432 = vmax.f32 %v3390, 0.0
      %v3433 = vmax.f32 %v3392, 0.0
      %v3434 = vmax.f32 %v3394, 0.0
      %v3435 = vmax.f32 %v3396, 0.0
      %v3436 = vmax.f32 %v3400, 0.0
      %v3437 = vmax.f32 %v3402, 0.0
      %v3438 = vmax.f32 %v3404, 0.0
      %v3439 = vmax.f32 %v3406, 0.0
      %v3440 = vpack.c.bf16 %v3410, %v3408
      %v3441 = vpack.c.bf16 %v3411, %v3409
      %v3442 = vpack.c.bf16 %v3414, %v3412
      %v3443 = vpack.c.bf16 %v3415, %v3413
      %v3444 = vpack.c.bf16 %v3418, %v3416
      %v3445 = vpack.c.bf16 %v3419, %v3417
      %v3446 = vpack.c.bf16 %v3422, %v3420
      %v3447 = vpack.c.bf16 %v3423, %v3421
      %v3448 = vpack.c.bf16 %v3426, %v3424
      %v3449 = vpack.c.bf16 %v3427, %v3425
      %v3450 = vpack.c.bf16 %v3430, %v3428
      %v3451 = vpack.c.bf16 %v3431, %v3429
      %v3452 = vpack.c.bf16 %v3434, %v3432
      %v3453 = vpack.c.bf16 %v3435, %v3433
      %v3454 = vpack.c.bf16 %v3438, %v3436
      %v3455 = vpack.c.bf16 %v3439, %v3437
      %v3456 = vld [vmem:[%s17] sm:$0xff]
      %v3457 = vld [vmem:[%s17 + $0x8] sm:$0xff]
      %v3458 = vld [vmem:[%s17 + $0x10] sm:$0xff]
      %v3459 = vld [vmem:[%s17 + $0x18] sm:$0xff]
      %v3460 = vld [vmem:[%s17 + $0x20] sm:$0xff]
      %v3461 = vld [vmem:[%s17 + $0x28] sm:$0xff]
      %v3462 = vld [vmem:[%s17 + $0x30] sm:$0xff]
      %v3463 = vld [vmem:[%s17 + $0x38] sm:$0xff]
      %v3464 = vld [vmem:[%s17 + $0x40] sm:$0xff]
      %v3465 = vld [vmem:[%s17 + $0x48] sm:$0xff]
      %v3466 = vld [vmem:[%s17 + $0x50] sm:$0xff]
      %v3467 = vld [vmem:[%s17 + $0x58] sm:$0xff]
      %v3468 = vld [vmem:[%s17 + $0x60] sm:$0xff]
      %v3469 = vld [vmem:[%s17 + $0x68] sm:$0xff]
      %v3470 = vld [vmem:[%s17 + $0x70] sm:$0xff]
      %v3471 = vld [vmem:[%s17 + $0x78] sm:$0xff]
      %v3472 = vld [vmem:[%s17 + $0x80] sm:$0xff]
      %v3473 = vld [vmem:[%s17 + $0x88] sm:$0xff]
      %v3474 = vld [vmem:[%s17 + $0x90] sm:$0xff]
      %v3475 = vld [vmem:[%s17 + $0x98] sm:$0xff]
      %v3476 = vld [vmem:[%s17 + $0xa0] sm:$0xff]
      %v3477 = vld [vmem:[%s17 + $0xa8] sm:$0xff]
      %v3478 = vld [vmem:[%s17 + $0xb0] sm:$0xff]
      %v3479 = vld [vmem:[%s17 + $0xb8] sm:$0xff]
      %v3480 = vld [vmem:[%s17 + $0xc0] sm:$0xff]
      %v3481 = vld [vmem:[%s17 + $0xc8] sm:$0xff]
      %v3482 = vld [vmem:[%s17 + $0xd0] sm:$0xff]
      %v3483 = vld [vmem:[%s17 + $0xd8] sm:$0xff]
      %v3484 = vld [vmem:[%s17 + $0xe0] sm:$0xff]
      %v3485 = vld [vmem:[%s17 + $0xe8] sm:$0xff]
      %v3486 = vld [vmem:[%s17 + $0xf0] sm:$0xff]
      %v3487 = vld [vmem:[%s17 + $0xf8] sm:$0xff]
      %v3488 = vld [vmem:[%s18] sm:$0x3]
      %v3490 = vlaneseq
      %v3491 = vshrl.u32 %v3490, 7
      %v3492 = vsub.s32 0, %v3491
      %v3493 = vrot.slane %v3488, %v3492
      %v3494 = vlaneseq
      %v3495 = vshrl.u32 %v3494, 7
      %v3496 = vsub.s32 1, %v3495
      %v3497 = vrot.slane %v3488, %v3496
      %v3532 = vunpack.c.l.b16 %v3456
      %v3533 = vunpack.c.h.b16 %v3456
      %v3534 = vunpack.c.l.b16 %v3457
      %v3535 = vunpack.c.h.b16 %v3457
      %v3536 = vunpack.c.l.b16 %v3458
      %v3537 = vunpack.c.h.b16 %v3458
      %v3538 = vunpack.c.l.b16 %v3459
      %v3539 = vunpack.c.h.b16 %v3459
      %v3540 = vunpack.c.l.b16 %v3460
      %v3541 = vunpack.c.h.b16 %v3460
      %v3542 = vunpack.c.l.b16 %v3461
      %v3543 = vunpack.c.h.b16 %v3461
      %v3544 = vunpack.c.l.b16 %v3462
      %v3545 = vunpack.c.h.b16 %v3462
      %v3546 = vunpack.c.l.b16 %v3463
      %v3547 = vunpack.c.h.b16 %v3463
      %v3548 = vunpack.c.l.b16 %v3464
      %v3549 = vunpack.c.h.b16 %v3464
      %v3550 = vunpack.c.l.b16 %v3465
      %v3551 = vunpack.c.h.b16 %v3465
      %v3552 = vunpack.c.l.b16 %v3466
      %v3553 = vunpack.c.h.b16 %v3466
      %v3554 = vunpack.c.l.b16 %v3467
      %v3555 = vunpack.c.h.b16 %v3467
      %v3556 = vunpack.c.l.b16 %v3468
      %v3557 = vunpack.c.h.b16 %v3468
      %v3558 = vunpack.c.l.b16 %v3469
      %v3559 = vunpack.c.h.b16 %v3469
      %v3560 = vunpack.c.l.b16 %v3470
      %v3561 = vunpack.c.h.b16 %v3470
      %v3562 = vunpack.c.l.b16 %v3471
      %v3563 = vunpack.c.h.b16 %v3471
      %v3564 = vunpack.c.l.b16 %v3472
      %v3565 = vunpack.c.h.b16 %v3472
      %v3566 = vunpack.c.l.b16 %v3473
      %v3567 = vunpack.c.h.b16 %v3473
      %v3568 = vunpack.c.l.b16 %v3474
      %v3569 = vunpack.c.h.b16 %v3474
      %v3570 = vunpack.c.l.b16 %v3475
      %v3571 = vunpack.c.h.b16 %v3475
      %v3572 = vunpack.c.l.b16 %v3476
      %v3573 = vunpack.c.h.b16 %v3476
      %v3574 = vunpack.c.l.b16 %v3477
      %v3575 = vunpack.c.h.b16 %v3477
      %v3576 = vunpack.c.l.b16 %v3478
      %v3577 = vunpack.c.h.b16 %v3478
      %v3578 = vunpack.c.l.b16 %v3479
      %v3579 = vunpack.c.h.b16 %v3479
      %v3580 = vunpack.c.l.b16 %v3480
      %v3581 = vunpack.c.h.b16 %v3480
      %v3582 = vunpack.c.l.b16 %v3481
      %v3583 = vunpack.c.h.b16 %v3481
      %v3584 = vunpack.c.l.b16 %v3482
      %v3585 = vunpack.c.h.b16 %v3482
      %v3586 = vunpack.c.l.b16 %v3483
      %v3587 = vunpack.c.h.b16 %v3483
      %v3588 = vunpack.c.l.b16 %v3484
      %v3589 = vunpack.c.h.b16 %v3484
      %v3590 = vunpack.c.l.b16 %v3485
      %v3591 = vunpack.c.h.b16 %v3485
      %v3592 = vunpack.c.l.b16 %v3486
      %v3593 = vunpack.c.h.b16 %v3486
      %v3594 = vunpack.c.l.b16 %v3487
      %v3595 = vunpack.c.h.b16 %v3487
      %v3596 = vpack.c.b16 %v3534, %v3532
      %v3597 = vpack.c.b16 %v3535, %v3533
      %v3598 = vpack.c.b16 %v3538, %v3536
      %v3599 = vpack.c.b16 %v3539, %v3537
      %v3600 = vpack.c.b16 %v3542, %v3540
      %v3601 = vpack.c.b16 %v3543, %v3541
      %v3602 = vpack.c.b16 %v3546, %v3544
      %v3603 = vpack.c.b16 %v3547, %v3545
      %v3604 = vpack.c.b16 %v3550, %v3548
      %v3605 = vpack.c.b16 %v3551, %v3549
      %v3606 = vpack.c.b16 %v3554, %v3552
      %v3607 = vpack.c.b16 %v3555, %v3553
      %v3608 = vpack.c.b16 %v3558, %v3556
      %v3609 = vpack.c.b16 %v3559, %v3557
      %v3610 = vpack.c.b16 %v3562, %v3560
      %v3611 = vpack.c.b16 %v3563, %v3561
      %v3612 = vpack.c.b16 %v3566, %v3564
      %v3613 = vpack.c.b16 %v3567, %v3565
      %v3614 = vpack.c.b16 %v3570, %v3568
      %v3615 = vpack.c.b16 %v3571, %v3569
      %v3616 = vpack.c.b16 %v3574, %v3572
      %v3617 = vpack.c.b16 %v3575, %v3573
      %v3618 = vpack.c.b16 %v3578, %v3576
      %v3619 = vpack.c.b16 %v3579, %v3577
      %v3620 = vpack.c.b16 %v3582, %v3580
      %v3621 = vpack.c.b16 %v3583, %v3581
      %v3622 = vpack.c.b16 %v3586, %v3584
      %v3623 = vpack.c.b16 %v3587, %v3585
      %v3624 = vpack.c.b16 %v3590, %v3588
      %v3625 = vpack.c.b16 %v3591, %v3589
      %v3626 = vpack.c.b16 %v3594, %v3592
      %v3627 = vpack.c.b16 %v3595, %v3593
      %3660 = vmatprep.subr.bf16.mxu0 %v3611
      %3661 = vmatpush1.bf16.msra.mxu0 %v3610
      %3662 = vmatprep.subr.bf16.mxu0 %v3609
      %3663 = vmatpush1.bf16.msra.mxu0 %v3608
      %3664 = vmatprep.subr.bf16.mxu0 %v3607
      %3665 = vmatpush1.bf16.msra.mxu0 %v3606
      %3666 = vmatprep.subr.bf16.mxu0 %v3605
      %3667 = vmatpush1.bf16.msra.mxu0 %v3604
      %3668 = vmatprep.subr.bf16.mxu0 %v3603
      %3669 = vmatpush1.bf16.msra.mxu0 %v3602
      %3670 = vmatprep.subr.bf16.mxu0 %v3601
      %3671 = vmatpush1.bf16.msra.mxu0 %v3600
      %3672 = vmatprep.subr.bf16.mxu0 %v3599
      %3673 = vmatpush1.bf16.msra.mxu0 %v3598
      %3674 = vmatprep.subr.bf16.mxu0 %v3597
      %3675 = vmatpush1.bf16.msra.mxu0 %v3596
      %3676 = vmatprep.subr.bf16.mxu0 %v3627
      %3677 = vmatpush2.bf16.msra.mxu0 %v3626
      %3678 = vmatprep.subr.bf16.mxu0 %v3625
      %3679 = vmatpush2.bf16.msra.mxu0 %v3624
      %3680 = vmatprep.subr.bf16.mxu0 %v3623
      %3681 = vmatpush2.bf16.msra.mxu0 %v3622
      %3682 = vmatprep.subr.bf16.mxu0 %v3621
      %3683 = vmatpush2.bf16.msra.mxu0 %v3620
      %3684 = vmatprep.subr.bf16.mxu0 %v3619
      %3685 = vmatpush2.bf16.msra.mxu0 %v3618
      %3686 = vmatprep.subr.bf16.mxu0 %v3617
      %3687 = vmatpush2.bf16.msra.mxu0 %v3616
      %3688 = vmatprep.subr.bf16.mxu0 %v3615
      %3689 = vmatpush2.bf16.msra.mxu0 %v3614
      %3690 = vmatprep.subr.bf16.mxu0 %v3613
      %3691 = vmatpush2.bf16.msra.mxu0 %v3612
      %3692 = vmatprep.mubr.bf16.mxu0 %v3441
      %3693 = vmatmul.mubr.bf16.gmra.mxu0 %v3440
      %v3694 = vpop.f32.mrf.mxu0
      %v3695 = vadd.f32 %v3493, %v3694
      %v3696 = vpop.f32.mrf.mxu0
      %v3697 = vadd.f32 %v3497, %v3696
      %v3698 = vpop.f32.mrf.mxu0
      %v3699 = vadd.f32 %v3493, %v3698
      %v3700 = vpop.f32.mrf.mxu0
      %v3701 = vadd.f32 %v3497, %v3700
      %3702 = vmatprep.mubr.bf16.mxu0 %v3443
      %3703 = vmatmul.mubr.bf16.gmra.mxu0 %v3442
      %v3704 = vpop.f32.mrf.mxu0
      %v3705 = vadd.f32 %v3493, %v3704
      %v3706 = vpop.f32.mrf.mxu0
      %v3707 = vadd.f32 %v3497, %v3706
      %v3708 = vpop.f32.mrf.mxu0
      %v3709 = vadd.f32 %v3493, %v3708
      %v3710 = vpop.f32.mrf.mxu0
      %v3711 = vadd.f32 %v3497, %v3710
      %3712 = vmatprep.mubr.bf16.mxu0 %v3445
      %3713 = vmatmul.mubr.bf16.gmra.mxu0 %v3444
      %v3714 = vpop.f32.mrf.mxu0
      %v3715 = vadd.f32 %v3493, %v3714
      %v3716 = vpop.f32.mrf.mxu0
      %v3717 = vadd.f32 %v3497, %v3716
      %v3718 = vpop.f32.mrf.mxu0
      %v3719 = vadd.f32 %v3493, %v3718
      %v3720 = vpop.f32.mrf.mxu0
      %v3721 = vadd.f32 %v3497, %v3720
      %3722 = vmatprep.mubr.bf16.mxu0 %v3447
      %3723 = vmatmul.mubr.bf16.gmra.mxu0 %v3446
      %v3724 = vpop.f32.mrf.mxu0
      %v3725 = vadd.f32 %v3493, %v3724
      %v3726 = vpop.f32.mrf.mxu0
      %v3727 = vadd.f32 %v3497, %v3726
      %v3728 = vpop.f32.mrf.mxu0
      %v3729 = vadd.f32 %v3493, %v3728
      %v3730 = vpop.f32.mrf.mxu0
      %v3731 = vadd.f32 %v3497, %v3730
      %3732 = vmatprep.mubr.bf16.mxu0 %v3449
      %3733 = vmatmul.mubr.bf16.gmra.mxu0 %v3448
      %v3734 = vpop.f32.mrf.mxu0
      %v3735 = vadd.f32 %v3493, %v3734
      %v3736 = vpop.f32.mrf.mxu0
      %v3737 = vadd.f32 %v3497, %v3736
      %v3738 = vpop.f32.mrf.mxu0
      %v3739 = vadd.f32 %v3493, %v3738
      %v3740 = vpop.f32.mrf.mxu0
      %v3741 = vadd.f32 %v3497, %v3740
      %3742 = vmatprep.mubr.bf16.mxu0 %v3451
      %3743 = vmatmul.mubr.bf16.gmra.mxu0 %v3450
      %v3744 = vpop.f32.mrf.mxu0
      %v3745 = vadd.f32 %v3493, %v3744
      %v3746 = vpop.f32.mrf.mxu0
      %v3747 = vadd.f32 %v3497, %v3746
      %v3748 = vpop.f32.mrf.mxu0
      %v3749 = vadd.f32 %v3493, %v3748
      %v3750 = vpop.f32.mrf.mxu0
      %v3751 = vadd.f32 %v3497, %v3750
      %3752 = vmatprep.mubr.bf16.mxu0 %v3453
      %3753 = vmatmul.mubr.bf16.gmra.mxu0 %v3452
      %v3754 = vpop.f32.mrf.mxu0
      %v3755 = vadd.f32 %v3493, %v3754
      %v3756 = vpop.f32.mrf.mxu0
      %v3757 = vadd.f32 %v3497, %v3756
      %v3758 = vpop.f32.mrf.mxu0
      %v3759 = vadd.f32 %v3493, %v3758
      %v3760 = vpop.f32.mrf.mxu0
      %v3761 = vadd.f32 %v3497, %v3760
      %3762 = vmatprep.mubr.bf16.mxu0 %v3455
      %3763 = vmatmul.mubr.bf16.gmra.mxu0 %v3454
      %v3764 = vpop.f32.mrf.mxu0
      %v3765 = vadd.f32 %v3493, %v3764
      %v3766 = vpop.f32.mrf.mxu0
      %v3767 = vadd.f32 %v3497, %v3766
      %v3768 = vpop.f32.mrf.mxu0
      %v3769 = vadd.f32 %v3493, %v3768
      %v3770 = vpop.f32.mrf.mxu0
      %v3771 = vadd.f32 %v3497, %v3770
      %3772 = vdwg.mxu0
      %v3773 = vpack.c.bf16 %v3699, %v3695
      %v3774 = vpack.c.bf16 %v3701, %v3697
      %v3775 = vpack.c.bf16 %v3709, %v3705
      %v3776 = vpack.c.bf16 %v3711, %v3707
      %v3777 = vpack.c.bf16 %v3719, %v3715
      %v3778 = vpack.c.bf16 %v3721, %v3717
      %v3779 = vpack.c.bf16 %v3729, %v3725
      %v3780 = vpack.c.bf16 %v3731, %v3727
      %v3781 = vpack.c.bf16 %v3739, %v3735
      %v3782 = vpack.c.bf16 %v3741, %v3737
      %v3783 = vpack.c.bf16 %v3749, %v3745
      %v3784 = vpack.c.bf16 %v3751, %v3747
      %v3785 = vpack.c.bf16 %v3759, %v3755
      %v3786 = vpack.c.bf16 %v3761, %v3757
      %v3787 = vpack.c.bf16 %v3769, %v3765
      %v3788 = vpack.c.bf16 %v3771, %v3767
      %3789 = vmatprep.subr.bf16.mxu0 %v3788
      %3790 = vmatpush1.bf16.msra.mxu0 %v3787
      %3791 = vmatprep.subr.bf16.mxu0 %v3786
      %3792 = vmatpush1.bf16.msra.mxu0 %v3785
      %3793 = vmatprep.subr.bf16.mxu0 %v3784
      %3794 = vmatpush1.bf16.msra.mxu0 %v3783
      %3795 = vmatprep.subr.bf16.mxu0 %v3782
      %3796 = vmatpush1.bf16.msra.mxu0 %v3781
      %3797 = vmatprep.subr.bf16.mxu0 %v3780
      %3798 = vmatpush1.bf16.msra.mxu0 %v3779
      %3799 = vmatprep.subr.bf16.mxu0 %v3778
      %3800 = vmatpush1.bf16.msra.mxu0 %v3777
      %3801 = vmatprep.subr.bf16.mxu0 %v3776
      %3802 = vmatpush1.bf16.msra.mxu0 %v3775
      %3803 = vmatprep.subr.bf16.mxu0 %v3774
      %3804 = vmatpush1.bf16.msra.mxu0 %v3773
      %3805 = vmatprep.subr.bf16.mxu0 0
      %3806 = vmatpush2.bf16.msra.mxu0 0
      %3807 = vmatprep.subr.bf16.mxu0 0
      %3808 = vmatpush2.bf16.msra.mxu0 0
      %3809 = vmatprep.subr.bf16.mxu0 0
      %3810 = vmatpush2.bf16.msra.mxu0 0
      %3811 = vmatprep.subr.bf16.mxu0 0
      %3812 = vmatpush2.bf16.msra.mxu0 0
      %3813 = vmatprep.subr.bf16.mxu0 0
      %3814 = vmatpush2.bf16.msra.mxu0 0
      %3815 = vmatprep.subr.bf16.mxu0 0
      %3816 = vmatpush2.bf16.msra.mxu0 0
      %3817 = vmatprep.subr.bf16.mxu0 0
      %3818 = vmatpush2.bf16.msra.mxu0 0
      %3819 = vmatprep.subr.bf16.mxu0 0
      %3820 = vmatpush2.bf16.msra.mxu0 0
      %3821 = vmatprep.mubr.bf16.mxu0 0
      %3822 = vmatmul.mubr.bf16.gmra.mxu0 %v924
      %v3823 = vpop.f32.mrf.mxu0
      %v3824 = vadd.f32 0.0, %v3823
      %v3825 = vpop.f32.mrf.mxu0
      %v3826 = vadd.f32 0.0, %v3825
      %v3827 = vpop.f32.mrf.mxu0
      %v3828 = vadd.f32 0.0, %v3827
      %v3829 = vpop.f32.mrf.mxu0
      %v3830 = vadd.f32 0.0, %v3829
      %3831 = vmatprep.mubr.bf16.mxu0 0
      %3832 = vmatmul.mubr.bf16.gmra.mxu0 %v925
      %v3833 = vpop.f32.mrf.mxu0
      %v3834 = vadd.f32 0.0, %v3833
      %v3835 = vpop.f32.mrf.mxu0
      %v3836 = vadd.f32 0.0, %v3835
      %v3837 = vpop.f32.mrf.mxu0
      %v3838 = vadd.f32 0.0, %v3837
      %v3839 = vpop.f32.mrf.mxu0
      %v3840 = vadd.f32 0.0, %v3839
      %3841 = vmatprep.mubr.bf16.mxu0 0
      %3842 = vmatmul.mubr.bf16.gmra.mxu0 %v926
      %v3843 = vpop.f32.mrf.mxu0
      %v3844 = vadd.f32 0.0, %v3843
      %v3845 = vpop.f32.mrf.mxu0
      %v3846 = vadd.f32 0.0, %v3845
      %v3847 = vpop.f32.mrf.mxu0
      %v3848 = vadd.f32 0.0, %v3847
      %v3849 = vpop.f32.mrf.mxu0
      %v3850 = vadd.f32 0.0, %v3849
      %3851 = vmatprep.mubr.bf16.mxu0 0
      %3852 = vmatmul.mubr.bf16.gmra.mxu0 %v927
      %v3853 = vpop.f32.mrf.mxu0
      %v3854 = vadd.f32 0.0, %v3853
      %v3855 = vpop.f32.mrf.mxu0
      %v3856 = vadd.f32 0.0, %v3855
      %v3857 = vpop.f32.mrf.mxu0
      %v3858 = vadd.f32 0.0, %v3857
      %v3859 = vpop.f32.mrf.mxu0
      %v3860 = vadd.f32 0.0, %v3859
      %3861 = vdwg.mxu0
      %v3862 = vpack.c.bf16 %v3828, %v3824
      %v3863 = vpack.c.bf16 %v3830, %v3826
      %v3864 = vpack.c.bf16 %v3838, %v3834
      %v3865 = vpack.c.bf16 %v3840, %v3836
      %v3866 = vpack.c.bf16 %v3848, %v3844
      %v3867 = vpack.c.bf16 %v3850, %v3846
      %v3868 = vpack.c.bf16 %v3858, %v3854
      %v3869 = vpack.c.bf16 %v3860, %v3856
      %3870 = vmatprep.subr.bf16.mxu0 0
      %3871 = vmatpush1.bf16.msra.mxu0 0
      %3872 = vmatprep.subr.bf16.mxu0 0
      %3873 = vmatpush1.bf16.msra.mxu0 0
      %3874 = vmatprep.subr.bf16.mxu0 0
      %3875 = vmatpush1.bf16.msra.mxu0 0
      %3876 = vmatprep.subr.bf16.mxu0 0
      %3877 = vmatpush1.bf16.msra.mxu0 0
      %3878 = vmatprep.subr.bf16.mxu0 %v3869
      %3879 = vmatpush1.bf16.msra.mxu0 %v3868
      %3880 = vmatprep.subr.bf16.mxu0 %v3867
      %3881 = vmatpush1.bf16.msra.mxu0 %v3866
      %3882 = vmatprep.subr.bf16.mxu0 %v3865
      %3883 = vmatpush1.bf16.msra.mxu0 %v3864
      %3884 = vmatprep.subr.bf16.mxu0 %v3863
      %3885 = vmatpush1.bf16.msra.mxu0 %v3862
      %3886 = vmatprep.subr.bf16.mxu0 0
      %3887 = vmatpush2.bf16.msra.mxu0 0
      %3888 = vmatprep.subr.bf16.mxu0 0
      %3889 = vmatpush2.bf16.msra.mxu0 0
      %3890 = vmatprep.subr.bf16.mxu0 0
      %3891 = vmatpush2.bf16.msra.mxu0 0
      %3892 = vmatprep.subr.bf16.mxu0 0
      %3893 = vmatpush2.bf16.msra.mxu0 0
      %3894 = vmatprep.subr.bf16.mxu0 0
      %3895 = vmatpush2.bf16.msra.mxu0 0
      %3896 = vmatprep.subr.bf16.mxu0 0
      %3897 = vmatpush2.bf16.msra.mxu0 0
      %3898 = vmatprep.subr.bf16.mxu0 0
      %3899 = vmatpush2.bf16.msra.mxu0 0
      %3900 = vmatprep.subr.bf16.mxu0 0
      %3901 = vmatpush2.bf16.msra.mxu0 0
      %3902 = vmatprep.mubr.bf16.mxu0 0
      %3903 = vmatmul.mubr.bf16.gmra.mxu0 %v1043
      %v3904 = vpop.f32.mrf.mxu0
      %v3905 = vadd.f32 0.0, %v3904
      %v3906 = vpop.f32.mrf.mxu0
      %v3907 = vadd.f32 0.0, %v3906
      %v3908 = vpop.f32.mrf.mxu0
      %v3909 = vadd.f32 0.0, %v3908
      %v3910 = vpop.f32.mrf.mxu0
      %v3911 = vadd.f32 0.0, %v3910
      %3912 = vmatprep.mubr.bf16.mxu0 0
      %3913 = vmatmul.mubr.bf16.gmra.mxu0 %v1046
      %v3914 = vpop.f32.mrf.mxu0
      %v3915 = vadd.f32 0.0, %v3914
      %v3916 = vpop.f32.mrf.mxu0
      %v3917 = vadd.f32 0.0, %v3916
      %v3918 = vpop.f32.mrf.mxu0
      %v3919 = vadd.f32 0.0, %v3918
      %v3920 = vpop.f32.mrf.mxu0
      %v3921 = vadd.f32 0.0, %v3920
      %3922 = vmatprep.mubr.bf16.mxu0 0
      %3923 = vmatmul.mubr.bf16.gmra.mxu0 %v1049
      %v3924 = vpop.f32.mrf.mxu0
      %v3925 = vadd.f32 0.0, %v3924
      %v3926 = vpop.f32.mrf.mxu0
      %v3927 = vadd.f32 0.0, %v3926
      %v3928 = vpop.f32.mrf.mxu0
      %v3929 = vadd.f32 0.0, %v3928
      %v3930 = vpop.f32.mrf.mxu0
      %v3931 = vadd.f32 0.0, %v3930
      %3932 = vmatprep.mubr.bf16.mxu0 0
      %3933 = vmatmul.mubr.bf16.gmra.mxu0 %v1052
      %v3934 = vpop.f32.mrf.mxu0
      %v3935 = vadd.f32 0.0, %v3934
      %v3936 = vpop.f32.mrf.mxu0
      %v3937 = vadd.f32 0.0, %v3936
      %v3938 = vpop.f32.mrf.mxu0
      %v3939 = vadd.f32 0.0, %v3938
      %v3940 = vpop.f32.mrf.mxu0
      %v3941 = vadd.f32 0.0, %v3940
      %3942 = vmatprep.mubr.bf16.mxu0 0
      %3943 = vmatmul.mubr.bf16.gmra.mxu0 %v1055
      %v3944 = vpop.f32.mrf.mxu0
      %v3945 = vadd.f32 0.0, %v3944
      %v3946 = vpop.f32.mrf.mxu0
      %v3947 = vadd.f32 0.0, %v3946
      %v3948 = vpop.f32.mrf.mxu0
      %v3949 = vadd.f32 0.0, %v3948
      %v3950 = vpop.f32.mrf.mxu0
      %v3951 = vadd.f32 0.0, %v3950
      %3952 = vmatprep.mubr.bf16.mxu0 0
      %3953 = vmatmul.mubr.bf16.gmra.mxu0 %v1058
      %v3954 = vpop.f32.mrf.mxu0
      %v3955 = vadd.f32 0.0, %v3954
      %v3956 = vpop.f32.mrf.mxu0
      %v3957 = vadd.f32 0.0, %v3956
      %v3958 = vpop.f32.mrf.mxu0
      %v3959 = vadd.f32 0.0, %v3958
      %v3960 = vpop.f32.mrf.mxu0
      %v3961 = vadd.f32 0.0, %v3960
      %3962 = vmatprep.mubr.bf16.mxu0 0
      %3963 = vmatmul.mubr.bf16.gmra.mxu0 %v1061
      %v3964 = vpop.f32.mrf.mxu0
      %v3965 = vadd.f32 0.0, %v3964
      %v3966 = vpop.f32.mrf.mxu0
      %v3967 = vadd.f32 0.0, %v3966
      %v3968 = vpop.f32.mrf.mxu0
      %v3969 = vadd.f32 0.0, %v3968
      %v3970 = vpop.f32.mrf.mxu0
      %v3971 = vadd.f32 0.0, %v3970
      %3972 = vmatprep.mubr.bf16.mxu0 0
      %3973 = vmatmul.mubr.bf16.gmra.mxu0 %v1064
      %v3974 = vpop.f32.mrf.mxu0
      %v3975 = vadd.f32 0.0, %v3974
      %v3976 = vpop.f32.mrf.mxu0
      %v3977 = vadd.f32 0.0, %v3976
      %v3978 = vpop.f32.mrf.mxu0
      %v3979 = vadd.f32 0.0, %v3978
      %v3980 = vpop.f32.mrf.mxu0
      %v3981 = vadd.f32 0.0, %v3980
      %3982 = vdwg.mxu0
      %3983 = vst [vmem:[%s642] sm:$0xff] %v2702
      %3984 = vst [vmem:[%s642 + $0x8] sm:$0xff] %v3905
      %3985 = vst [vmem:[%s642 + $0x10] sm:$0xff] %v3907
      %3986 = vst [vmem:[%s642 + $0x18] sm:$0xff] %v2899
      %3987 = vst [vmem:[%s642 + $0x20] sm:$0xff] %v2703
      %3988 = vst [vmem:[%s642 + $0x28] sm:$0xff] %v3909
      %3989 = vst [vmem:[%s642 + $0x30] sm:$0xff] %v3911
      %3990 = vst [vmem:[%s642 + $0x38] sm:$0xff] %v2904
      %3991 = vst [vmem:[%s642 + $0x40] sm:$0xff] %v2704
      %3992 = vst [vmem:[%s642 + $0x48] sm:$0xff] %v3915
      %3993 = vst [vmem:[%s642 + $0x50] sm:$0xff] %v3917
      %3994 = vst [vmem:[%s642 + $0x58] sm:$0xff] %v2909
      %3995 = vst [vmem:[%s642 + $0x60] sm:$0xff] %v2705
      %3996 = vst [vmem:[%s642 + $0x68] sm:$0xff] %v3919
      %3997 = vst [vmem:[%s642 + $0x70] sm:$0xff] %v3921
      %3998 = vst [vmem:[%s642 + $0x78] sm:$0xff] %v2914
      %3999 = vst [vmem:[%s642 + $0x80] sm:$0xff] %v2706
      %4000 = vst [vmem:[%s642 + $0x88] sm:$0xff] %v3925
      %4001 = vst [vmem:[%s642 + $0x90] sm:$0xff] %v3927
      %4002 = vst [vmem:[%s642 + $0x98] sm:$0xff] %v2919
      %4003 = vst [vmem:[%s642 + $0xa0] sm:$0xff] %v2707
      %4004 = vst [vmem:[%s642 + $0xa8] sm:$0xff] %v3929
      %4005 = vst [vmem:[%s642 + $0xb0] sm:$0xff] %v3931
      %4006 = vst [vmem:[%s642 + $0xb8] sm:$0xff] %v2924
      %4007 = vst [vmem:[%s642 + $0xc0] sm:$0xff] %v2708
      %4008 = vst [vmem:[%s642 + $0xc8] sm:$0xff] %v3935
      %4009 = vst [vmem:[%s642 + $0xd0] sm:$0xff] %v3937
      %4010 = vst [vmem:[%s642 + $0xd8] sm:$0xff] %v2929
      %4011 = vst [vmem:[%s642 + $0xe0] sm:$0xff] %v2709
      %4012 = vst [vmem:[%s642 + $0xe8] sm:$0xff] %v3939
      %4013 = vst [vmem:[%s642 + $0xf0] sm:$0xff] %v3941
      %4014 = vst [vmem:[%s642 + $0xf8] sm:$0xff] %v2934
      %4015 = vst [vmem:[%s642 + $0x100] sm:$0xff] %v2710
      %4016 = vst [vmem:[%s642 + $0x108] sm:$0xff] %v3945
      %4017 = vst [vmem:[%s642 + $0x110] sm:$0xff] %v3947
      %4018 = vst [vmem:[%s642 + $0x118] sm:$0xff] %v2939
      %4019 = vst [vmem:[%s642 + $0x120] sm:$0xff] %v2711
      %4020 = vst [vmem:[%s642 + $0x128] sm:$0xff] %v3949
      %4021 = vst [vmem:[%s642 + $0x130] sm:$0xff] %v3951
      %4022 = vst [vmem:[%s642 + $0x138] sm:$0xff] %v2944
      %4023 = vst [vmem:[%s642 + $0x140] sm:$0xff] %v2712
      %4024 = vst [vmem:[%s642 + $0x148] sm:$0xff] %v3955
      %4025 = vst [vmem:[%s642 + $0x150] sm:$0xff] %v3957
      %4026 = vst [vmem:[%s642 + $0x158] sm:$0xff] %v2949
      %4027 = vst [vmem:[%s642 + $0x160] sm:$0xff] %v2713
      %4028 = vst [vmem:[%s642 + $0x168] sm:$0xff] %v3959
      %4029 = vst [vmem:[%s642 + $0x170] sm:$0xff] %v3961
      %4030 = vst [vmem:[%s642 + $0x178] sm:$0xff] %v2954
      %4031 = vst [vmem:[%s642 + $0x180] sm:$0xff] %v2714
      %4032 = vst [vmem:[%s642 + $0x188] sm:$0xff] %v3965
      %4033 = vst [vmem:[%s642 + $0x190] sm:$0xff] %v3967
      %4034 = vst [vmem:[%s642 + $0x198] sm:$0xff] %v2959
      %4035 = vst [vmem:[%s642 + $0x1a0] sm:$0xff] %v2715
      %4036 = vst [vmem:[%s642 + $0x1a8] sm:$0xff] %v3969
      %4037 = vst [vmem:[%s642 + $0x1b0] sm:$0xff] %v3971
      %4038 = vst [vmem:[%s642 + $0x1b8] sm:$0xff] %v2964
      %4039 = vst [vmem:[%s642 + $0x1c0] sm:$0xff] %v2716
      %4040 = vst [vmem:[%s642 + $0x1c8] sm:$0xff] %v3975
      %4041 = vst [vmem:[%s642 + $0x1d0] sm:$0xff] %v3977
      %4042 = vst [vmem:[%s642 + $0x1d8] sm:$0xff] %v2969
      %4043 = vst [vmem:[%s642 + $0x1e0] sm:$0xff] %v2717
      %4044 = vst [vmem:[%s642 + $0x1e8] sm:$0xff] %v3979
      %4045 = vst [vmem:[%s642 + $0x1f0] sm:$0xff] %v3981
      %4046 = vst [vmem:[%s642 + $0x1f8] sm:$0xff] %v2974
      %p4047 = scmp.lt.s32.totalorder %s30, 1
      %s4048 = scalar_select %p4047, %s30, 1
      %s4049 = smul.addr %s4048, 64
      %s4050 = smul.addr %s4049, 8
      %s4051 = scalar_lea.vmem %s19, %s4050
      // Predicated region
      $region97: #{modelp_forward_fused.1} parent=95 // pred_check
        %p4052 = pneg %p462
      $region98: #{modelp_forward_fused.1} parent=95 // pred_check_branch
        %4054 = sbr.rel (%p4052) target = $region100
      $region99: #{modelp_forward_fused.1} parent=95 // pred_region
        _
      $region100: #{modelp_forward_fused.1} parent=95 // pred_fallthru
        _
    $region96: #{modelp_forward_fused.1} parent=5 // pred_fallthru
      _
    %p4055 = scmp.le.s32.totalorder 2, %s25
    // Predicated region
    $region101: #{modelp_forward_fused.1} parent=5 // pred_check
      %p4056 = pneg %p4055
    $region102: #{modelp_forward_fused.1} parent=5 // pred_check_branch
      %4058 = sbr.rel (%p4056) target = $region104
    $region103: #{modelp_forward_fused.1} parent=5 // pred_region
      %s4059 = ssub.s32 %s25, 2
      // Predicated region
      $region105: #{modelp_forward_fused.1} parent=103 // pred_check
        %p4060 = pneg %p468
      $region106: #{modelp_forward_fused.1} parent=103 // pred_check_branch
        %4062 = sbr.rel (%p4060) target = $region108
      $region107: #{modelp_forward_fused.1} parent=103 // pred_region
        %p4063 = scmp.lt.s32.totalorder %s31, 1
        %s4064 = scalar_select %p4063, %s31, 1
        %s4065 = smul.addr %s4064, 64
        %s4066 = smul.addr %s4065, 8
        %s4067 = scalar_lea.vmem %s19, %s4066
      $region108: #{modelp_forward_fused.1} parent=103 // pred_fallthru
        _
    $region104: #{modelp_forward_fused.1} parent=5 // pred_fallthru
      _
  $region6: #{modelp_forward_fused.1} parent=0 // loop_footer
    %s29 = sadd.s32 1, %s25
  $region7: #{modelp_forward_fused.1} parent=0 // loop_footer_branch
    %24 = sbr.rel target = $region3
  $region8: #{modelp_forward_fused.1} parent=0 // loop_exit
    _

</llo_original>
